<compile_context>
chip_gen: v7x
topology: tpu7x:2x2x1
jax: 0.10.0
libtpu: 0.0.40
codegen_flags: <defaults>
</compile_context>

<pallas_src>
import functools

import jax
import jax.numpy as jnp
from jax.experimental import pallas as pl
from jax.experimental.pallas import tpu as pltpu

# ---- module hyper-parameters (deterministic, synthetic) -------------------------
DOMINANT_CLASSES_FOR_DOWNSAMPLING = (0, 1)
INTENTION_DOWNSAMPLE_RATIO = 0.5

IOU_THRESHOLD = 0.6
NEG_IOU_THRESHOLD = 0.45
BOX_WEIGHT = 1.0
CLS_WEIGHT = 1.0
INTENT_WEIGHT = 0.5
FOCAL_ALPHA = 0.25
FOCAL_GAMMA = 2.0
SMOOTH_L1_BETA = 1.0 / 9.0
EPS = 1e-6


# ---------------------------------------------------------------------------------
# Pallas kernel: one (anchor-tile, batch-tile) cell per grid step.
# ---------------------------------------------------------------------------------
def _loss_kernel(anchors_ref, gt_iou_ref, gt_attr_ref, cls_ref, box_ref, intent_ref,
                 aux_ref, out_ref,
                 *, iou_th, neg_th, alpha, gamma, beta, keep_prob, dominant):
    f32 = jnp.float32

    A = anchors_ref[...]              # (11, Nt)  channel-major anchors (precomputed)
    gtb = gt_iou_ref[...]             # (TB, G, 6)  [x1, x2, y1, y2, area, valid]
    gta = gt_attr_ref[...]            # (TB, 8, G)  [x, y, w, h, sin, cos, intent, 0]
    cls_logits = cls_ref[...]         # (TB, 1, Nt)
    box_preds = box_ref[...]          # (TB, 6, Nt)
    intent_logits = intent_ref[...]   # (TB, K, Nt)
    aux = aux_ref[...]                # (TB, 2, Nt)  row 0: rand uniform, row 1: forced

    TB, Gmax, _ = gtb.shape
    Nt = A.shape[1]

    # anchor rows: 0 x, 1 y, 2 x1, 3 x2, 4 y1, 5 y2, 6 area, 7 1/(w+eps), 8 1/(h+eps),
    #              9 sin(a), 10 cos(a)        -- each (1, Nt), lane-dense.
    ax1, ax2 = A[2:3, :], A[3:4, :]
    ay1, ay2 = A[4:5, :], A[5:6, :]
    a_area = A[6:7, :]
    asin, acos = A[9:10, :], A[10:11, :]

    # GT columns (sublane-major): (TB, G, 1)
    gx1, gx2 = gtb[:, :, 0:1], gtb[:, :, 1:2]
    gy1, gy2 = gtb[:, :, 2:3], gtb[:, :, 3:4]
    g_area = gtb[:, :, 4:5]
    valid_g = gtb[:, :, 5:6] > 0.5

    # ---- axis-aligned IoU slab (TB, G, Nt): GTs on sublanes, anchors on lanes ------
    iw = jnp.maximum(jnp.minimum(ax2, gx2) - jnp.maximum(ax1, gx1), 0.0)
    ih = jnp.maximum(jnp.minimum(ay2, gy2) - jnp.maximum(ay1, gy1), 0.0)
    inter = iw * ih
    union_e = a_area + g_area - inter + EPS

    # IoU only feeds the per-anchor argmax: approx reciprocal goes to the EUP slot.
    iou = inter * pl.reciprocal(union_e, approx=True)
    iou = jnp.where(valid_g, iou, -1.0)                       # mask padded GTs

    # ---- per-anchor best GT (first-index argmax): sublane reduce -------------------
    row_max = jnp.max(iou, axis=1, keepdims=True)                       # (TB, 1, Nt)
    gt_ids = jax.lax.broadcasted_iota(jnp.int32, (TB, Gmax, Nt), 1)
    gt_best = jnp.min(jnp.where(iou == row_max, gt_ids, Gmax),
                      axis=1, keepdims=True)                            # (TB, 1, Nt)
    onehot = (gt_ids == gt_best).astype(f32)                            # (TB, G, Nt)

    # ---- assigned-GT attributes immediately (shortest onehot live range):
    #      one MXU matmul (8,G) x (G,Nt) per batch element ---------------------------
    assigned = jnp.einsum('bcg,bgn->bcn', gta, onehot,
                          preferred_element_type=jnp.float32)           # (TB, 8, Nt)

    # ---- pos / neg masks via division-free multiply-compares -----------------------
    pos_hit = ((inter >= iou_th * union_e) & valid_g).astype(f32)
    nn_hit = ((inter >= neg_th * union_e) & valid_g).astype(f32)
    pos_row = jnp.max(pos_hit, axis=1, keepdims=True) > 0.5             # (TB, 1, Nt)
    nonneg_row = jnp.max(nn_hit, axis=1, keepdims=True) > 0.5

    rand = aux[:, 0:1, :]
    forced = aux[:, 1:2, :] > 0.5                                       # pre-pass flag
    pos = pos_row | forced
    neg = jnp.logical_not(nonneg_row)
    pos_f = pos.astype(f32)
    valid_f = (pos | neg).astype(f32)

    # ---- box regression targets + smooth L1 (dense 2-row slabs) --------------------
    a_xy = A[0:2, :]                                                    # (2, Nt)
    inv_wh = A[7:9, :]                                                  # (2, Nt)
    t_xy = (assigned[:, 0:2, :] - a_xy) * inv_wh                        # dx, dy
    t_wl = jnp.log(assigned[:, 2:4, :] * inv_wh + EPS)                  # dw, dl
    agsin, agcos = assigned[:, 4:5, :], assigned[:, 5:6, :]
    t_sin = agsin * acos - agcos * asin                                 # sin(gt - anchor)
    t_cos = agcos * acos + agsin * asin                                 # cos(gt - anchor)

    def sl1(pred, tgt):
        d = jnp.abs(pred - tgt)
        return jnp.where(d < beta, (0.5 / beta) * d * d, d - 0.5 * beta)

    box_l = (jnp.sum(sl1(box_preds[:, 0:2, :], t_xy), axis=1, keepdims=True)
             + jnp.sum(sl1(box_preds[:, 2:4, :], t_wl), axis=1, keepdims=True)
             + sl1(box_preds[:, 4:5, :], t_sin)
             + sl1(box_preds[:, 5:6, :], t_cos))                        # (TB, 1, Nt)

    # ---- sigmoid focal loss: single EUP exp, approx reciprocal, log1p-stable CE ----
    x = cls_logits
    t = pos_f
    e = jnp.exp(-jnp.abs(x))
    r = pl.reciprocal(1.0 + e, approx=True)
    p = jnp.where(x >= 0.0, r, e * r)                                   # sigmoid(x)
    ce = jnp.maximum(x, 0.0) - x * t + jnp.log1p(e)
    p_t = p * t + (1.0 - p) * (1.0 - t)
    one_minus_pt = 1.0 - p_t
    if float(gamma).is_integer():
        mod = jnp.ones_like(one_minus_pt)
        for _ in range(int(gamma)):
            mod = mod * one_minus_pt
    else:
        mod = jnp.exp(gamma * jnp.log(jnp.maximum(one_minus_pt, 1e-30)))
    alpha_t = alpha * t + (1.0 - alpha) * (1.0 - t)
    focal_row = valid_f * alpha_t * ce * mod                            # (TB, 1, Nt)

    # ---- intention cross-entropy + downsampling -------------------------------------
    agint = assigned[:, 6:7, :]                                         # (TB, 1, Nt)
    m = jnp.max(intent_logits, axis=1, keepdims=True)                   # (TB, 1, Nt)
    lse = m + jnp.log(jnp.sum(jnp.exp(intent_logits - m), axis=1, keepdims=True))
    cls_iota = jax.lax.broadcasted_iota(jnp.int32, intent_logits.shape, 1).astype(f32)
    tgt_onehot = (jnp.abs(cls_iota - agint) < 0.5).astype(f32)          # robust to rounding
    logit_t = jnp.sum(intent_logits * tgt_onehot, axis=1, keepdims=True)
    ce_int = lse - logit_t                                              # (TB, 1, Nt)

    doms = list(dominant)
    if doms:
        is_dom = jnp.abs(agint - float(doms[0])) < 0.5
        for d in doms[1:]:
            is_dom = is_dom | (jnp.abs(agint - float(d)) < 0.5)
        keep = (rand < keep_prob).astype(f32)
        ds = jnp.where(is_dom, keep, 1.0)
    else:
        ds = jnp.ones_like(ce_int)

    # ---- fused partial reductions -> one lane-dense (8, 128) output tile -----------
    slab = jnp.concatenate([focal_row,
                            pos_f * box_l,
                            pos_f * ce_int * ds,
                            pos_f,
                            pos_f * ds], axis=1)                        # (TB, 5, Nt)
    red = jnp.sum(slab, axis=2, keepdims=True)                          # (TB, 5, 1)
    red = jnp.sum(red, axis=0)                                          # (5, 1)
    red = jnp.concatenate([red, jnp.zeros((3, 1), f32)], axis=0)        # (8, 1)
    out_ref[0, 0] = jnp.broadcast_to(red, (8, 128))


# ---------------------------------------------------------------------------------
# Tiling / budget heuristics
# ---------------------------------------------------------------------------------
def _pick_batch_tile(B):
    # Small TB keeps the number of simultaneously-live (TB, G, N_tile) slabs low
    # (no vreg spills); extra grid steps are cheap and feed the v7x megacore.
    for tb in (2, 4):
        if B % tb == 0:
            return tb
    return 1


def _vmem_capacity_bytes():
    try:
        return int(pltpu.get_tpu_info().vmem_capacity_bytes)
    except Exception:
        return 64 << 20  # conservative default (v7x per-TC VMEM)


def _pick_n_tile(N, TB, K, G, budget_bytes):
    if N % 128 != 0:
        return N  # cannot lane-tile cleanly; single full-width tile
    # rough bytes/lane: double-buffered input tiles + live (TB,G,.) matching slabs
    per_lane = 4 * (2 * (11 + TB * (10 + K)) + 8 * TB * G + TB * (16 + K))
    cap = max(128, (budget_bytes // max(per_lane, 1)) // 128 * 128)
    best, nt = 128, 128
    while nt <= min(N, cap):
        if N % nt == 0:
            best = nt
        nt += 128
    return best


# ---------------------------------------------------------------------------------
# Force-match pre-pass (reference semantics, incl. first-index argmax tie-break).
# This is the only quantity coupling anchor tiles; isolating it keeps the kernel's
# anchor axis fully parallel.
# ---------------------------------------------------------------------------------
def _force_match(anchors, gt_boxes, gt_valid):
    ax, ay, aw, ah = anchors[:, 0], anchors[:, 1], anchors[:, 2], anchors[:, 3]
    ax1, ax2 = ax - 0.5 * aw, ax + 0.5 * aw
    ay1, ay2 = ay - 0.5 * ah, ay + 0.5 * ah
    a_area = aw * ah
    gx, gy = gt_boxes[..., 0], gt_boxes[..., 1]
    gw, gh = gt_boxes[..., 2], gt_boxes[..., 3]
    gx1, gx2 = gx - 0.5 * gw, gx + 0.5 * gw
    gy1, gy2 = gy - 0.5 * gh, gy + 0.5 * gh
    g_area = gw * gh
    iw = jnp.maximum(jnp.minimum(ax2[None, None, :], gx2[..., None])
                     - jnp.maximum(ax1[None, None, :], gx1[..., None]), 0.0)
    ih = jnp.maximum(jnp.minimum(ay2[None, None, :], gy2[..., None])
                     - jnp.maximum(ay1[None, None, :], gy1[..., None]), 0.0)
    inter = iw * ih
    union = a_area[None, None, :] + g_area[..., None] - inter
    iou = inter / (union + EPS)                                         # (B, G, N)
    iou = jnp.where(gt_valid[..., None] > 0.5, iou, -1.0)
    best_anchor = jnp.argmax(iou, axis=2)                               # (B, G)
    best_iou = jnp.max(iou, axis=2)
    do_force = (best_iou >= NEG_IOU_THRESHOLD) & (gt_valid > 0.5)
    B, N = iou.shape[0], iou.shape[2]
    forced = jnp.zeros((B, N), jnp.float32)
    forced = forced.at[jnp.arange(B)[:, None], best_anchor].max(do_force.astype(jnp.float32))
    return forced


# ---------------------------------------------------------------------------------
# Wrapper (layout plumbing + tiny final combines in plain JAX)
# ---------------------------------------------------------------------------------
def detection_intention_loss(cls_logits, box_preds, intention_logits, anchors,
                             gt_boxes, gt_intentions, gt_valid, rand_uniform,
                             n_tile=None):
    f32 = jnp.float32
    B, N, _ = cls_logits.shape
    K = intention_logits.shape[-1]
    Gmax = gt_boxes.shape[1]

    TB = _pick_batch_tile(B)
    n_b = B // TB

    vmem_cap = _vmem_capacity_bytes()
    vmem_limit = max(32 << 20, min(int(0.75 * vmem_cap), 100 << 20))
    if n_tile is None:
        n_tile = _pick_n_tile(N, TB, K, Gmax, budget_bytes=vmem_limit // 2)
    assert N % n_tile == 0, "anchor count must be a multiple of the anchor tile"
    n_tiles = N // n_tile

    # ---- channel-major anchors with precomputed invariants: (11, N) ---------------
    anchors = anchors.astype(f32)
    ax, ay = anchors[:, 0], anchors[:, 1]
    aw, ah = anchors[:, 2], anchors[:, 3]
    aang = anchors[:, 4]
    anchors_aug = jnp.stack([
        ax, ay,
        ax - 0.5 * aw, ax + 0.5 * aw,
        ay - 0.5 * ah, ay + 0.5 * ah,
        aw * ah,
        1.0 / (aw + EPS), 1.0 / (ah + EPS),
        jnp.sin(aang), jnp.cos(aang)], axis=0)                           # (11, N)

    # ---- GT in two tiny complementary layouts --------------------------------------
    gt_boxes = gt_boxes.astype(f32)
    gx, gy = gt_boxes[..., 0], gt_boxes[..., 1]
    gw, gh = gt_boxes[..., 2], gt_boxes[..., 3]
    gang = gt_boxes[..., 4]
    gvalid_f = gt_valid.astype(f32)
    gt_iou = jnp.stack([gx - 0.5 * gw, gx + 0.5 * gw,
                        gy - 0.5 * gh, gy + 0.5 * gh,
                        gw * gh, gvalid_f], axis=-1)                     # (B, G, 6)
    gt_attr = jnp.stack([gx, gy, gw, gh, jnp.sin(gang), jnp.cos(gang),
                         gt_intentions.astype(f32), jnp.zeros_like(gx)], axis=1)  # (B,8,G)

    # ---- force-match pre-pass (only cross-tile coupling) -> per-anchor flag --------
    forced = _force_match(anchors, gt_boxes, gvalid_f)                   # (B, N)

    # ---- channel-major per-anchor tensors (N on lanes) -----------------------------
    cls_t = jnp.swapaxes(cls_logits.astype(f32), 1, 2)                   # (B, 1, N)
    box_t = jnp.swapaxes(box_preds.astype(f32), 1, 2)                    # (B, 6, N)
    intent_t = jnp.swapaxes(intention_logits.astype(f32), 1, 2)          # (B, K, N)
    aux_t = jnp.concatenate([jnp.swapaxes(rand_uniform.astype(f32), 1, 2),
                             forced[:, None, :]], axis=1)                # (B, 2, N)

    kernel = functools.partial(
        _loss_kernel,
        iou_th=IOU_THRESHOLD, neg_th=NEG_IOU_THRESHOLD,
        alpha=FOCAL_ALPHA, gamma=FOCAL_GAMMA, beta=SMOOTH_L1_BETA,
        keep_prob=1.0 - INTENTION_DOWNSAMPLE_RATIO,
        dominant=tuple(DOMINANT_CLASSES_FOR_DOWNSAMPLING))

    out = pl.pallas_call(
        kernel,
        out_shape=jax.ShapeDtypeStruct((n_tiles, n_b, 8, 128), jnp.float32),
        grid_spec=pltpu.PrefetchScalarGridSpec(
            num_scalar_prefetch=0,
            grid=(n_tiles, n_b),          # anchor tiles outer: anchor block DMA'd once per tile
            in_specs=[
                pl.BlockSpec((11, n_tile), lambda t, b: (0, t)),          # anchors
                pl.BlockSpec((TB, Gmax, 6), lambda t, b: (b, 0, 0)),      # gt_iou
                pl.BlockSpec((TB, 8, Gmax), lambda t, b: (b, 0, 0)),      # gt_attr
                pl.BlockSpec((TB, 1, n_tile), lambda t, b: (b, 0, t)),    # cls
                pl.BlockSpec((TB, 6, n_tile), lambda t, b: (b, 0, t)),    # box
                pl.BlockSpec((TB, K, n_tile), lambda t, b: (b, 0, t)),    # intention
                pl.BlockSpec((TB, 2, n_tile), lambda t, b: (b, 0, t)),    # [rand, forced]
            ],
            out_specs=pl.BlockSpec((1, 1, 8, 128), lambda t, b: (t, b, 0, 0)),
        ),
        compiler_params=pltpu.CompilerParams(
            dimension_semantics=("parallel", "parallel"),
            vmem_limit_bytes=vmem_limit),
    )(anchors_aug, gt_iou, gt_attr, cls_t, box_t, intent_t, aux_t)

    sums = jnp.sum(out[:, :, :5, 0], axis=(0, 1))                        # (5,)
    cls_sum, box_sum, intent_sum, num_pos, eff = (sums[i] for i in range(5))

    cls_loss = cls_sum / jnp.maximum(1.0, num_pos)
    box_loss = box_sum / jnp.maximum(1.0, num_pos)
    intent_loss = intent_sum / jnp.maximum(1.0, eff)
    total = CLS_WEIGHT * cls_loss + BOX_WEIGHT * box_loss + INTENT_WEIGHT * intent_loss

    bad = jnp.isnan(total) | jnp.isinf(total)
    zero = jnp.float32(0.0)
    return {
        'loss': jnp.where(bad, zero, total),
        'cls_loss': jnp.where(bad, zero, cls_loss),
        'box_loss': jnp.where(bad, zero, box_loss),
        'intent_loss': jnp.where(bad, zero, intent_loss),
        'num_pos_anchors': num_pos,
    }


# ---------------------------------------------------------------------------------
# Pure-JAX reference (mirrors PyTorch semantics) for verification
# ---------------------------------------------------------------------------------
def _ref_single(anchors, gt_b, gint_b, gval_b, cls_b, box_b, il_b, ru_b):
    N = anchors.shape[0]
    ax, ay, aw, ah, aang = (anchors[:, i] for i in range(5))
    gx, gy, gw, gh, gang = (gt_b[:, i] for i in range(5))
    ax1, ax2 = (ax - aw / 2)[:, None], (ax + aw / 2)[:, None]
    ay1, ay2 = (ay - ah / 2)[:, None], (ay + ah / 2)[:, None]
    gx1, gx2 = (gx - gw / 2)[None], (gx + gw / 2)[None]
    gy1, gy2 = (gy - gh / 2)[None], (gy + gh / 2)[None]
    iw = jnp.maximum(jnp.minimum(ax2, gx2) - jnp.maximum(ax1, gx1), 0.0)
    ih = jnp.maximum(jnp.minimum(ay2, gy2) - jnp.maximum(ay1, gy1), 0.0)
    inter = iw * ih
    union = (aw * ah)[:, None] + (gw * gh)[None] - inter
    iou = inter / (union + EPS)
    iou = jnp.where(gval_b[None] > 0.5, iou, -1.0)

    row_max, gt_idx = iou.max(1), iou.argmax(1)
    best_anchor = iou.argmax(0)
    force = ((jnp.arange(N)[:, None] == best_anchor[None])
             & (iou >= NEG_IOU_THRESHOLD) & (gval_b[None] > 0.5))
    pos = (row_max >= IOU_THRESHOLD) | force.any(1)
    neg = row_max < NEG_IOU_THRESHOLD
    valid = (pos | neg).astype(jnp.float32)
    pos_f = pos.astype(jnp.float32)

    ag = gt_b[gt_idx]
    aint = gint_b[gt_idx].astype(jnp.float32)
    dx = (ag[:, 0] - ax) / (aw + EPS)
    dy = (ag[:, 1] - ay) / (ah + EPS)
    dw = jnp.log(ag[:, 2] / (aw + EPS) + EPS)
    dl = jnp.log(ag[:, 3] / (ah + EPS) + EPS)
    dsin = jnp.sin(ag[:, 4] - aang)
    dcos = jnp.cos(ag[:, 4] - aang)
    tgt = jnp.stack([dx, dy, dw, dl, dsin, dcos], 1)
    d = jnp.abs(box_b - tgt)
    sl1 = jnp.where(d < SMOOTH_L1_BETA, 0.5 * d * d / SMOOTH_L1_BETA, d - 0.5 * SMOOTH_L1_BETA)
    box_sum = jnp.sum(pos_f[:, None] * sl1)

    x = cls_b[:, 0]
    t = pos_f
    p = jax.nn.sigmoid(x)
    ce = jnp.maximum(x, 0.0) - x * t + jnp.log1p(jnp.exp(-jnp.abs(x)))
    p_t = p * t + (1 - p) * (1 - t)
    focal = (FOCAL_ALPHA * t + (1 - FOCAL_ALPHA) * (1 - t)) * ce * (1 - p_t) ** FOCAL_GAMMA
    cls_sum = jnp.sum(valid * focal)

    lse = jax.nn.logsumexp(il_b, axis=1)
    logit_t = jnp.take_along_axis(il_b, aint.astype(jnp.int32)[:, None], axis=1)[:, 0]
    ce_int = lse - logit_t
    is_dom = jnp.zeros((N,), bool)
    for dcl in DOMINANT_CLASSES_FOR_DOWNSAMPLING:
        is_dom = is_dom | (aint == float(dcl))
    keep = (ru_b[:, 0] < (1.0 - INTENTION_DOWNSAMPLE_RATIO)).astype(jnp.float32)
    ds = jnp.where(is_dom, keep, 1.0)
    intent_sum = jnp.sum(pos_f * ce_int * ds)
    eff = jnp.sum(pos_f * ds)
    return cls_sum, box_sum, intent_sum, jnp.sum(pos_f), eff


def ref_loss(cls_logits, box_preds, intention_logits, anchors,
             gt_boxes, gt_intentions, gt_valid, rand_uniform):
    per_b = jax.vmap(_ref_single, in_axes=(None, 0, 0, 0, 0, 0, 0, 0))
    cs, bs, its, nps, effs = per_b(anchors.astype(jnp.float32), gt_boxes, gt_intentions,
                                   gt_valid, cls_logits, box_preds,
                                   intention_logits, rand_uniform)
    num_pos = nps.sum()
    cls_loss = cs.sum() / jnp.maximum(1.0, num_pos)
    box_loss = bs.sum() / jnp.maximum(1.0, num_pos)
    intent_loss = its.sum() / jnp.maximum(1.0, effs.sum())
    total = CLS_WEIGHT * cls_loss + BOX_WEIGHT * box_loss + INTENT_WEIGHT * intent_loss
    return {'loss': total, 'cls_loss': cls_loss, 'box_loss': box_loss,
            'intent_loss': intent_loss, 'num_pos_anchors': num_pos}


# ---------------------------------------------------------------------------------
if __name__ == "__main__":
    B, N, G, K = 4, 1024, 8, 8     # batch, anchors, max GTs (padded), intention classes
    N_TILE = 512                   # force 2 anchor tiles so the tiled grid is exercised

    key = jax.random.PRNGKey(0)
    keys = jax.random.split(key, 10)

    # anchors: [x, y, w, h, angle]
    centers = jax.random.uniform(keys[0], (N, 2), minval=0.0, maxval=40.0)
    sizes = jax.random.uniform(keys[1], (N, 2), minval=2.0, maxval=6.0)
    angles = jax.random.uniform(keys[2], (N, 1), minval=-3.14, maxval=3.14)
    anchors = jnp.concatenate([centers, sizes, angles], axis=1).astype(jnp.float32)

    cls_logits = jax.random.normal(keys[3], (B, N, 1), jnp.float32)
    box_preds = 0.1 * jax.random.normal(keys[4], (B, N, 6), jnp.float32)
    intention_logits = jax.random.normal(keys[5], (B, N, K), jnp.float32)

    # padded ground truth: copy a few anchors (guaranteed positives) + padding
    gt_boxes = jnp.zeros((B, G, 5), jnp.float32)
    gt_valid = jnp.zeros((B, G), jnp.float32)
    shift = jnp.array([0.1, 0.1, 0.0, 0.0, 0.05])
    idx0 = jnp.array([3, 200, 470, 801, 1010])
    idx1 = jnp.array([10, 640, 999])
    idx3 = jnp.array([77, 300, 512, 900])
    gt_boxes = gt_boxes.at[0, :5].set(anchors[idx0] + shift)
    gt_valid = gt_valid.at[0, :5].set(1.0)
    gt_boxes = gt_boxes.at[1, :3].set(anchors[idx1] + shift)
    gt_valid = gt_valid.at[1, :3].set(1.0)
    # batch element 2: zero GTs (all-negative path)
    gt_boxes = gt_boxes.at[3, :4].set(anchors[idx3] + shift)
    # extra GT whose best IoU falls in [neg_th, iou_th): exercises the force-match path
    wide = anchors[150] * jnp.array([1.0, 1.0, 1.35, 1.35, 1.0])
    gt_boxes = gt_boxes.at[3, 4].set(wide)
    gt_valid = gt_valid.at[3, :5].set(1.0)

    gt_intentions = jax.random.randint(keys[6], (B, G), 0, K).astype(jnp.int32)

    # precomputed uniforms for intention downsampling
    rand_uniform = jax.random.uniform(keys[7], (B, N, 1), jnp.float32)

    out = detection_intention_loss(cls_logits, box_preds, intention_logits, anchors,
                                   gt_boxes, gt_intentions, gt_valid, rand_uniform,
                                   n_tile=N_TILE)
    out = jax.tree_util.tree_map(jax.block_until_ready, out)

    ref = ref_loss(cls_logits, box_preds, intention_logits, anchors,
                   gt_boxes, gt_intentions, gt_valid, rand_uniform)

    import numpy as np
    np.testing.assert_allclose(float(out['num_pos_anchors']),
                               float(ref['num_pos_anchors']), atol=0)
    for k in ('loss', 'cls_loss', 'box_loss', 'intent_loss'):
        np.testing.assert_allclose(float(out[k]), float(ref[k]), rtol=5e-3, atol=5e-3)

    print("KERNEL_OK")
</pallas_src>

<mosaic_0001>
module attributes {stable_mosaic.version = 11 : i64} {
  func.func @_loss_kernel(%arg0: i32, %arg1: i32, %arg2: memref<11x512xf32, #tpu.memory_space<vmem>>, %arg3: memref<2x8x6xf32, #tpu.memory_space<vmem>>, %arg4: memref<2x8x8xf32, #tpu.memory_space<vmem>>, %arg5: memref<2x1x512xf32, #tpu.memory_space<vmem>>, %arg6: memref<2x6x512xf32, #tpu.memory_space<vmem>>, %arg7: memref<2x8x512xf32, #tpu.memory_space<vmem>>, %arg8: memref<2x2x512xf32, #tpu.memory_space<vmem>>, %arg9: memref<1x1x8x128xf32, #tpu.memory_space<vmem>>) attributes {dimension_semantics = [#tpu.dimension_semantics<parallel>, #tpu.dimension_semantics<parallel>], iteration_bounds = array<i64: 2, 2>, scalar_prefetch = 0 : i64, scratch_operands = 0 : i64, tpu.core_type = #tpu.core_type<tc>, window_params = [{transform_indices = @transform_0, window_bounds = array<i64: 11, 512>}, {transform_indices = @transform_1, window_bounds = array<i64: 2, 8, 6>}, {transform_indices = @transform_2, window_bounds = array<i64: 2, 8, 8>}, {transform_indices = @transform_3, window_bounds = array<i64: 2, 1, 512>}, {transform_indices = @transform_4, window_bounds = array<i64: 2, 6, 512>}, {transform_indices = @transform_5, window_bounds = array<i64: 2, 8, 512>}, {transform_indices = @transform_6, window_bounds = array<i64: 2, 2, 512>}, {transform_indices = @transform_7, window_bounds = array<i64: 1, 1, 8, 128>}]} {
    %c0 = arith.constant 0 : index
    %c0_0 = arith.constant 0 : index
    %0 = vector.load %arg2[%c0, %c0_0] : memref<11x512xf32, #tpu.memory_space<vmem>>, vector<11x512xf32>
    %c0_1 = arith.constant 0 : index
    %c0_2 = arith.constant 0 : index
    %c0_3 = arith.constant 0 : index
    %1 = vector.load %arg3[%c0_1, %c0_2, %c0_3] : memref<2x8x6xf32, #tpu.memory_space<vmem>>, vector<2x8x6xf32>
    %c0_4 = arith.constant 0 : index
    %c0_5 = arith.constant 0 : index
    %c0_6 = arith.constant 0 : index
    %2 = vector.load %arg4[%c0_4, %c0_5, %c0_6] : memref<2x8x8xf32, #tpu.memory_space<vmem>>, vector<2x8x8xf32>
    %c0_7 = arith.constant 0 : index
    %c0_8 = arith.constant 0 : index
    %c0_9 = arith.constant 0 : index
    %3 = vector.load %arg5[%c0_7, %c0_8, %c0_9] : memref<2x1x512xf32, #tpu.memory_space<vmem>>, vector<2x1x512xf32>
    %c0_10 = arith.constant 0 : index
    %c0_11 = arith.constant 0 : index
    %c0_12 = arith.constant 0 : index
    %4 = vector.load %arg6[%c0_10, %c0_11, %c0_12] : memref<2x6x512xf32, #tpu.memory_space<vmem>>, vector<2x6x512xf32>
    %c0_13 = arith.constant 0 : index
    %c0_14 = arith.constant 0 : index
    %c0_15 = arith.constant 0 : index
    %5 = vector.load %arg7[%c0_13, %c0_14, %c0_15] : memref<2x8x512xf32, #tpu.memory_space<vmem>>, vector<2x8x512xf32>
    %c0_16 = arith.constant 0 : index
    %c0_17 = arith.constant 0 : index
    %c0_18 = arith.constant 0 : index
    %6 = vector.load %arg8[%c0_16, %c0_17, %c0_18] : memref<2x2x512xf32, #tpu.memory_space<vmem>>, vector<2x2x512xf32>
    %7 = vector.extract_strided_slice %0 {offsets = [2, 0], sizes = [1, 512], strides = [1, 1]} : vector<11x512xf32> to vector<1x512xf32>
    %8 = vector.extract_strided_slice %0 {offsets = [3, 0], sizes = [1, 512], strides = [1, 1]} : vector<11x512xf32> to vector<1x512xf32>
    %9 = vector.extract_strided_slice %0 {offsets = [4, 0], sizes = [1, 512], strides = [1, 1]} : vector<11x512xf32> to vector<1x512xf32>
    %10 = vector.extract_strided_slice %0 {offsets = [5, 0], sizes = [1, 512], strides = [1, 1]} : vector<11x512xf32> to vector<1x512xf32>
    %11 = vector.extract_strided_slice %0 {offsets = [6, 0], sizes = [1, 512], strides = [1, 1]} : vector<11x512xf32> to vector<1x512xf32>
    %12 = vector.extract_strided_slice %0 {offsets = [9, 0], sizes = [1, 512], strides = [1, 1]} : vector<11x512xf32> to vector<1x512xf32>
    %13 = vector.extract_strided_slice %0 {offsets = [10, 0], sizes = [1, 512], strides = [1, 1]} : vector<11x512xf32> to vector<1x512xf32>
    %14 = vector.extract_strided_slice %1 {offsets = [0, 0, 0], sizes = [2, 8, 1], strides = [1, 1, 1]} : vector<2x8x6xf32> to vector<2x8x1xf32>
    %15 = vector.extract_strided_slice %1 {offsets = [0, 0, 1], sizes = [2, 8, 1], strides = [1, 1, 1]} : vector<2x8x6xf32> to vector<2x8x1xf32>
    %16 = vector.extract_strided_slice %1 {offsets = [0, 0, 2], sizes = [2, 8, 1], strides = [1, 1, 1]} : vector<2x8x6xf32> to vector<2x8x1xf32>
    %17 = vector.extract_strided_slice %1 {offsets = [0, 0, 3], sizes = [2, 8, 1], strides = [1, 1, 1]} : vector<2x8x6xf32> to vector<2x8x1xf32>
    %18 = vector.extract_strided_slice %1 {offsets = [0, 0, 4], sizes = [2, 8, 1], strides = [1, 1, 1]} : vector<2x8x6xf32> to vector<2x8x1xf32>
    %19 = vector.extract_strided_slice %1 {offsets = [0, 0, 5], sizes = [2, 8, 1], strides = [1, 1, 1]} : vector<2x8x6xf32> to vector<2x8x1xf32>
    %cst = arith.constant 5.000000e-01 : f32
    %20 = vector.broadcast %cst : f32 to vector<2x8x1xf32>
    %21 = arith.cmpf ogt, %19, %20 : vector<2x8x1xf32>
    %22 = vector.shape_cast %8 : vector<1x512xf32> to vector<1x1x512xf32>
    %23 = vector.broadcast %22 : vector<1x1x512xf32> to vector<2x8x512xf32>
    %24 = vector.broadcast %15 : vector<2x8x1xf32> to vector<2x8x512xf32>
    %25 = arith.minimumf %23, %24 : vector<2x8x512xf32>
    %26 = vector.shape_cast %7 : vector<1x512xf32> to vector<1x1x512xf32>
    %27 = vector.broadcast %26 : vector<1x1x512xf32> to vector<2x8x512xf32>
    %28 = vector.broadcast %14 : vector<2x8x1xf32> to vector<2x8x512xf32>
    %29 = arith.maximumf %27, %28 : vector<2x8x512xf32>
    %30 = arith.subf %25, %29 : vector<2x8x512xf32>
    %cst_19 = arith.constant 0.000000e+00 : f32
    %31 = vector.broadcast %cst_19 : f32 to vector<2x8x512xf32>
    %32 = arith.maximumf %30, %31 : vector<2x8x512xf32>
    %33 = vector.shape_cast %10 : vector<1x512xf32> to vector<1x1x512xf32>
    %34 = vector.broadcast %33 : vector<1x1x512xf32> to vector<2x8x512xf32>
    %35 = vector.broadcast %17 : vector<2x8x1xf32> to vector<2x8x512xf32>
    %36 = arith.minimumf %34, %35 : vector<2x8x512xf32>
    %37 = vector.shape_cast %9 : vector<1x512xf32> to vector<1x1x512xf32>
    %38 = vector.broadcast %37 : vector<1x1x512xf32> to vector<2x8x512xf32>
    %39 = vector.broadcast %16 : vector<2x8x1xf32> to vector<2x8x512xf32>
    %40 = arith.maximumf %38, %39 : vector<2x8x512xf32>
    %41 = arith.subf %36, %40 : vector<2x8x512xf32>
    %cst_20 = arith.constant 0.000000e+00 : f32
    %42 = vector.broadcast %cst_20 : f32 to vector<2x8x512xf32>
    %43 = arith.maximumf %41, %42 : vector<2x8x512xf32>
    %44 = arith.mulf %32, %43 : vector<2x8x512xf32>
    %45 = vector.shape_cast %11 : vector<1x512xf32> to vector<1x1x512xf32>
    %46 = vector.broadcast %45 : vector<1x1x512xf32> to vector<2x8x512xf32>
    %47 = vector.broadcast %18 : vector<2x8x1xf32> to vector<2x8x512xf32>
    %48 = arith.addf %46, %47 : vector<2x8x512xf32>
    %49 = arith.subf %48, %44 : vector<2x8x512xf32>
    %cst_21 = arith.constant 9.99999997E-7 : f32
    %50 = vector.broadcast %cst_21 : f32 to vector<2x8x512xf32>
    %51 = arith.addf %49, %50 : vector<2x8x512xf32>
    %52 = tpu.reciprocal %51 {approx = true} : vector<2x8x512xf32> -> vector<2x8x512xf32>
    %53 = arith.mulf %44, %52 : vector<2x8x512xf32>
    %cst_22 = arith.constant -1.000000e+00 : f32
    %54 = vector.shape_cast %21 : vector<2x8x1xi1> to vector<2x8x1xi1>
    %55 = vector.broadcast %54 : vector<2x8x1xi1> to vector<2x8x512xi1>
    %56 = vector.broadcast %cst_22 : f32 to vector<2x8x512xf32>
    %57 = arith.select %55, %53, %56 : vector<2x8x512xi1>, vector<2x8x512xf32>
    %cst_23 = arith.constant dense<0xFF800000> : vector<2x512xf32>
    %58 = vector.multi_reduction <maximumf>, %57, %cst_23 [1] : vector<2x8x512xf32> to vector<2x512xf32>
    %59 = vector.shape_cast %58 : vector<2x512xf32> to vector<2x1x512xf32>
    %60 = tpu.iota {dimensions = array<i32: 1>} : vector<2x8x512xi32>
    %61 = vector.broadcast %59 : vector<2x1x512xf32> to vector<2x8x512xf32>
    %62 = arith.cmpf oeq, %57, %61 : vector<2x8x512xf32>
    %c8_i32 = arith.constant 8 : i32
    %63 = vector.broadcast %c8_i32 : i32 to vector<2x8x512xi32>
    %64 = arith.select %62, %60, %63 : vector<2x8x512xi1>, vector<2x8x512xi32>
    %cst_24 = arith.constant dense<2147483647> : vector<2x512xi32>
    %65 = vector.multi_reduction <minsi>, %64, %cst_24 [1] : vector<2x8x512xi32> to vector<2x512xi32>
    %66 = vector.shape_cast %65 : vector<2x512xi32> to vector<2x1x512xi32>
    %67 = vector.broadcast %66 : vector<2x1x512xi32> to vector<2x8x512xi32>
    %68 = arith.cmpi eq, %60, %67 : vector<2x8x512xi32>
    %69 = arith.extui %68 : vector<2x8x512xi1> to vector<2x8x512xi32>
    %70 = arith.sitofp %69 : vector<2x8x512xi32> to vector<2x8x512xf32>
    "tpu.trace_start"() <{level = 10 : i32, message = "bcg,bgn->bcn"}> : () -> ()
    %cst_25 = arith.constant dense<0.000000e+00> : vector<2x8x512xf32>
    %71 = tpu.matmul %2, %70, %cst_25 {dimension_numbers = #tpu.dot_dimension_numbers<[2], [1], [1], [2], [0, 0, 0, 1, 1, 2], [0], [0]>} : vector<2x8x8xf32>, vector<2x8x512xf32>, vector<2x8x512xf32> -> vector<2x8x512xf32>
    "tpu.trace_stop"() : () -> ()
    %cst_26 = arith.constant 6.000000e-01 : f32
    %72 = vector.broadcast %cst_26 : f32 to vector<2x8x512xf32>
    %73 = arith.mulf %72, %51 : vector<2x8x512xf32>
    %74 = arith.cmpf oge, %44, %73 : vector<2x8x512xf32>
    %75 = vector.broadcast %21 : vector<2x8x1xi1> to vector<2x8x512xi1>
    %76 = arith.andi %74, %75 : vector<2x8x512xi1>
    %77 = arith.extui %76 : vector<2x8x512xi1> to vector<2x8x512xi32>
    %78 = arith.sitofp %77 : vector<2x8x512xi32> to vector<2x8x512xf32>
    %cst_27 = arith.constant 4.500000e-01 : f32
    %79 = vector.broadcast %cst_27 : f32 to vector<2x8x512xf32>
    %80 = arith.mulf %79, %51 : vector<2x8x512xf32>
    %81 = arith.cmpf oge, %44, %80 : vector<2x8x512xf32>
    %82 = vector.broadcast %21 : vector<2x8x1xi1> to vector<2x8x512xi1>
    %83 = arith.andi %81, %82 : vector<2x8x512xi1>
    %84 = arith.extui %83 : vector<2x8x512xi1> to vector<2x8x512xi32>
    %85 = arith.sitofp %84 : vector<2x8x512xi32> to vector<2x8x512xf32>
    %cst_28 = arith.constant dense<0xFF800000> : vector<2x512xf32>
    %86 = vector.multi_reduction <maximumf>, %78, %cst_28 [1] : vector<2x8x512xf32> to vector<2x512xf32>
    %87 = vector.shape_cast %86 : vector<2x512xf32> to vector<2x1x512xf32>
    %cst_29 = arith.constant 5.000000e-01 : f32
    %88 = vector.broadcast %cst_29 : f32 to vector<2x1x512xf32>
    %89 = arith.cmpf ogt, %87, %88 : vector<2x1x512xf32>
    %cst_30 = arith.constant dense<0xFF800000> : vector<2x512xf32>
    %90 = vector.multi_reduction <maximumf>, %85, %cst_30 [1] : vector<2x8x512xf32> to vector<2x512xf32>
    %91 = vector.shape_cast %90 : vector<2x512xf32> to vector<2x1x512xf32>
    %cst_31 = arith.constant 5.000000e-01 : f32
    %92 = vector.broadcast %cst_31 : f32 to vector<2x1x512xf32>
    %93 = arith.cmpf ogt, %91, %92 : vector<2x1x512xf32>
    %94 = vector.extract_strided_slice %6 {offsets = [0, 0, 0], sizes = [2, 1, 512], strides = [1, 1, 1]} : vector<2x2x512xf32> to vector<2x1x512xf32>
    %95 = vector.extract_strided_slice %6 {offsets = [0, 1, 0], sizes = [2, 1, 512], strides = [1, 1, 1]} : vector<2x2x512xf32> to vector<2x1x512xf32>
    %cst_32 = arith.constant 5.000000e-01 : f32
    %96 = vector.broadcast %cst_32 : f32 to vector<2x1x512xf32>
    %97 = arith.cmpf ogt, %95, %96 : vector<2x1x512xf32>
    %98 = arith.ori %89, %97 : vector<2x1x512xi1>
    %cst_33 = arith.constant dense<true> : vector<2x1x512xi1>
    %99 = arith.xori %93, %cst_33 : vector<2x1x512xi1>
    %100 = arith.extui %98 : vector<2x1x512xi1> to vector<2x1x512xi32>
    %101 = arith.sitofp %100 : vector<2x1x512xi32> to vector<2x1x512xf32>
    %102 = arith.ori %98, %99 : vector<2x1x512xi1>
    %103 = arith.extui %102 : vector<2x1x512xi1> to vector<2x1x512xi32>
    %104 = arith.sitofp %103 : vector<2x1x512xi32> to vector<2x1x512xf32>
    %105 = vector.extract_strided_slice %0 {offsets = [0, 0], sizes = [2, 512], strides = [1, 1]} : vector<11x512xf32> to vector<2x512xf32>
    %106 = vector.extract_strided_slice %0 {offsets = [7, 0], sizes = [2, 512], strides = [1, 1]} : vector<11x512xf32> to vector<2x512xf32>
    %107 = vector.extract_strided_slice %71 {offsets = [0, 0, 0], sizes = [2, 2, 512], strides = [1, 1, 1]} : vector<2x8x512xf32> to vector<2x2x512xf32>
    %108 = vector.shape_cast %105 : vector<2x512xf32> to vector<1x2x512xf32>
    %109 = vector.broadcast %108 : vector<1x2x512xf32> to vector<2x2x512xf32>
    %110 = arith.subf %107, %109 : vector<2x2x512xf32>
    %111 = vector.shape_cast %106 : vector<2x512xf32> to vector<1x2x512xf32>
    %112 = vector.broadcast %111 : vector<1x2x512xf32> to vector<2x2x512xf32>
    %113 = arith.mulf %110, %112 : vector<2x2x512xf32>
    %114 = vector.extract_strided_slice %71 {offsets = [0, 2, 0], sizes = [2, 2, 512], strides = [1, 1, 1]} : vector<2x8x512xf32> to vector<2x2x512xf32>
    %115 = vector.shape_cast %106 : vector<2x512xf32> to vector<1x2x512xf32>
    %116 = vector.broadcast %115 : vector<1x2x512xf32> to vector<2x2x512xf32>
    %117 = arith.mulf %114, %116 : vector<2x2x512xf32>
    %cst_34 = arith.constant 9.99999997E-7 : f32
    %118 = vector.broadcast %cst_34 : f32 to vector<2x2x512xf32>
    %119 = arith.addf %117, %118 : vector<2x2x512xf32>
    %120 = math.log %119 : vector<2x2x512xf32>
    %121 = vector.extract_strided_slice %71 {offsets = [0, 4, 0], sizes = [2, 1, 512], strides = [1, 1, 1]} : vector<2x8x512xf32> to vector<2x1x512xf32>
    %122 = vector.extract_strided_slice %71 {offsets = [0, 5, 0], sizes = [2, 1, 512], strides = [1, 1, 1]} : vector<2x8x512xf32> to vector<2x1x512xf32>
    %123 = vector.shape_cast %13 : vector<1x512xf32> to vector<1x1x512xf32>
    %124 = vector.broadcast %123 : vector<1x1x512xf32> to vector<2x1x512xf32>
    %125 = arith.mulf %121, %124 : vector<2x1x512xf32>
    %126 = vector.shape_cast %12 : vector<1x512xf32> to vector<1x1x512xf32>
    %127 = vector.broadcast %126 : vector<1x1x512xf32> to vector<2x1x512xf32>
    %128 = arith.mulf %122, %127 : vector<2x1x512xf32>
    %129 = arith.subf %125, %128 : vector<2x1x512xf32>
    %130 = vector.shape_cast %13 : vector<1x512xf32> to vector<1x1x512xf32>
    %131 = vector.broadcast %130 : vector<1x1x512xf32> to vector<2x1x512xf32>
    %132 = arith.mulf %122, %131 : vector<2x1x512xf32>
    %133 = vector.shape_cast %12 : vector<1x512xf32> to vector<1x1x512xf32>
    %134 = vector.broadcast %133 : vector<1x1x512xf32> to vector<2x1x512xf32>
    %135 = arith.mulf %121, %134 : vector<2x1x512xf32>
    %136 = arith.addf %132, %135 : vector<2x1x512xf32>
    %137 = vector.extract_strided_slice %4 {offsets = [0, 0, 0], sizes = [2, 2, 512], strides = [1, 1, 1]} : vector<2x6x512xf32> to vector<2x2x512xf32>
    %138 = arith.subf %137, %113 : vector<2x2x512xf32>
    %139 = math.absf %138 : vector<2x2x512xf32>
    %cst_35 = arith.constant 0.111111112 : f32
    %140 = vector.broadcast %cst_35 : f32 to vector<2x2x512xf32>
    %141 = arith.cmpf olt, %139, %140 : vector<2x2x512xf32>
    %cst_36 = arith.constant 4.500000e+00 : f32
    %142 = vector.broadcast %cst_36 : f32 to vector<2x2x512xf32>
    %143 = arith.mulf %142, %139 : vector<2x2x512xf32>
    %144 = arith.mulf %143, %139 : vector<2x2x512xf32>
    %cst_37 = arith.constant 0.055555556 : f32
    %145 = vector.broadcast %cst_37 : f32 to vector<2x2x512xf32>
    %146 = arith.subf %139, %145 : vector<2x2x512xf32>
    %147 = arith.select %141, %144, %146 : vector<2x2x512xi1>, vector<2x2x512xf32>
    %cst_38 = arith.constant dense<0.000000e+00> : vector<2x512xf32>
    %148 = vector.multi_reduction <add>, %147, %cst_38 [1] : vector<2x2x512xf32> to vector<2x512xf32>
    %149 = vector.shape_cast %148 : vector<2x512xf32> to vector<2x1x512xf32>
    %150 = vector.extract_strided_slice %4 {offsets = [0, 2, 0], sizes = [2, 2, 512], strides = [1, 1, 1]} : vector<2x6x512xf32> to vector<2x2x512xf32>
    %151 = arith.subf %150, %120 : vector<2x2x512xf32>
    %152 = math.absf %151 : vector<2x2x512xf32>
    %cst_39 = arith.constant 0.111111112 : f32
    %153 = vector.broadcast %cst_39 : f32 to vector<2x2x512xf32>
    %154 = arith.cmpf olt, %152, %153 : vector<2x2x512xf32>
    %cst_40 = arith.constant 4.500000e+00 : f32
    %155 = vector.broadcast %cst_40 : f32 to vector<2x2x512xf32>
    %156 = arith.mulf %155, %152 : vector<2x2x512xf32>
    %157 = arith.mulf %156, %152 : vector<2x2x512xf32>
    %cst_41 = arith.constant 0.055555556 : f32
    %158 = vector.broadcast %cst_41 : f32 to vector<2x2x512xf32>
    %159 = arith.subf %152, %158 : vector<2x2x512xf32>
    %160 = arith.select %154, %157, %159 : vector<2x2x512xi1>, vector<2x2x512xf32>
    %cst_42 = arith.constant dense<0.000000e+00> : vector<2x512xf32>
    %161 = vector.multi_reduction <add>, %160, %cst_42 [1] : vector<2x2x512xf32> to vector<2x512xf32>
    %162 = vector.shape_cast %161 : vector<2x512xf32> to vector<2x1x512xf32>
    %163 = arith.addf %149, %162 : vector<2x1x512xf32>
    %164 = vector.extract_strided_slice %4 {offsets = [0, 4, 0], sizes = [2, 1, 512], strides = [1, 1, 1]} : vector<2x6x512xf32> to vector<2x1x512xf32>
    %165 = arith.subf %164, %129 : vector<2x1x512xf32>
    %166 = math.absf %165 : vector<2x1x512xf32>
    %cst_43 = arith.constant 0.111111112 : f32
    %167 = vector.broadcast %cst_43 : f32 to vector<2x1x512xf32>
    %168 = arith.cmpf olt, %166, %167 : vector<2x1x512xf32>
    %cst_44 = arith.constant 4.500000e+00 : f32
    %169 = vector.broadcast %cst_44 : f32 to vector<2x1x512xf32>
    %170 = arith.mulf %169, %166 : vector<2x1x512xf32>
    %171 = arith.mulf %170, %166 : vector<2x1x512xf32>
    %cst_45 = arith.constant 0.055555556 : f32
    %172 = vector.broadcast %cst_45 : f32 to vector<2x1x512xf32>
    %173 = arith.subf %166, %172 : vector<2x1x512xf32>
    %174 = arith.select %168, %171, %173 : vector<2x1x512xi1>, vector<2x1x512xf32>
    %175 = arith.addf %163, %174 : vector<2x1x512xf32>
    %176 = vector.extract_strided_slice %4 {offsets = [0, 5, 0], sizes = [2, 1, 512], strides = [1, 1, 1]} : vector<2x6x512xf32> to vector<2x1x512xf32>
    %177 = arith.subf %176, %136 : vector<2x1x512xf32>
    %178 = math.absf %177 : vector<2x1x512xf32>
    %cst_46 = arith.constant 0.111111112 : f32
    %179 = vector.broadcast %cst_46 : f32 to vector<2x1x512xf32>
    %180 = arith.cmpf olt, %178, %179 : vector<2x1x512xf32>
    %cst_47 = arith.constant 4.500000e+00 : f32
    %181 = vector.broadcast %cst_47 : f32 to vector<2x1x512xf32>
    %182 = arith.mulf %181, %178 : vector<2x1x512xf32>
    %183 = arith.mulf %182, %178 : vector<2x1x512xf32>
    %cst_48 = arith.constant 0.055555556 : f32
    %184 = vector.broadcast %cst_48 : f32 to vector<2x1x512xf32>
    %185 = arith.subf %178, %184 : vector<2x1x512xf32>
    %186 = arith.select %180, %183, %185 : vector<2x1x512xi1>, vector<2x1x512xf32>
    %187 = arith.addf %175, %186 : vector<2x1x512xf32>
    %188 = math.absf %3 : vector<2x1x512xf32>
    %cst_49 = arith.constant 0.000000e+00 : f32
    %189 = vector.broadcast %cst_49 : f32 to vector<2x1x512xf32>
    %190 = arith.subf %189, %188 : vector<2x1x512xf32>
    %191 = math.exp %190 : vector<2x1x512xf32>
    %cst_50 = arith.constant 1.000000e+00 : f32
    %192 = vector.broadcast %cst_50 : f32 to vector<2x1x512xf32>
    %193 = arith.addf %192, %191 : vector<2x1x512xf32>
    %194 = tpu.reciprocal %193 {approx = true} : vector<2x1x512xf32> -> vector<2x1x512xf32>
    %cst_51 = arith.constant 0.000000e+00 : f32
    %195 = vector.broadcast %cst_51 : f32 to vector<2x1x512xf32>
    %196 = arith.cmpf oge, %3, %195 : vector<2x1x512xf32>
    %197 = arith.mulf %191, %194 : vector<2x1x512xf32>
    %198 = arith.select %196, %194, %197 : vector<2x1x512xi1>, vector<2x1x512xf32>
    %cst_52 = arith.constant 0.000000e+00 : f32
    %199 = vector.broadcast %cst_52 : f32 to vector<2x1x512xf32>
    %200 = arith.maximumf %3, %199 : vector<2x1x512xf32>
    %201 = arith.mulf %3, %101 : vector<2x1x512xf32>
    %202 = arith.subf %200, %201 : vector<2x1x512xf32>
    %203 = math.log1p %191 : vector<2x1x512xf32>
    %204 = arith.addf %202, %203 : vector<2x1x512xf32>
    %205 = arith.mulf %198, %101 : vector<2x1x512xf32>
    %cst_53 = arith.constant 1.000000e+00 : f32
    %206 = vector.broadcast %cst_53 : f32 to vector<2x1x512xf32>
    %207 = arith.subf %206, %198 : vector<2x1x512xf32>
    %cst_54 = arith.constant 1.000000e+00 : f32
    %208 = vector.broadcast %cst_54 : f32 to vector<2x1x512xf32>
    %209 = arith.subf %208, %101 : vector<2x1x512xf32>
    %210 = arith.mulf %207, %209 : vector<2x1x512xf32>
    %211 = arith.addf %205, %210 : vector<2x1x512xf32>
    %cst_55 = arith.constant 1.000000e+00 : f32
    %212 = vector.broadcast %cst_55 : f32 to vector<2x1x512xf32>
    %213 = arith.subf %212, %211 : vector<2x1x512xf32>
    %cst_56 = arith.constant 1.000000e+00 : f32
    %214 = vector.broadcast %cst_56 : f32 to vector<2x1x512xf32>
    %215 = arith.mulf %214, %213 : vector<2x1x512xf32>
    %216 = arith.mulf %215, %213 : vector<2x1x512xf32>
    %cst_57 = arith.constant 2.500000e-01 : f32
    %217 = vector.broadcast %cst_57 : f32 to vector<2x1x512xf32>
    %218 = arith.mulf %217, %101 : vector<2x1x512xf32>
    %cst_58 = arith.constant 1.000000e+00 : f32
    %219 = vector.broadcast %cst_58 : f32 to vector<2x1x512xf32>
    %220 = arith.subf %219, %101 : vector<2x1x512xf32>
    %cst_59 = arith.constant 7.500000e-01 : f32
    %221 = vector.broadcast %cst_59 : f32 to vector<2x1x512xf32>
    %222 = arith.mulf %221, %220 : vector<2x1x512xf32>
    %223 = arith.addf %218, %222 : vector<2x1x512xf32>
    %224 = arith.mulf %104, %223 : vector<2x1x512xf32>
    %225 = arith.mulf %224, %204 : vector<2x1x512xf32>
    %226 = arith.mulf %225, %216 : vector<2x1x512xf32>
    %227 = vector.extract_strided_slice %71 {offsets = [0, 6, 0], sizes = [2, 1, 512], strides = [1, 1, 1]} : vector<2x8x512xf32> to vector<2x1x512xf32>
    %cst_60 = arith.constant dense<0xFF800000> : vector<2x512xf32>
    %228 = vector.multi_reduction <maximumf>, %5, %cst_60 [1] : vector<2x8x512xf32> to vector<2x512xf32>
    %229 = vector.shape_cast %228 : vector<2x512xf32> to vector<2x1x512xf32>
    %230 = vector.broadcast %229 : vector<2x1x512xf32> to vector<2x8x512xf32>
    %231 = arith.subf %5, %230 : vector<2x8x512xf32>
    %232 = math.exp %231 : vector<2x8x512xf32>
    %cst_61 = arith.constant dense<0.000000e+00> : vector<2x512xf32>
    %233 = vector.multi_reduction <add>, %232, %cst_61 [1] : vector<2x8x512xf32> to vector<2x512xf32>
    %234 = vector.shape_cast %233 : vector<2x512xf32> to vector<2x1x512xf32>
    %235 = math.log %234 : vector<2x1x512xf32>
    %236 = arith.addf %229, %235 : vector<2x1x512xf32>
    %237 = tpu.iota {dimensions = array<i32: 1>} : vector<2x8x512xi32>
    %238 = arith.sitofp %237 : vector<2x8x512xi32> to vector<2x8x512xf32>
    %239 = vector.broadcast %227 : vector<2x1x512xf32> to vector<2x8x512xf32>
    %240 = arith.subf %238, %239 : vector<2x8x512xf32>
    %241 = math.absf %240 : vector<2x8x512xf32>
    %cst_62 = arith.constant 5.000000e-01 : f32
    %242 = vector.broadcast %cst_62 : f32 to vector<2x8x512xf32>
    %243 = arith.cmpf olt, %241, %242 : vector<2x8x512xf32>
    %244 = arith.extui %243 : vector<2x8x512xi1> to vector<2x8x512xi32>
    %245 = arith.sitofp %244 : vector<2x8x512xi32> to vector<2x8x512xf32>
    %246 = arith.mulf %5, %245 : vector<2x8x512xf32>
    %cst_63 = arith.constant dense<0.000000e+00> : vector<2x512xf32>
    %247 = vector.multi_reduction <add>, %246, %cst_63 [1] : vector<2x8x512xf32> to vector<2x512xf32>
    %248 = vector.shape_cast %247 : vector<2x512xf32> to vector<2x1x512xf32>
    %249 = arith.subf %236, %248 : vector<2x1x512xf32>
    %cst_64 = arith.constant 0.000000e+00 : f32
    %250 = vector.broadcast %cst_64 : f32 to vector<2x1x512xf32>
    %251 = arith.subf %227, %250 : vector<2x1x512xf32>
    %252 = math.absf %251 : vector<2x1x512xf32>
    %cst_65 = arith.constant 5.000000e-01 : f32
    %253 = vector.broadcast %cst_65 : f32 to vector<2x1x512xf32>
    %254 = arith.cmpf olt, %252, %253 : vector<2x1x512xf32>
    %cst_66 = arith.constant 1.000000e+00 : f32
    %255 = vector.broadcast %cst_66 : f32 to vector<2x1x512xf32>
    %256 = arith.subf %227, %255 : vector<2x1x512xf32>
    %257 = math.absf %256 : vector<2x1x512xf32>
    %cst_67 = arith.constant 5.000000e-01 : f32
    %258 = vector.broadcast %cst_67 : f32 to vector<2x1x512xf32>
    %259 = arith.cmpf olt, %257, %258 : vector<2x1x512xf32>
    %260 = arith.ori %254, %259 : vector<2x1x512xi1>
    %cst_68 = arith.constant 5.000000e-01 : f32
    %261 = vector.broadcast %cst_68 : f32 to vector<2x1x512xf32>
    %262 = arith.cmpf olt, %94, %261 : vector<2x1x512xf32>
    %263 = arith.extui %262 : vector<2x1x512xi1> to vector<2x1x512xi32>
    %264 = arith.sitofp %263 : vector<2x1x512xi32> to vector<2x1x512xf32>
    %cst_69 = arith.constant 1.000000e+00 : f32
    %265 = vector.broadcast %cst_69 : f32 to vector<2x1x512xf32>
    %266 = arith.select %260, %264, %265 : vector<2x1x512xi1>, vector<2x1x512xf32>
    %267 = arith.mulf %101, %187 : vector<2x1x512xf32>
    %268 = arith.mulf %101, %249 : vector<2x1x512xf32>
    %269 = arith.mulf %268, %266 : vector<2x1x512xf32>
    %270 = arith.mulf %101, %266 : vector<2x1x512xf32>
    %271 = tpu.concatenate %226, %267, %269, %101, %270 in 1 : vector<2x1x512xf32>, vector<2x1x512xf32>, vector<2x1x512xf32>, vector<2x1x512xf32>, vector<2x1x512xf32> -> vector<2x5x512xf32>
    %cst_70 = arith.constant dense<0.000000e+00> : vector<2x5xf32>
    %272 = vector.multi_reduction <add>, %271, %cst_70 [2] : vector<2x5x512xf32> to vector<2x5xf32>
    %273 = vector.shape_cast %272 : vector<2x5xf32> to vector<2x5x1xf32>
    %cst_71 = arith.constant dense<0.000000e+00> : vector<5x1xf32>
    %274 = vector.multi_reduction <add>, %273, %cst_71 [0] : vector<2x5x1xf32> to vector<5x1xf32>
    %cst_72 = arith.constant 0.000000e+00 : f32
    %275 = vector.broadcast %cst_72 : f32 to vector<3x1xf32>
    %276 = tpu.concatenate %274, %275 in 0 : vector<5x1xf32>, vector<3x1xf32> -> vector<8x1xf32>
    %277 = vector.shape_cast %276 : vector<8x1xf32> to vector<8x1xf32>
    %278 = vector.broadcast %277 : vector<8x1xf32> to vector<8x128xf32>
    %c0_73 = arith.constant 0 : index
    %c0_74 = arith.constant 0 : index
    %c0_75 = arith.constant 0 : index
    %c0_76 = arith.constant 0 : index
    %279 = vector.load %arg9[%c0_73, %c0_74, %c0_75, %c0_76] : memref<1x1x8x128xf32, #tpu.memory_space<vmem>>, vector<1x1x8x128xf32>
    %280 = vector.shape_cast %279 : vector<1x1x8x128xf32> to vector<8x128xf32>
    %281 = vector.shape_cast %278 : vector<8x128xf32> to vector<1x1x8x128xf32>
    tpu.vector_store %arg9[%c0_73, %c0_74, %c0_75, %c0_76], %281 {strides = array<i32>} : memref<1x1x8x128xf32, #tpu.memory_space<vmem>>, vector<1x1x8x128xf32>,
    return
  }
  func.func @transform_0(%arg0: i32, %arg1: i32) -> (i32, i32) {
    %c0_i32 = arith.constant 0 : i32
    %c0_i32_0 = arith.constant 0 : i32
    return %c0_i32, %arg0 : i32, i32
  }
  func.func @transform_1(%arg0: i32, %arg1: i32) -> (i32, i32, i32) {
    %c0_i32 = arith.constant 0 : i32
    %c0_i32_0 = arith.constant 0 : i32
    %c0_i32_1 = arith.constant 0 : i32
    return %arg1, %c0_i32, %c0_i32_0 : i32, i32, i32
  }
  func.func @transform_2(%arg0: i32, %arg1: i32) -> (i32, i32, i32) {
    %c0_i32 = arith.constant 0 : i32
    %c0_i32_0 = arith.constant 0 : i32
    %c0_i32_1 = arith.constant 0 : i32
    return %arg1, %c0_i32, %c0_i32_0 : i32, i32, i32
  }
  func.func @transform_3(%arg0: i32, %arg1: i32) -> (i32, i32, i32) {
    %c0_i32 = arith.constant 0 : i32
    %c0_i32_0 = arith.constant 0 : i32
    return %arg1, %c0_i32, %arg0 : i32, i32, i32
  }
  func.func @transform_4(%arg0: i32, %arg1: i32) -> (i32, i32, i32) {
    %c0_i32 = arith.constant 0 : i32
    %c0_i32_0 = arith.constant 0 : i32
    return %arg1, %c0_i32, %arg0 : i32, i32, i32
  }
  func.func @transform_5(%arg0: i32, %arg1: i32) -> (i32, i32, i32) {
    %c0_i32 = arith.constant 0 : i32
    %c0_i32_0 = arith.constant 0 : i32
    return %arg1, %c0_i32, %arg0 : i32, i32, i32
  }
  func.func @transform_6(%arg0: i32, %arg1: i32) -> (i32, i32, i32) {
    %c0_i32 = arith.constant 0 : i32
    %c0_i32_0 = arith.constant 0 : i32
    return %arg1, %c0_i32, %arg0 : i32, i32, i32
  }
  func.func @transform_7(%arg0: i32, %arg1: i32) -> (i32, i32, i32, i32) {
    %c0_i32 = arith.constant 0 : i32
    %c0_i32_0 = arith.constant 0 : i32
    %c0_i32_1 = arith.constant 0 : i32
    return %arg0, %arg1, %c0_i32, %c0_i32_0 : i32, i32, i32, i32
  }
}

</mosaic_0001>

<llo_original>
// kernel: tpu_custom_call.1
$region0: #{tpu_custom_call.1}
  #allocation0 [shape = 'u32[]', space=smem, size = 0x4, offset = 0x4, fixed_abs, tag = 'smem constant byte address 0x4 - core index']
  #allocation1 [shape = 'u32[144,128]{1,0:T(1,128)}', space=vmem, size = 0x12000, scoped, tag = 'internal scratch']
  %s0 = inlined_call_operand.vmem [shape: f32[11,1024], index: 0, kind: input, shape index: {}]
  %s1 = inlined_call_operand.vmem [shape: f32[4,8,6], index: 1, kind: input, shape index: {}]
  %s2 = inlined_call_operand.vmem [shape: f32[4,8,8], index: 2, kind: input, shape index: {}]
  %s3 = inlined_call_operand.hbm [shape: f32[4,1,1024], index: 3, kind: input, shape index: {}]
  %s4 = inlined_call_operand.vmem [shape: f32[4,6,1024], index: 4, kind: input, shape index: {}]
  %s5 = inlined_call_operand.vmem [shape: f32[4,8,1024], index: 5, kind: input, shape index: {}]
  %s6 = inlined_call_operand.vmem [shape: f32[4,2,1024], index: 6, kind: input, shape index: {}]
  %s7 = inlined_call_operand.hbm [shape: f32[2,2,8,128], index: 7, kind: output, shape index: {}]
  %s8 = sld [smem:[#allocation0]]
  $region172: #{tpu_custom_call.1} parent=0
    _
  %s10 = ssub.s32 1, %s8
  %s11 = scalar_select 0, %s10, %s8
  $region1: #{tpu_custom_call.1} parent=0
    #allocation2 [shape = 'u8[65536]{0}', space=vmem, size = 0x10000, scoped, tag = 'input window, operand 0']
    #allocation3 [shape = 'u8[8192]{0}', space=vmem, size = 0x2000, scoped, tag = 'input window, operand 3']
    #allocation4 [shape = 's32[2]{0}', space=sflag, size = 0x8, scoped, tag = 'scoped memory for tpu_custom_call.1']
    #allocation5 [shape = 's32[2]{0}', space=sflag, size = 0x8, scoped, tag = 'scoped memory for tpu_custom_call.1']
    #allocation6 [shape = 'u8[65536]{0}', space=vmem, size = 0x10000, scoped, tag = 'input window, operand 4']
    #allocation7 [shape = 'u8[65536]{0}', space=vmem, size = 0x10000, scoped, tag = 'input window, operand 5']
    #allocation8 [shape = 'u8[16384]{0}', space=vmem, size = 0x4000, scoped, tag = 'input window, operand 6']
    #allocation9 [shape = 'u8[8192]{0}', space=vmem, size = 0x2000, scoped, tag = 'output window, operand 0']
    %12 = vsyncpa [#allocation4], 0
    %s13 = scalar_lea.sflag [#allocation4], 1
    %14 = vsyncpa %s13, 0
    %15 = vsyncpa [#allocation5], 0
    %s16 = scalar_lea.sflag [#allocation5], 1
    %17 = vsyncpa %s16, 0
    loop: start=0, step=1, limit=6
    $region2: #{tpu_custom_call.1} parent=1 // loop_pre_header
      _
    $region3: #{tpu_custom_call.1} parent=1 // loop_header
      %s19 = sphi 0, %s23
      %p20 = scmp.ge.s32.totalorder %s19, 6
      %s26 = sphi 0, %s38
      %s27 = sphi 0, %s34
      %s28 = sphi 0, %s26
      %s29 = sphi 0, %s27
      %s30 = sphi 0, %s28
      %s31 = sphi 0, %s29
      %s41 = sphi 0, %s43
      %s44 = sphi 0, %s41
      %s45 = sphi 0, %s44
      %s61 = sphi 0, %s45
      %s67 = sphi 0, %s69
      %s70 = sphi 0, %s67
      %s71 = sphi 0, %s70
      %s87 = sphi 0, %s71
      %s93 = sphi 0, %s95
      %s96 = sphi 0, %s93
      %s97 = sphi 0, %s96
      %s113 = sphi 0, %s97
      %s121 = sphi 0, %s123
      %s124 = sphi 0, %s121
      %s125 = sphi 0, %s124
      %s141 = sphi 0, %s125
      %s149 = sphi 0, %s151
      %s152 = sphi 0, %s149
      %s153 = sphi 0, %s152
      %s169 = sphi 0, %s153
      %s177 = sphi 0, %s179
      %s180 = sphi 0, %s177
      %s181 = sphi 0, %s180
      %s197 = sphi 0, %s181
      %s205 = sphi 0, %s207
      %s208 = sphi 0, %s205
      %s209 = sphi 0, %s208
      %s225 = sphi 0, %s209
      %s233 = sphi 0, %s235
      %s236 = sphi 0, %s233
      %s237 = sphi 0, %s236
      %s253 = sphi 0, %s237
    $region4: #{tpu_custom_call.1} parent=1 // loop_header_branch
      %22 = sbr.rel (%p20) target = $region8
    $region5: #{tpu_custom_call.1} parent=1 // loop_body
      %s24 = ssub.s32 %s19, 1
      %s25 = ssub.s32 %s19, 2
      %s32 = sadd.s32 1, %s27
      %p33 = scmp.ge.s32.totalorder %s32, 2
      %s34 = scalar_select %p33, 0, %s32
      %s35 = sadd.s32 1, %s26
      %s36 = scalar_select %p33, %s35, %s26
      %p37 = scmp.ge.s32.totalorder %s36, 2
      %s38 = scalar_select %p37, 0, %s36
      %s39 = ssub.s32 %s26, %s38
      %p40 = scmp.eq.s32.totalorder %s39, 0
      %s42 = sadd.s32 %s41, 1
      %s43 = scalar_select %p40, %s41, %s42
      %p46 = pneg %p40
      %p47 = scmp.eq.s32.totalorder %s19, 3
      %p48 = por %p46, %p47
      %p49 = scmp.ne.s32.totalorder %s41, %s44
      %p50 = scmp.eq.s32.totalorder %s19, 0
      %p51 = por %p49, %p50
      %p52 = scmp.ne.s32.totalorder %s41, %s44
      %p53 = scmp.eq.s32.totalorder %s24, 3
      %p54 = por %p52, %p53
      %p55 = scmp.ne.s32.totalorder %s44, %s45
      %p56 = scmp.eq.s32.totalorder %s24, 0
      %p57 = por %p55, %p56
      %p58 = scmp.ne.s32.totalorder %s44, %s45
      %p59 = scmp.eq.s32.totalorder %s25, 3
      %p60 = por %p58, %p59
      %p62 = scmp.ne.s32.totalorder %s45, %s61
      %p63 = scmp.eq.s32.totalorder %s25, 0
      %p64 = por %p62, %p63
      %s65 = ssub.s32 %s27, %s34
      %p66 = scmp.eq.s32.totalorder %s65, 0
      %s68 = sadd.s32 %s67, 1
      %s69 = scalar_select %p66, %s67, %s68
      %p72 = pneg %p66
      %p73 = scmp.eq.s32.totalorder %s19, 3
      %p74 = por %p72, %p73
      %p75 = scmp.ne.s32.totalorder %s67, %s70
      %p76 = scmp.eq.s32.totalorder %s19, 0
      %p77 = por %p75, %p76
      %p78 = scmp.ne.s32.totalorder %s67, %s70
      %p79 = scmp.eq.s32.totalorder %s24, 3
      %p80 = por %p78, %p79
      %p81 = scmp.ne.s32.totalorder %s70, %s71
      %p82 = scmp.eq.s32.totalorder %s24, 0
      %p83 = por %p81, %p82
      %p84 = scmp.ne.s32.totalorder %s70, %s71
      %p85 = scmp.eq.s32.totalorder %s25, 3
      %p86 = por %p84, %p85
      %p88 = scmp.ne.s32.totalorder %s71, %s87
      %p89 = scmp.eq.s32.totalorder %s25, 0
      %p90 = por %p88, %p89
      %s91 = ssub.s32 %s27, %s34
      %p92 = scmp.eq.s32.totalorder %s91, 0
      %s94 = sadd.s32 %s93, 1
      %s95 = scalar_select %p92, %s93, %s94
      %p98 = pneg %p92
      %p99 = scmp.eq.s32.totalorder %s19, 3
      %p100 = por %p98, %p99
      %p101 = scmp.ne.s32.totalorder %s93, %s96
      %p102 = scmp.eq.s32.totalorder %s19, 0
      %p103 = por %p101, %p102
      %p104 = scmp.ne.s32.totalorder %s93, %s96
      %p105 = scmp.eq.s32.totalorder %s24, 3
      %p106 = por %p104, %p105
      %p107 = scmp.ne.s32.totalorder %s96, %s97
      %p108 = scmp.eq.s32.totalorder %s24, 0
      %p109 = por %p107, %p108
      %p110 = scmp.ne.s32.totalorder %s96, %s97
      %p111 = scmp.eq.s32.totalorder %s25, 3
      %p112 = por %p110, %p111
      %p114 = scmp.ne.s32.totalorder %s97, %s113
      %p115 = scmp.eq.s32.totalorder %s25, 0
      %p116 = por %p114, %p115
      %s117 = ssub.s32 %s27, %s34
      %s118 = ssub.s32 %s26, %s38
      %s119 = sor.u32 %s117, %s118
      %p120 = scmp.eq.s32.totalorder %s119, 0
      %s122 = sadd.s32 %s121, 1
      %s123 = scalar_select %p120, %s121, %s122
      %p126 = pneg %p120
      %p127 = scmp.eq.s32.totalorder %s19, 3
      %p128 = por %p126, %p127
      %p129 = scmp.ne.s32.totalorder %s121, %s124
      %p130 = scmp.eq.s32.totalorder %s19, 0
      %p131 = por %p129, %p130
      %p132 = scmp.ne.s32.totalorder %s121, %s124
      %p133 = scmp.eq.s32.totalorder %s24, 3
      %p134 = por %p132, %p133
      %p135 = scmp.ne.s32.totalorder %s124, %s125
      %p136 = scmp.eq.s32.totalorder %s24, 0
      %p137 = por %p135, %p136
      %p138 = scmp.ne.s32.totalorder %s124, %s125
      %p139 = scmp.eq.s32.totalorder %s25, 3
      %p140 = por %p138, %p139
      %p142 = scmp.ne.s32.totalorder %s125, %s141
      %p143 = scmp.eq.s32.totalorder %s25, 0
      %p144 = por %p142, %p143
      %s145 = ssub.s32 %s27, %s34
      %s146 = ssub.s32 %s26, %s38
      %s147 = sor.u32 %s145, %s146
      %p148 = scmp.eq.s32.totalorder %s147, 0
      %s150 = sadd.s32 %s149, 1
      %s151 = scalar_select %p148, %s149, %s150
      %p154 = pneg %p148
      %p155 = scmp.eq.s32.totalorder %s19, 3
      %p156 = por %p154, %p155
      %p157 = scmp.ne.s32.totalorder %s149, %s152
      %p158 = scmp.eq.s32.totalorder %s19, 0
      %p159 = por %p157, %p158
      %p160 = scmp.ne.s32.totalorder %s149, %s152
      %p161 = scmp.eq.s32.totalorder %s24, 3
      %p162 = por %p160, %p161
      %p163 = scmp.ne.s32.totalorder %s152, %s153
      %p164 = scmp.eq.s32.totalorder %s24, 0
      %p165 = por %p163, %p164
      %p166 = scmp.ne.s32.totalorder %s152, %s153
      %p167 = scmp.eq.s32.totalorder %s25, 3
      %p168 = por %p166, %p167
      %p170 = scmp.ne.s32.totalorder %s153, %s169
      %p171 = scmp.eq.s32.totalorder %s25, 0
      %p172 = por %p170, %p171
      %s173 = ssub.s32 %s27, %s34
      %s174 = ssub.s32 %s26, %s38
      %s175 = sor.u32 %s173, %s174
      %p176 = scmp.eq.s32.totalorder %s175, 0
      %s178 = sadd.s32 %s177, 1
      %s179 = scalar_select %p176, %s177, %s178
      %p182 = pneg %p176
      %p183 = scmp.eq.s32.totalorder %s19, 3
      %p184 = por %p182, %p183
      %p185 = scmp.ne.s32.totalorder %s177, %s180
      %p186 = scmp.eq.s32.totalorder %s19, 0
      %p187 = por %p185, %p186
      %p188 = scmp.ne.s32.totalorder %s177, %s180
      %p189 = scmp.eq.s32.totalorder %s24, 3
      %p190 = por %p188, %p189
      %p191 = scmp.ne.s32.totalorder %s180, %s181
      %p192 = scmp.eq.s32.totalorder %s24, 0
      %p193 = por %p191, %p192
      %p194 = scmp.ne.s32.totalorder %s180, %s181
      %p195 = scmp.eq.s32.totalorder %s25, 3
      %p196 = por %p194, %p195
      %p198 = scmp.ne.s32.totalorder %s181, %s197
      %p199 = scmp.eq.s32.totalorder %s25, 0
      %p200 = por %p198, %p199
      %s201 = ssub.s32 %s27, %s34
      %s202 = ssub.s32 %s26, %s38
      %s203 = sor.u32 %s201, %s202
      %p204 = scmp.eq.s32.totalorder %s203, 0
      %s206 = sadd.s32 %s205, 1
      %s207 = scalar_select %p204, %s205, %s206
      %p210 = pneg %p204
      %p211 = scmp.eq.s32.totalorder %s19, 3
      %p212 = por %p210, %p211
      %p213 = scmp.ne.s32.totalorder %s205, %s208
      %p214 = scmp.eq.s32.totalorder %s19, 0
      %p215 = por %p213, %p214
      %p216 = scmp.ne.s32.totalorder %s205, %s208
      %p217 = scmp.eq.s32.totalorder %s24, 3
      %p218 = por %p216, %p217
      %p219 = scmp.ne.s32.totalorder %s208, %s209
      %p220 = scmp.eq.s32.totalorder %s24, 0
      %p221 = por %p219, %p220
      %p222 = scmp.ne.s32.totalorder %s208, %s209
      %p223 = scmp.eq.s32.totalorder %s25, 3
      %p224 = por %p222, %p223
      %p226 = scmp.ne.s32.totalorder %s209, %s225
      %p227 = scmp.eq.s32.totalorder %s25, 0
      %p228 = por %p226, %p227
      %s229 = ssub.s32 %s26, %s38
      %s230 = ssub.s32 %s27, %s34
      %s231 = sor.u32 %s229, %s230
      %p232 = scmp.eq.s32.totalorder %s231, 0
      %s234 = sadd.s32 %s233, 1
      %s235 = scalar_select %p232, %s233, %s234
      %p238 = pneg %p232
      %p239 = scmp.eq.s32.totalorder %s19, 3
      %p240 = por %p238, %p239
      %p241 = scmp.ne.s32.totalorder %s233, %s236
      %p242 = scmp.eq.s32.totalorder %s19, 0
      %p243 = por %p241, %p242
      %p244 = scmp.ne.s32.totalorder %s233, %s236
      %p245 = scmp.eq.s32.totalorder %s24, 3
      %p246 = por %p244, %p245
      %p247 = scmp.ne.s32.totalorder %s236, %s237
      %p248 = scmp.eq.s32.totalorder %s24, 0
      %p249 = por %p247, %p248
      %p250 = scmp.ne.s32.totalorder %s236, %s237
      %p251 = scmp.eq.s32.totalorder %s25, 3
      %p252 = por %p250, %p251
      %p254 = scmp.ne.s32.totalorder %s237, %s253
      %p255 = scmp.eq.s32.totalorder %s25, 0
      %p256 = por %p254, %p255
      %p257 = scmp.le.s32.totalorder 1, %s19
      %p258 = scmp.lt.s32.totalorder %s19, 5
      %p259 = pnand %p257, %p258
      %p260 = pneg %p259
      // Predicated region
      $region9: #{tpu_custom_call.1} parent=5 // pred_check
        _
      $region10: #{tpu_custom_call.1} parent=5 // pred_check_branch
        %262 = sbr.rel (%p259) target = $region12
      $region11: #{tpu_custom_call.1} parent=5 // pred_region
        %s263 = ssub.s32 %s19, 1
      $region12: #{tpu_custom_call.1} parent=5 // pred_fallthru
        _
      %p264 = scmp.lt.s32.totalorder %s19, 4
      // Predicated region
      $region13: #{tpu_custom_call.1} parent=5 // pred_check
        %p265 = pneg %p264
      $region14: #{tpu_custom_call.1} parent=5 // pred_check_branch
        %267 = sbr.rel (%p265) target = $region16
      $region15: #{tpu_custom_call.1} parent=5 // pred_region
        // Predicated region
        $region17: #{tpu_custom_call.1} parent=15 // pred_check
          %p268 = pneg %p51
        $region18: #{tpu_custom_call.1} parent=15 // pred_check_branch
          %270 = sbr.rel (%p268) target = $region20
        $region19: #{tpu_custom_call.1} parent=15 // pred_region
          %s271 = sand.u32 %s41, 1
          %s272 = sand.u32 %s41, 1
          %s273 = smul.addr %s272, 64
          %s274 = scalar_lea.vmem [#allocation2], %s273
          %s275 = smul.u32 4, %s26
          %s276 = smul.addr %s275, 8
          %s277 = scalar_lea.vmem %s0, %s276
          // Predicated region
          $region21: #{tpu_custom_call.1} parent=19 // pred_check
            _
          $region22: #{tpu_custom_call.1} parent=19 // pred_check_branch
            %279 = sbr.rel (0) target = $region24
          $region23: #{tpu_custom_call.1} parent=19 // pred_region
            // Predicated region
            $region25: #{tpu_custom_call.1} parent=23 // pred_check
              _
            $region26: #{tpu_custom_call.1} parent=23 // pred_check_branch
              %281 = sbr.rel (0) target = $region28
            $region27: #{tpu_custom_call.1} parent=23 // pred_region
              loop: start=0, step=1, limit=1
              $region29: #{tpu_custom_call.1} parent=27 // loop_pre_header
                _
              $region30: #{tpu_custom_call.1} parent=27 // loop_header
                %s283 = sphi 0, %s287
                %p284 = scmp.ge.s32.totalorder %s283, 1
                %s288 = sphi %s277, %s277
                %s289 = sphi %s274, %s274
              $region31: #{tpu_custom_call.1} parent=27 // loop_header_branch
                %286 = sbr.rel (%p284) target = $region35
              $region32: #{tpu_custom_call.1} parent=27 // loop_body
                %v290 = vld [vmem:[%s288] sm:$0xff]
                %291 = vst [vmem:[%s289] sm:$0xff] %v290
                %v292 = vld [vmem:[%s288 + $0x8] sm:$0xff]
                %293 = vst [vmem:[%s289 + $0x8] sm:$0xff] %v292
                %v294 = vld [vmem:[%s288 + $0x10] sm:$0xff]
                %295 = vst [vmem:[%s289 + $0x10] sm:$0xff] %v294
                %v296 = vld [vmem:[%s288 + $0x18] sm:$0xff]
                %297 = vst [vmem:[%s289 + $0x18] sm:$0xff] %v296
                %v298 = vld [vmem:[%s288 + $0x40] sm:$0xff]
                %299 = vst [vmem:[%s289 + $0x20] sm:$0xff] %v298
                %v300 = vld [vmem:[%s288 + $0x48] sm:$0xff]
                %301 = vst [vmem:[%s289 + $0x28] sm:$0xff] %v300
                %v302 = vld [vmem:[%s288 + $0x50] sm:$0xff]
                %303 = vst [vmem:[%s289 + $0x30] sm:$0xff] %v302
                %v304 = vld [vmem:[%s288 + $0x58] sm:$0xff]
                %305 = vst [vmem:[%s289 + $0x38] sm:$0xff] %v304
              $region33: #{tpu_custom_call.1} parent=27 // loop_footer
                %s287 = sadd.s32 1, %s283
              $region34: #{tpu_custom_call.1} parent=27 // loop_footer_branch
                %282 = sbr.rel target = $region30
              $region35: #{tpu_custom_call.1} parent=27 // loop_exit
                _
            $region28: #{tpu_custom_call.1} parent=23 // pred_fallthru
              _
            // Predicated region
            $region36: #{tpu_custom_call.1} parent=23 // pred_check
              _
            $region37: #{tpu_custom_call.1} parent=23 // pred_check_branch
              %307 = sbr.rel target = $region39
            $region38: #{tpu_custom_call.1} parent=23 // pred_region
              _
            $region39: #{tpu_custom_call.1} parent=23 // pred_fallthru
              _
          $region24: #{tpu_custom_call.1} parent=19 // pred_fallthru
            _
          %308 = vnop
        $region20: #{tpu_custom_call.1} parent=15 // pred_fallthru
          _
        // Predicated region
        $region40: #{tpu_custom_call.1} parent=15 // pred_check
          %p309 = pneg %p77
        $region41: #{tpu_custom_call.1} parent=15 // pred_check_branch
          %311 = sbr.rel (%p309) target = $region43
        $region42: #{tpu_custom_call.1} parent=15 // pred_region
          %s312 = smul.u32 2, %s27
          %p313 = scmp.lt.s32.totalorder %s312, 3
          %s314 = scalar_select %p313, %s312, 3
          %s315 = smul.addr %s314, 8
          %s316 = scalar_lea.vmem %s1, %s315
          %s317 = smul.u32 2, %s27
        $region43: #{tpu_custom_call.1} parent=15 // pred_fallthru
          _
        // Predicated region
        $region44: #{tpu_custom_call.1} parent=15 // pred_check
          %p318 = pneg %p103
        $region45: #{tpu_custom_call.1} parent=15 // pred_check_branch
          %320 = sbr.rel (%p318) target = $region47
        $region46: #{tpu_custom_call.1} parent=15 // pred_region
          %s321 = smul.u32 2, %s27
          %p322 = scmp.lt.s32.totalorder %s321, 3
          %s323 = scalar_select %p322, %s321, 3
          %s324 = smul.addr %s323, 8
          %s325 = scalar_lea.vmem %s2, %s324
          %s326 = smul.u32 2, %s27
        $region47: #{tpu_custom_call.1} parent=15 // pred_fallthru
          _
        // Predicated region
        $region48: #{tpu_custom_call.1} parent=15 // pred_check
          %p327 = pneg %p131
        $region49: #{tpu_custom_call.1} parent=15 // pred_check_branch
          %329 = sbr.rel (%p327) target = $region51
        $region50: #{tpu_custom_call.1} parent=15 // pred_region
          %s330 = sand.u32 %s121, 1
          %s331 = scalar_lea.sflag [#allocation4], %s330
          %s332 = sand.u32 %s121, 1
          %s333 = smul.addr %s332, 8
          %s334 = scalar_lea.vmem [#allocation3], %s333
          %s335 = smul.u32 2, %s27
          %s336 = smul.u32 4, %s26
          %s338 = ssub.s32 128, 128
          %339 = vsyncadd %s331, %s338
          %s340 = smul.addr %s335, 8
          %s341 = sadd.s32 %s336, %s340
          %s342 = smul.addr %s341, 16
          %s343 = scalar_lea.hbm %s3, %s342
          %s344 = sshll.u32 %s334, 4
          %s345 = int_to_ptr.vmem [resolvable:$true] %s344
          %350 = dma.hbm_to_vmem [thread:$0]  %s343, 128, %s345, %s331, 128, 64, 4
        $region51: #{tpu_custom_call.1} parent=15 // pred_fallthru
          _
        // Predicated region
        $region52: #{tpu_custom_call.1} parent=15 // pred_check
          %p351 = pneg %p159
        $region53: #{tpu_custom_call.1} parent=15 // pred_check_branch
          %353 = sbr.rel (%p351) target = $region55
        $region54: #{tpu_custom_call.1} parent=15 // pred_region
          %s354 = sand.u32 %s149, 1
          %s355 = sand.u32 %s149, 1
          %s356 = smul.addr %s355, 64
          %s357 = scalar_lea.vmem [#allocation6], %s356
          %s358 = smul.u32 2, %s27
          %s359 = smul.u32 4, %s26
          %s360 = smul.addr %s358, 8
          %s361 = sadd.s32 %s359, %s360
          %s362 = smul.addr %s361, 8
          %s363 = scalar_lea.vmem %s4, %s362
          // Predicated region
          $region56: #{tpu_custom_call.1} parent=54 // pred_check
            _
          $region57: #{tpu_custom_call.1} parent=54 // pred_check_branch
            %365 = sbr.rel (0) target = $region59
          $region58: #{tpu_custom_call.1} parent=54 // pred_region
            // Predicated region
            $region60: #{tpu_custom_call.1} parent=58 // pred_check
              _
            $region61: #{tpu_custom_call.1} parent=58 // pred_check_branch
              %367 = sbr.rel (0) target = $region63
            $region62: #{tpu_custom_call.1} parent=58 // pred_region
              loop: start=0, step=1, limit=1
              $region64: #{tpu_custom_call.1} parent=62 // loop_pre_header
                _
              $region65: #{tpu_custom_call.1} parent=62 // loop_header
                %s369 = sphi 0, %s373
                %p370 = scmp.ge.s32.totalorder %s369, 1
                %s374 = sphi %s363, %s363
                %s375 = sphi %s357, %s357
              $region66: #{tpu_custom_call.1} parent=62 // loop_header_branch
                %372 = sbr.rel (%p370) target = $region70
              $region67: #{tpu_custom_call.1} parent=62 // loop_body
                %v376 = vld [vmem:[%s374] sm:$0xff]
                %377 = vst [vmem:[%s375] sm:$0xff] %v376
                %v378 = vld [vmem:[%s374 + $0x8] sm:$0xff]
                %379 = vst [vmem:[%s375 + $0x8] sm:$0xff] %v378
                %v380 = vld [vmem:[%s374 + $0x10] sm:$0xff]
                %381 = vst [vmem:[%s375 + $0x10] sm:$0xff] %v380
                %v382 = vld [vmem:[%s374 + $0x18] sm:$0xff]
                %383 = vst [vmem:[%s375 + $0x18] sm:$0xff] %v382
                %v384 = vld [vmem:[%s374 + $0x40] sm:$0xff]
                %385 = vst [vmem:[%s375 + $0x20] sm:$0xff] %v384
                %v386 = vld [vmem:[%s374 + $0x48] sm:$0xff]
                %387 = vst [vmem:[%s375 + $0x28] sm:$0xff] %v386
                %v388 = vld [vmem:[%s374 + $0x50] sm:$0xff]
                %389 = vst [vmem:[%s375 + $0x30] sm:$0xff] %v388
                %v390 = vld [vmem:[%s374 + $0x58] sm:$0xff]
                %391 = vst [vmem:[%s375 + $0x38] sm:$0xff] %v390
              $region68: #{tpu_custom_call.1} parent=62 // loop_footer
                %s373 = sadd.s32 1, %s369
              $region69: #{tpu_custom_call.1} parent=62 // loop_footer_branch
                %368 = sbr.rel target = $region65
              $region70: #{tpu_custom_call.1} parent=62 // loop_exit
                _
            $region63: #{tpu_custom_call.1} parent=58 // pred_fallthru
              _
            // Predicated region
            $region71: #{tpu_custom_call.1} parent=58 // pred_check
              _
            $region72: #{tpu_custom_call.1} parent=58 // pred_check_branch
              %393 = sbr.rel target = $region74
            $region73: #{tpu_custom_call.1} parent=58 // pred_region
              _
            $region74: #{tpu_custom_call.1} parent=58 // pred_fallthru
              _
          $region59: #{tpu_custom_call.1} parent=54 // pred_fallthru
            _
          %394 = vnop
        $region55: #{tpu_custom_call.1} parent=15 // pred_fallthru
          _
        // Predicated region
        $region75: #{tpu_custom_call.1} parent=15 // pred_check
          %p395 = pneg %p187
        $region76: #{tpu_custom_call.1} parent=15 // pred_check_branch
          %397 = sbr.rel (%p395) target = $region78
        $region77: #{tpu_custom_call.1} parent=15 // pred_region
          %s398 = sand.u32 %s177, 1
          %s399 = sand.u32 %s177, 1
          %s400 = smul.addr %s399, 64
          %s401 = scalar_lea.vmem [#allocation7], %s400
          %s402 = smul.u32 2, %s27
          %s403 = smul.u32 4, %s26
          %s404 = smul.addr %s402, 8
          %s405 = sadd.s32 %s403, %s404
          %s406 = smul.addr %s405, 8
          %s407 = scalar_lea.vmem %s5, %s406
          // Predicated region
          $region79: #{tpu_custom_call.1} parent=77 // pred_check
            _
          $region80: #{tpu_custom_call.1} parent=77 // pred_check_branch
            %409 = sbr.rel (0) target = $region82
          $region81: #{tpu_custom_call.1} parent=77 // pred_region
            // Predicated region
            $region83: #{tpu_custom_call.1} parent=81 // pred_check
              _
            $region84: #{tpu_custom_call.1} parent=81 // pred_check_branch
              %411 = sbr.rel (0) target = $region86
            $region85: #{tpu_custom_call.1} parent=81 // pred_region
              loop: start=0, step=1, limit=1
              $region87: #{tpu_custom_call.1} parent=85 // loop_pre_header
                _
              $region88: #{tpu_custom_call.1} parent=85 // loop_header
                %s413 = sphi 0, %s417
                %p414 = scmp.ge.s32.totalorder %s413, 1
                %s418 = sphi %s407, %s407
                %s419 = sphi %s401, %s401
              $region89: #{tpu_custom_call.1} parent=85 // loop_header_branch
                %416 = sbr.rel (%p414) target = $region93
              $region90: #{tpu_custom_call.1} parent=85 // loop_body
                %v420 = vld [vmem:[%s418] sm:$0xff]
                %421 = vst [vmem:[%s419] sm:$0xff] %v420
                %v422 = vld [vmem:[%s418 + $0x8] sm:$0xff]
                %423 = vst [vmem:[%s419 + $0x8] sm:$0xff] %v422
                %v424 = vld [vmem:[%s418 + $0x10] sm:$0xff]
                %425 = vst [vmem:[%s419 + $0x10] sm:$0xff] %v424
                %v426 = vld [vmem:[%s418 + $0x18] sm:$0xff]
                %427 = vst [vmem:[%s419 + $0x18] sm:$0xff] %v426
                %v428 = vld [vmem:[%s418 + $0x40] sm:$0xff]
                %429 = vst [vmem:[%s419 + $0x20] sm:$0xff] %v428
                %v430 = vld [vmem:[%s418 + $0x48] sm:$0xff]
                %431 = vst [vmem:[%s419 + $0x28] sm:$0xff] %v430
                %v432 = vld [vmem:[%s418 + $0x50] sm:$0xff]
                %433 = vst [vmem:[%s419 + $0x30] sm:$0xff] %v432
                %v434 = vld [vmem:[%s418 + $0x58] sm:$0xff]
                %435 = vst [vmem:[%s419 + $0x38] sm:$0xff] %v434
              $region91: #{tpu_custom_call.1} parent=85 // loop_footer
                %s417 = sadd.s32 1, %s413
              $region92: #{tpu_custom_call.1} parent=85 // loop_footer_branch
                %412 = sbr.rel target = $region88
              $region93: #{tpu_custom_call.1} parent=85 // loop_exit
                _
            $region86: #{tpu_custom_call.1} parent=81 // pred_fallthru
              _
            // Predicated region
            $region94: #{tpu_custom_call.1} parent=81 // pred_check
              _
            $region95: #{tpu_custom_call.1} parent=81 // pred_check_branch
              %437 = sbr.rel target = $region97
            $region96: #{tpu_custom_call.1} parent=81 // pred_region
              _
            $region97: #{tpu_custom_call.1} parent=81 // pred_fallthru
              _
          $region82: #{tpu_custom_call.1} parent=77 // pred_fallthru
            _
          %438 = vnop
        $region78: #{tpu_custom_call.1} parent=15 // pred_fallthru
          _
        // Predicated region
        $region98: #{tpu_custom_call.1} parent=15 // pred_check
          %p439 = pneg %p215
        $region99: #{tpu_custom_call.1} parent=15 // pred_check_branch
          %441 = sbr.rel (%p439) target = $region101
        $region100: #{tpu_custom_call.1} parent=15 // pred_region
          %s442 = sand.u32 %s205, 1
          %s443 = sand.u32 %s205, 1
          %s444 = smul.addr %s443, 16
          %s445 = scalar_lea.vmem [#allocation8], %s444
          %s446 = smul.u32 2, %s27
          %s447 = smul.u32 4, %s26
          %s448 = smul.addr %s446, 8
          %s449 = sadd.s32 %s447, %s448
          %s450 = smul.addr %s449, 2
          %s451 = scalar_lea.vmem %s6, %s450
          // Predicated region
          $region102: #{tpu_custom_call.1} parent=100 // pred_check
            _
          $region103: #{tpu_custom_call.1} parent=100 // pred_check_branch
            %453 = sbr.rel (0) target = $region105
          $region104: #{tpu_custom_call.1} parent=100 // pred_region
            // Predicated region
            $region106: #{tpu_custom_call.1} parent=104 // pred_check
              _
            $region107: #{tpu_custom_call.1} parent=104 // pred_check_branch
              %455 = sbr.rel (0) target = $region109
            $region108: #{tpu_custom_call.1} parent=104 // pred_region
              // Predicated region
              $region121: #{tpu_custom_call.1} parent=108 // pred_check
                _
              $region122: #{tpu_custom_call.1} parent=108 // pred_check_branch
                %472 = sbr.rel (0) target = $region124
              $region123: #{tpu_custom_call.1} parent=108 // pred_region
                loop: start=0, step=1, limit=1
                $region125: #{tpu_custom_call.1} parent=123 // loop_pre_header
                  _
                $region126: #{tpu_custom_call.1} parent=123 // loop_header
                  %s474 = sphi 0, %s478
                  %p475 = scmp.ge.s32.totalorder %s474, 1
                  %s479 = sphi %s451, %s451
                  %s480 = sphi %s445, %s445
                $region127: #{tpu_custom_call.1} parent=123 // loop_header_branch
                  %477 = sbr.rel (%p475) target = $region131
                $region128: #{tpu_custom_call.1} parent=123 // loop_body
                  %v481 = vld [vmem:[%s479] sm:$0xff]
                  %482 = vst [vmem:[%s480] sm:$0xff] %v481
                  %v483 = vld [vmem:[%s479 + $0x10] sm:$0xff]
                  %484 = vst [vmem:[%s480 + $0x8] sm:$0xff] %v483
                $region129: #{tpu_custom_call.1} parent=123 // loop_footer
                  %s478 = sadd.s32 1, %s474
                $region130: #{tpu_custom_call.1} parent=123 // loop_footer_branch
                  %473 = sbr.rel target = $region126
                $region131: #{tpu_custom_call.1} parent=123 // loop_exit
                  _
              $region124: #{tpu_custom_call.1} parent=108 // pred_fallthru
                _
              // Predicated region
              $region132: #{tpu_custom_call.1} parent=108 // pred_check
                _
              $region133: #{tpu_custom_call.1} parent=108 // pred_check_branch
                %486 = sbr.rel target = $region135
              $region134: #{tpu_custom_call.1} parent=108 // pred_region
                _
              $region135: #{tpu_custom_call.1} parent=108 // pred_fallthru
                _
            $region109: #{tpu_custom_call.1} parent=104 // pred_fallthru
              _
            // Predicated region
            $region110: #{tpu_custom_call.1} parent=104 // pred_check
              _
            $region111: #{tpu_custom_call.1} parent=104 // pred_check_branch
              %457 = sbr.rel target = $region113
            $region112: #{tpu_custom_call.1} parent=104 // pred_region
              loop: start=0, step=1, limit=1
              $region114: #{tpu_custom_call.1} parent=112 // loop_pre_header
                _
              $region115: #{tpu_custom_call.1} parent=112 // loop_header
                %s460 = sphi 0, %s464
                %p461 = scmp.ge.s32.totalorder %s460, 1
                %s465 = sphi %s451, %s451
                %s466 = sphi %s445, %s445
              $region116: #{tpu_custom_call.1} parent=112 // loop_header_branch
                %463 = sbr.rel (%p461) target = $region120
              $region117: #{tpu_custom_call.1} parent=112 // loop_body
                %v467 = vld [vmem:[%s465] sm:$0xff]
                %468 = vst [vmem:[%s466] sm:$0xff] %v467
                %v469 = vld [vmem:[%s465 + $0x10] sm:$0xff]
                %470 = vst [vmem:[%s466 + $0x8] sm:$0xff] %v469
              $region118: #{tpu_custom_call.1} parent=112 // loop_footer
                %s464 = sadd.s32 1, %s460
              $region119: #{tpu_custom_call.1} parent=112 // loop_footer_branch
                %459 = sbr.rel target = $region115
              $region120: #{tpu_custom_call.1} parent=112 // loop_exit
                _
            $region113: #{tpu_custom_call.1} parent=104 // pred_fallthru
              _
          $region105: #{tpu_custom_call.1} parent=100 // pred_fallthru
            _
          %487 = vnop
        $region101: #{tpu_custom_call.1} parent=15 // pred_fallthru
          _
      $region16: #{tpu_custom_call.1} parent=5 // pred_fallthru
        _
      %p488 = scmp.le.s32.totalorder 1, %s19
      %p489 = scmp.lt.s32.totalorder %s19, 5
      %p490 = pnand %p488, %p489
      %p491 = pneg %p490
      // Predicated region
      $region136: #{tpu_custom_call.1} parent=5 // pred_check
        _
      $region137: #{tpu_custom_call.1} parent=5 // pred_check_branch
        %493 = sbr.rel (%p490) target = $region139
      $region138: #{tpu_custom_call.1} parent=5 // pred_region
        %s494 = ssub.s32 %s19, 1
        %s495 = sand.u32 %s44, 1
        %s496 = sand.u32 %s44, 1
        %s497 = smul.addr %s496, 64
        %s498 = scalar_lea.vmem [#allocation2], %s497
        // Predicated region
        $region140: #{tpu_custom_call.1} parent=138 // pred_check
          %p499 = pneg %p57
        $region141: #{tpu_custom_call.1} parent=138 // pred_check_branch
          %501 = sbr.rel (%p499) target = $region143
        $region142: #{tpu_custom_call.1} parent=138 // pred_region
          _
        $region143: #{tpu_custom_call.1} parent=138 // pred_fallthru
          _
        %s502 = sand.u32 %s124, 1
        %s503 = scalar_lea.sflag [#allocation4], %s502
        %s504 = sand.u32 %s124, 1
        %s505 = smul.addr %s504, 8
        %s506 = scalar_lea.vmem [#allocation3], %s505
        // Predicated region
        $region144: #{tpu_custom_call.1} parent=138 // pred_check
          %p507 = pneg %p137
        $region145: #{tpu_custom_call.1} parent=138 // pred_check_branch
          %509 = sbr.rel (%p507) target = $region147
        $region146: #{tpu_custom_call.1} parent=138 // pred_region
          %510 = dma.done %s503, 128
        $region147: #{tpu_custom_call.1} parent=138 // pred_fallthru
          _
        %s511 = sand.u32 %s152, 1
        %s512 = sand.u32 %s152, 1
        %s513 = smul.addr %s512, 64
        %s514 = scalar_lea.vmem [#allocation6], %s513
        // Predicated region
        $region148: #{tpu_custom_call.1} parent=138 // pred_check
          %p515 = pneg %p165
        $region149: #{tpu_custom_call.1} parent=138 // pred_check_branch
          %517 = sbr.rel (%p515) target = $region151
        $region150: #{tpu_custom_call.1} parent=138 // pred_region
          _
        $region151: #{tpu_custom_call.1} parent=138 // pred_fallthru
          _
        %s518 = sand.u32 %s180, 1
        %s519 = sand.u32 %s180, 1
        %s520 = smul.addr %s519, 64
        %s521 = scalar_lea.vmem [#allocation7], %s520
        // Predicated region
        $region152: #{tpu_custom_call.1} parent=138 // pred_check
          %p522 = pneg %p193
        $region153: #{tpu_custom_call.1} parent=138 // pred_check_branch
          %524 = sbr.rel (%p522) target = $region155
        $region154: #{tpu_custom_call.1} parent=138 // pred_region
          _
        $region155: #{tpu_custom_call.1} parent=138 // pred_fallthru
          _
        %s525 = sand.u32 %s208, 1
        %s526 = sand.u32 %s208, 1
        %s527 = smul.addr %s526, 16
        %s528 = scalar_lea.vmem [#allocation8], %s527
        // Predicated region
        $region156: #{tpu_custom_call.1} parent=138 // pred_check
          %p529 = pneg %p221
        $region157: #{tpu_custom_call.1} parent=138 // pred_check_branch
          %531 = sbr.rel (%p529) target = $region159
        $region158: #{tpu_custom_call.1} parent=138 // pred_region
          _
        $region159: #{tpu_custom_call.1} parent=138 // pred_fallthru
          _
        %s532 = sand.u32 %s44, 1
        %s533 = sand.u32 %s44, 1
        %s534 = smul.addr %s533, 64
        %s535 = scalar_lea.vmem [#allocation2], %s534
        %p536 = pneg %p57
        %p537 = pneg %p54
        %s538 = smul.u32 2, %s29
        %p539 = scmp.lt.s32.totalorder %s538, 3
        %s540 = scalar_select %p539, %s538, 3
        %s541 = smul.addr %s540, 8
        %s542 = scalar_lea.vmem %s1, %s541
        %p543 = pneg %p83
        %p544 = pneg %p80
        %s545 = smul.u32 2, %s29
        %p546 = scmp.lt.s32.totalorder %s545, 3
        %s547 = scalar_select %p546, %s545, 3
        %s548 = smul.addr %s547, 8
        %s549 = scalar_lea.vmem %s2, %s548
        %p550 = pneg %p109
        %p551 = pneg %p106
        %s552 = sand.u32 %s124, 1
        %s553 = scalar_lea.sflag [#allocation4], %s552
        %s554 = sand.u32 %s124, 1
        %s555 = smul.addr %s554, 8
        %s556 = scalar_lea.vmem [#allocation3], %s555
        %p557 = pneg %p137
        %p558 = pneg %p134
        %s559 = sand.u32 %s152, 1
        %s560 = sand.u32 %s152, 1
        %s561 = smul.addr %s560, 64
        %s562 = scalar_lea.vmem [#allocation6], %s561
        %p563 = pneg %p165
        %p564 = pneg %p162
        %s565 = sand.u32 %s180, 1
        %s566 = sand.u32 %s180, 1
        %s567 = smul.addr %s566, 64
        %s568 = scalar_lea.vmem [#allocation7], %s567
        %p569 = pneg %p193
        %p570 = pneg %p190
        %s571 = sand.u32 %s208, 1
        %s572 = sand.u32 %s208, 1
        %s573 = smul.addr %s572, 16
        %s574 = scalar_lea.vmem [#allocation8], %s573
        %p575 = pneg %p221
        %p576 = pneg %p218
        %p577 = pneg %p249
        %p578 = pneg %p246
        %s579 = sand.u32 %s236, 1
        %s580 = scalar_lea.sflag [#allocation5], %s579
        %s581 = sand.u32 %s236, 1
        %s582 = smul.addr %s581, 8
        %s583 = scalar_lea.vmem [#allocation9], %s582
        %s584 = smul.u32 4, %s28
        %s585 = smul.u32 2, %s29
        %p586 = scmp.lt.s32.totalorder %s585, 3
        %s587 = scalar_select %p586, %s585, 3
        %s588 = smul.addr %s587, 8
        %s589 = scalar_lea.vmem %s1, %s588
        %s590 = smul.u32 2, %s29
        %s591 = smul.u32 2, %s29
        %p592 = scmp.lt.s32.totalorder %s591, 3
        %s593 = scalar_select %p592, %s591, 3
        %s594 = smul.addr %s593, 8
        %s595 = scalar_lea.vmem %s2, %s594
        %s596 = smul.u32 2, %s29
        %s597 = smul.u32 2, %s29
        %s598 = smul.u32 4, %s28
        %s599 = smul.u32 2, %s29
        %s600 = smul.u32 4, %s28
        %s601 = smul.u32 2, %s29
        %s602 = smul.u32 4, %s28
        %s603 = smul.u32 2, %s29
        %s604 = smul.u32 4, %s28
        %v605 = vld [vmem:[%s498] sm:$0xff]
        %v606 = vld [vmem:[%s498 + $0x8] sm:$0xff]
        %v607 = vld [vmem:[%s498 + $0x10] sm:$0xff]
        %v608 = vld [vmem:[%s498 + $0x18] sm:$0xff]
        %v609 = vld [vmem:[%s498 + $0x20] sm:$0x7]
        %v610 = vld [vmem:[%s498 + $0x28] sm:$0x7]
        %v611 = vld [vmem:[%s498 + $0x30] sm:$0x7]
        %v612 = vld [vmem:[%s498 + $0x38] sm:$0x7]
        %v613 = vld [vmem:[%s589] sm:$0xff]
        %v614 = vld [vmem:[%s589 + $0x8] sm:$0xff]
        %v615 = vld [vmem:[%s595] sm:$0xff]
        %v616 = vld [vmem:[%s595 + $0x8] sm:$0xff]
        %v617 = vld [vmem:[%s506] sm:$0xf]
        %v618 = vld [vmem:[%s506 + $0x4] sm:$0xf]
        %v619 = vld [vmem:[%s514] sm:$0x3f]
        %v620 = vld [vmem:[%s514 + $0x8] sm:$0x3f]
        %v621 = vld [vmem:[%s514 + $0x10] sm:$0x3f]
        %v622 = vld [vmem:[%s514 + $0x18] sm:$0x3f]
        %v623 = vld [vmem:[%s514 + $0x20] sm:$0x3f]
        %v624 = vld [vmem:[%s514 + $0x28] sm:$0x3f]
        %v625 = vld [vmem:[%s514 + $0x30] sm:$0x3f]
        %v626 = vld [vmem:[%s514 + $0x38] sm:$0x3f]
        %v627 = vld [vmem:[%s521] sm:$0xff]
        %v628 = vld [vmem:[%s521 + $0x8] sm:$0xff]
        %v629 = vld [vmem:[%s521 + $0x10] sm:$0xff]
        %v630 = vld [vmem:[%s521 + $0x18] sm:$0xff]
        %v631 = vld [vmem:[%s521 + $0x20] sm:$0xff]
        %v632 = vld [vmem:[%s521 + $0x28] sm:$0xff]
        %v633 = vld [vmem:[%s521 + $0x30] sm:$0xff]
        %v634 = vld [vmem:[%s521 + $0x38] sm:$0xff]
        %v635 = vld [vmem:[%s528] sm:$0xff]
        %v636 = vld [vmem:[%s528 + $0x8] sm:$0xff]
        %vm637 = vcmp.gt.f32.partialorder %v613, 0.5
        %vm638 = vcmp.gt.f32.partialorder %v614, 0.5
        %v639 = vlaneseq
        %v640 = vshrl.u32 %v639, 7
        %v641 = vsub.s32 3, %v640
        %v642 = vrot.slane %v605, %v641
        %v643 = vlaneseq
        %v644 = vshrl.u32 %v643, 7
        %v645 = vsub.s32 3, %v644
        %v646 = vrot.slane %v606, %v645
        %v647 = vlaneseq
        %v648 = vshrl.u32 %v647, 7
        %v649 = vsub.s32 3, %v648
        %v650 = vrot.slane %v607, %v649
        %v651 = vlaneseq
        %v652 = vshrl.u32 %v651, 7
        %v653 = vsub.s32 3, %v652
        %v654 = vrot.slane %v608, %v653
        %656 = vset.pattern.permute.xlu0 1
        %657 = vperm.xlu0 %656, %v613
        %v658 = vpop.permute.xlu0 %657
        %661 = vset.pattern.permute.xlu0 1
        %662 = vperm.xlu0 %661, %v614
        %v663 = vpop.permute.xlu0 %662
        %v665 = vmin.f32 %v642, %v658
        %v666 = vmin.f32 %v646, %v658
        %v667 = vmin.f32 %v650, %v658
        %v668 = vmin.f32 %v654, %v658
        %v669 = vmin.f32 %v642, %v663
        %v670 = vmin.f32 %v646, %v663
        %v671 = vmin.f32 %v650, %v663
        %v672 = vmin.f32 %v654, %v663
        %v673 = vlaneseq
        %v674 = vshrl.u32 %v673, 7
        %v675 = vsub.s32 2, %v674
        %v676 = vrot.slane %v605, %v675
        %v677 = vlaneseq
        %v678 = vshrl.u32 %v677, 7
        %v679 = vsub.s32 2, %v678
        %v680 = vrot.slane %v606, %v679
        %v681 = vlaneseq
        %v682 = vshrl.u32 %v681, 7
        %v683 = vsub.s32 2, %v682
        %v684 = vrot.slane %v607, %v683
        %v685 = vlaneseq
        %v686 = vshrl.u32 %v685, 7
        %v687 = vsub.s32 2, %v686
        %v688 = vrot.slane %v608, %v687
        %689 = vset.pattern.permute.xlu0 0
        %690 = vperm.xlu0 %689, %v613
        %v691 = vpop.permute.xlu0 %690
        %693 = vset.pattern.permute.xlu0 0
        %694 = vperm.xlu0 %693, %v614
        %v695 = vpop.permute.xlu0 %694
        %v697 = vmax.f32 %v676, %v691
        %v698 = vmax.f32 %v680, %v691
        %v699 = vmax.f32 %v684, %v691
        %v700 = vmax.f32 %v688, %v691
        %v701 = vmax.f32 %v676, %v695
        %v702 = vmax.f32 %v680, %v695
        %v703 = vmax.f32 %v684, %v695
        %v704 = vmax.f32 %v688, %v695
        %v705 = vsub.f32 %v665, %v697
        %v706 = vsub.f32 %v666, %v698
        %v707 = vsub.f32 %v667, %v699
        %v708 = vsub.f32 %v668, %v700
        %v709 = vsub.f32 %v669, %v701
        %v710 = vsub.f32 %v670, %v702
        %v711 = vsub.f32 %v671, %v703
        %v712 = vsub.f32 %v672, %v704
        %v713 = vmax.f32 %v705, 0.0
        %v714 = vmax.f32 %v706, 0.0
        %v715 = vmax.f32 %v707, 0.0
        %v716 = vmax.f32 %v708, 0.0
        %v717 = vmax.f32 %v709, 0.0
        %v718 = vmax.f32 %v710, 0.0
        %v719 = vmax.f32 %v711, 0.0
        %v720 = vmax.f32 %v712, 0.0
        %v721 = vlaneseq
        %v722 = vshrl.u32 %v721, 7
        %v723 = vsub.s32 5, %v722
        %v724 = vrot.slane %v605, %v723
        %v725 = vlaneseq
        %v726 = vshrl.u32 %v725, 7
        %v727 = vsub.s32 5, %v726
        %v728 = vrot.slane %v606, %v727
        %v729 = vlaneseq
        %v730 = vshrl.u32 %v729, 7
        %v731 = vsub.s32 5, %v730
        %v732 = vrot.slane %v607, %v731
        %v733 = vlaneseq
        %v734 = vshrl.u32 %v733, 7
        %v735 = vsub.s32 5, %v734
        %v736 = vrot.slane %v608, %v735
        %737 = vset.pattern.permute.xlu0 3
        %738 = vperm.xlu0 %737, %v613
        %v739 = vpop.permute.xlu0 %738
        %741 = vset.pattern.permute.xlu0 3
        %742 = vperm.xlu0 %741, %v614
        %v743 = vpop.permute.xlu0 %742
        %v745 = vmin.f32 %v724, %v739
        %v746 = vmin.f32 %v728, %v739
        %v747 = vmin.f32 %v732, %v739
        %v748 = vmin.f32 %v736, %v739
        %v749 = vmin.f32 %v724, %v743
        %v750 = vmin.f32 %v728, %v743
        %v751 = vmin.f32 %v732, %v743
        %v752 = vmin.f32 %v736, %v743
        %v753 = vlaneseq
        %v754 = vshrl.u32 %v753, 7
        %v755 = vsub.s32 4, %v754
        %v756 = vrot.slane %v605, %v755
        %v757 = vlaneseq
        %v758 = vshrl.u32 %v757, 7
        %v759 = vsub.s32 4, %v758
        %v760 = vrot.slane %v606, %v759
        %v761 = vlaneseq
        %v762 = vshrl.u32 %v761, 7
        %v763 = vsub.s32 4, %v762
        %v764 = vrot.slane %v607, %v763
        %v765 = vlaneseq
        %v766 = vshrl.u32 %v765, 7
        %v767 = vsub.s32 4, %v766
        %v768 = vrot.slane %v608, %v767
        %769 = vset.pattern.permute.xlu0 2
        %770 = vperm.xlu0 %769, %v613
        %v771 = vpop.permute.xlu0 %770
        %773 = vset.pattern.permute.xlu0 2
        %774 = vperm.xlu0 %773, %v614
        %v775 = vpop.permute.xlu0 %774
        %v777 = vmax.f32 %v756, %v771
        %v778 = vmax.f32 %v760, %v771
        %v779 = vmax.f32 %v764, %v771
        %v780 = vmax.f32 %v768, %v771
        %v781 = vmax.f32 %v756, %v775
        %v782 = vmax.f32 %v760, %v775
        %v783 = vmax.f32 %v764, %v775
        %v784 = vmax.f32 %v768, %v775
        %v785 = vsub.f32 %v745, %v777
        %v786 = vsub.f32 %v746, %v778
        %v787 = vsub.f32 %v747, %v779
        %v788 = vsub.f32 %v748, %v780
        %v789 = vsub.f32 %v749, %v781
        %v790 = vsub.f32 %v750, %v782
        %v791 = vsub.f32 %v751, %v783
        %v792 = vsub.f32 %v752, %v784
        %v793 = vmax.f32 %v785, 0.0
        %v794 = vmax.f32 %v786, 0.0
        %v795 = vmax.f32 %v787, 0.0
        %v796 = vmax.f32 %v788, 0.0
        %v797 = vmax.f32 %v789, 0.0
        %v798 = vmax.f32 %v790, 0.0
        %v799 = vmax.f32 %v791, 0.0
        %v800 = vmax.f32 %v792, 0.0
        %v801 = vmul.f32 %v713, %v793
        %v802 = vmul.f32 %v714, %v794
        %v803 = vmul.f32 %v715, %v795
        %v804 = vmul.f32 %v716, %v796
        %v805 = vmul.f32 %v717, %v797
        %v806 = vmul.f32 %v718, %v798
        %v807 = vmul.f32 %v719, %v799
        %v808 = vmul.f32 %v720, %v800
        %v809 = vlaneseq
        %v810 = vshrl.u32 %v809, 7
        %v811 = vsub.s32 6, %v810
        %v812 = vrot.slane %v605, %v811
        %v813 = vlaneseq
        %v814 = vshrl.u32 %v813, 7
        %v815 = vsub.s32 6, %v814
        %v816 = vrot.slane %v606, %v815
        %v817 = vlaneseq
        %v818 = vshrl.u32 %v817, 7
        %v819 = vsub.s32 6, %v818
        %v820 = vrot.slane %v607, %v819
        %v821 = vlaneseq
        %v822 = vshrl.u32 %v821, 7
        %v823 = vsub.s32 6, %v822
        %v824 = vrot.slane %v608, %v823
        %825 = vset.pattern.permute.xlu0 4
        %826 = vperm.xlu0 %825, %v613
        %v827 = vpop.permute.xlu0 %826
        %829 = vset.pattern.permute.xlu0 4
        %830 = vperm.xlu0 %829, %v614
        %v831 = vpop.permute.xlu0 %830
        %v833 = vadd.f32 %v812, %v827
        %v834 = vadd.f32 %v816, %v827
        %v835 = vadd.f32 %v820, %v827
        %v836 = vadd.f32 %v824, %v827
        %v837 = vadd.f32 %v812, %v831
        %v838 = vadd.f32 %v816, %v831
        %v839 = vadd.f32 %v820, %v831
        %v840 = vadd.f32 %v824, %v831
        %v841 = vsub.f32 %v833, %v801
        %v842 = vsub.f32 %v834, %v802
        %v843 = vsub.f32 %v835, %v803
        %v844 = vsub.f32 %v836, %v804
        %v845 = vsub.f32 %v837, %v805
        %v846 = vsub.f32 %v838, %v806
        %v847 = vsub.f32 %v839, %v807
        %v848 = vsub.f32 %v840, %v808
        %v849 = vadd.f32 %v841, 1e-06
        %v850 = vadd.f32 %v842, 1e-06
        %v851 = vadd.f32 %v843, 1e-06
        %v852 = vadd.f32 %v844, 1e-06
        %v853 = vadd.f32 %v845, 1e-06
        %v854 = vadd.f32 %v846, 1e-06
        %v855 = vadd.f32 %v847, 1e-06
        %v856 = vadd.f32 %v848, 1e-06
        %v857 = vrcp.pop %v849
        %v858 = vrcp.pop %v850
        %v859 = vrcp.pop %v851
        %v860 = vrcp.pop %v852
        %v861 = vrcp.pop %v853
        %v862 = vrcp.pop %v854
        %v863 = vrcp.pop %v855
        %v864 = vrcp.pop %v856
        %v865 = vmul.f32 %v801, %v857
        %v866 = vmul.f32 %v802, %v858
        %v867 = vmul.f32 %v803, %v859
        %v868 = vmul.f32 %v804, %v860
        %v869 = vmul.f32 %v805, %v861
        %v870 = vmul.f32 %v806, %v862
        %v871 = vmul.f32 %v807, %v863
        %v872 = vmul.f32 %v808, %v864
        %v873 = vsel %vm637, 1, 0
        %v874 = vsel %vm638, 1, 0
        %875 = vset.pattern.permute.xlu0 5
        %876 = vperm.xlu0 %875, %v873
        %v877 = vpop.permute.xlu0 %876
        %878 = vset.pattern.permute.xlu0 5
        %879 = vperm.xlu0 %878, %v874
        %v880 = vpop.permute.xlu0 %879
        %vm881 = vcmp.eq.s32.totalorder %v877, 1
        %vm882 = vcmp.eq.s32.totalorder %v880, 1
        %v883 = vsel %vm881, %v865, -1.0
        %v884 = vsel %vm881, %v866, -1.0
        %v885 = vsel %vm881, %v867, -1.0
        %v886 = vsel %vm881, %v868, -1.0
        %v887 = vsel %vm882, %v869, -1.0
        %v888 = vsel %vm882, %v870, -1.0
        %v889 = vsel %vm882, %v871, -1.0
        %v890 = vsel %vm882, %v872, -1.0
        %v891 = vrot.slane %v883, 4
        %v892 = vmax.f32 %v883, %v891
        %v893 = vrot.slane %v892, 2
        %v894 = vmax.f32 %v892, %v893
        %v895 = vrot.slane %v894, 1
        %v896 = vmax.f32 %v894, %v895
        %v897 = vrot.slane %v884, 4
        %v898 = vmax.f32 %v884, %v897
        %v899 = vrot.slane %v898, 2
        %v900 = vmax.f32 %v898, %v899
        %v901 = vrot.slane %v900, 1
        %v902 = vmax.f32 %v900, %v901
        %v903 = vrot.slane %v885, 4
        %v904 = vmax.f32 %v885, %v903
        %v905 = vrot.slane %v904, 2
        %v906 = vmax.f32 %v904, %v905
        %v907 = vrot.slane %v906, 1
        %v908 = vmax.f32 %v906, %v907
        %v909 = vrot.slane %v886, 4
        %v910 = vmax.f32 %v886, %v909
        %v911 = vrot.slane %v910, 2
        %v912 = vmax.f32 %v910, %v911
        %v913 = vrot.slane %v912, 1
        %v914 = vmax.f32 %v912, %v913
        %v915 = vrot.slane %v887, 4
        %v916 = vmax.f32 %v887, %v915
        %v917 = vrot.slane %v916, 2
        %v918 = vmax.f32 %v916, %v917
        %v919 = vrot.slane %v918, 1
        %v920 = vmax.f32 %v918, %v919
        %v921 = vrot.slane %v888, 4
        %v922 = vmax.f32 %v888, %v921
        %v923 = vrot.slane %v922, 2
        %v924 = vmax.f32 %v922, %v923
        %v925 = vrot.slane %v924, 1
        %v926 = vmax.f32 %v924, %v925
        %v927 = vrot.slane %v889, 4
        %v928 = vmax.f32 %v889, %v927
        %v929 = vrot.slane %v928, 2
        %v930 = vmax.f32 %v928, %v929
        %v931 = vrot.slane %v930, 1
        %v932 = vmax.f32 %v930, %v931
        %v933 = vrot.slane %v890, 4
        %v934 = vmax.f32 %v890, %v933
        %v935 = vrot.slane %v934, 2
        %v936 = vmax.f32 %v934, %v935
        %v937 = vrot.slane %v936, 1
        %v938 = vmax.f32 %v936, %v937
        %v939 = vlaneseq
        %v940 = vshrl.u32 %v939, 7
        %vm941 = vcmp.eq.f32.partialorder %v883, %v896
        %vm942 = vcmp.eq.f32.partialorder %v884, %v902
        %vm943 = vcmp.eq.f32.partialorder %v885, %v908
        %vm944 = vcmp.eq.f32.partialorder %v886, %v914
        %vm945 = vcmp.eq.f32.partialorder %v887, %v920
        %vm946 = vcmp.eq.f32.partialorder %v888, %v926
        %vm947 = vcmp.eq.f32.partialorder %v889, %v932
        %vm948 = vcmp.eq.f32.partialorder %v890, %v938
        %v949 = vsel %vm941, %v940, 8
        %v950 = vsel %vm942, %v940, 8
        %v951 = vsel %vm943, %v940, 8
        %v952 = vsel %vm944, %v940, 8
        %v953 = vsel %vm945, %v940, 8
        %v954 = vsel %vm946, %v940, 8
        %v955 = vsel %vm947, %v940, 8
        %v956 = vsel %vm948, %v940, 8
        %v957 = vrot.slane %v949, 4
        %vm958 = vcmp.lt.s32.totalorder %v949, %v957
        %v959 = vsel %vm958, %v949, %v957
        %v960 = vrot.slane %v959, 2
        %vm961 = vcmp.lt.s32.totalorder %v959, %v960
        %v962 = vsel %vm961, %v959, %v960
        %v963 = vrot.slane %v962, 1
        %vm964 = vcmp.lt.s32.totalorder %v962, %v963
        %v965 = vsel %vm964, %v962, %v963
        %v966 = vrot.slane %v950, 4
        %vm967 = vcmp.lt.s32.totalorder %v950, %v966
        %v968 = vsel %vm967, %v950, %v966
        %v969 = vrot.slane %v968, 2
        %vm970 = vcmp.lt.s32.totalorder %v968, %v969
        %v971 = vsel %vm970, %v968, %v969
        %v972 = vrot.slane %v971, 1
        %vm973 = vcmp.lt.s32.totalorder %v971, %v972
        %v974 = vsel %vm973, %v971, %v972
        %v975 = vrot.slane %v951, 4
        %vm976 = vcmp.lt.s32.totalorder %v951, %v975
        %v977 = vsel %vm976, %v951, %v975
        %v978 = vrot.slane %v977, 2
        %vm979 = vcmp.lt.s32.totalorder %v977, %v978
        %v980 = vsel %vm979, %v977, %v978
        %v981 = vrot.slane %v980, 1
        %vm982 = vcmp.lt.s32.totalorder %v980, %v981
        %v983 = vsel %vm982, %v980, %v981
        %v984 = vrot.slane %v952, 4
        %vm985 = vcmp.lt.s32.totalorder %v952, %v984
        %v986 = vsel %vm985, %v952, %v984
        %v987 = vrot.slane %v986, 2
        %vm988 = vcmp.lt.s32.totalorder %v986, %v987
        %v989 = vsel %vm988, %v986, %v987
        %v990 = vrot.slane %v989, 1
        %vm991 = vcmp.lt.s32.totalorder %v989, %v990
        %v992 = vsel %vm991, %v989, %v990
        %v993 = vrot.slane %v953, 4
        %vm994 = vcmp.lt.s32.totalorder %v953, %v993
        %v995 = vsel %vm994, %v953, %v993
        %v996 = vrot.slane %v995, 2
        %vm997 = vcmp.lt.s32.totalorder %v995, %v996
        %v998 = vsel %vm997, %v995, %v996
        %v999 = vrot.slane %v998, 1
        %vm1000 = vcmp.lt.s32.totalorder %v998, %v999
        %v1001 = vsel %vm1000, %v998, %v999
        %v1002 = vrot.slane %v954, 4
        %vm1003 = vcmp.lt.s32.totalorder %v954, %v1002
        %v1004 = vsel %vm1003, %v954, %v1002
        %v1005 = vrot.slane %v1004, 2
        %vm1006 = vcmp.lt.s32.totalorder %v1004, %v1005
        %v1007 = vsel %vm1006, %v1004, %v1005
        %v1008 = vrot.slane %v1007, 1
        %vm1009 = vcmp.lt.s32.totalorder %v1007, %v1008
        %v1010 = vsel %vm1009, %v1007, %v1008
        %v1011 = vrot.slane %v955, 4
        %vm1012 = vcmp.lt.s32.totalorder %v955, %v1011
        %v1013 = vsel %vm1012, %v955, %v1011
        %v1014 = vrot.slane %v1013, 2
        %vm1015 = vcmp.lt.s32.totalorder %v1013, %v1014
        %v1016 = vsel %vm1015, %v1013, %v1014
        %v1017 = vrot.slane %v1016, 1
        %vm1018 = vcmp.lt.s32.totalorder %v1016, %v1017
        %v1019 = vsel %vm1018, %v1016, %v1017
        %v1020 = vrot.slane %v956, 4
        %vm1021 = vcmp.lt.s32.totalorder %v956, %v1020
        %v1022 = vsel %vm1021, %v956, %v1020
        %v1023 = vrot.slane %v1022, 2
        %vm1024 = vcmp.lt.s32.totalorder %v1022, %v1023
        %v1025 = vsel %vm1024, %v1022, %v1023
        %v1026 = vrot.slane %v1025, 1
        %vm1027 = vcmp.lt.s32.totalorder %v1025, %v1026
        %v1028 = vsel %vm1027, %v1025, %v1026
        %vm1029 = vcmp.eq.s32.totalorder %v940, %v965
        %vm1030 = vcmp.eq.s32.totalorder %v940, %v974
        %vm1031 = vcmp.eq.s32.totalorder %v940, %v983
        %vm1032 = vcmp.eq.s32.totalorder %v940, %v992
        %vm1033 = vcmp.eq.s32.totalorder %v940, %v1001
        %vm1034 = vcmp.eq.s32.totalorder %v940, %v1010
        %vm1035 = vcmp.eq.s32.totalorder %v940, %v1019
        %vm1036 = vcmp.eq.s32.totalorder %v940, %v1028
        %v1037 = vsel %vm1029, 1, 0
        %v1038 = vsel %vm1030, 1, 0
        %v1039 = vsel %vm1031, 1, 0
        %v1040 = vsel %vm1032, 1, 0
        %v1041 = vsel %vm1033, 1, 0
        %v1042 = vsel %vm1034, 1, 0
        %v1043 = vsel %vm1035, 1, 0
        %v1044 = vsel %vm1036, 1, 0
        %v1045 = vcvt.s32.f32 %v1037
        %v1046 = vcvt.s32.f32 %v1038
        %v1047 = vcvt.s32.f32 %v1039
        %v1048 = vcvt.s32.f32 %v1040
        %v1049 = vcvt.s32.f32 %v1041
        %v1050 = vcvt.s32.f32 %v1042
        %v1051 = vcvt.s32.f32 %v1043
        %v1052 = vcvt.s32.f32 %v1044
        %vm1053 = vcmask 64512
        %v1055 = vsel %vm1053, %v615, 0
        %1057 = vmatprep.subr.mxu0 %v1046
        %1058 = vmatpush1.msra.mxu0 %v1045
        %1059 = vmatprep.subr.mxu0 0.0
        %1060 = vmatpush1.msra.mxu0 0.0
        %1061 = vmatprep.subr.mxu0 0.0
        %1062 = vmatpush1.msra.mxu0 0.0
        %1063 = vmatprep.subr.mxu0 0.0
        %1064 = vmatpush1.msra.mxu0 0.0
        %1065 = vmatprep.subr.mxu0 0.0
        %1066 = vmatpush1.msra.mxu0 0.0
        %1067 = vmatprep.subr.mxu0 0.0
        %1068 = vmatpush1.msra.mxu0 0.0
        %1069 = vmatprep.subr.mxu0 0.0
        %1070 = vmatpush1.msra.mxu0 0.0
        %1071 = vmatprep.subr.mxu0 0.0
        %1072 = vmatpush1.msra.mxu0 0.0
        %1073 = vmatprep.subr.mxu0 0.0
        %1074 = vmatpush1.msra.mxu0 0.0
        %1075 = vmatprep.subr.mxu0 0.0
        %1076 = vmatpush1.msra.mxu0 0.0
        %1077 = vmatprep.subr.mxu0 0.0
        %1078 = vmatpush1.msra.mxu0 0.0
        %1079 = vmatprep.subr.mxu0 0.0
        %1080 = vmatpush1.msra.mxu0 0.0
        %1081 = vmatprep.subr.mxu0 0.0
        %1082 = vmatpush1.msra.mxu0 0.0
        %1083 = vmatprep.subr.mxu0 0.0
        %1084 = vmatpush1.msra.mxu0 0.0
        %1085 = vmatprep.subr.mxu0 0.0
        %1086 = vmatpush1.msra.mxu0 0.0
        %1087 = vmatprep.subr.mxu0 0.0
        %1088 = vmatpush1.msra.mxu0 0.0
        %1089 = vmatprep.subr.mxu0 0.0
        %1090 = vmatpush1.msra.mxu0 0.0
        %1091 = vmatprep.subr.mxu0 0.0
        %1092 = vmatpush1.msra.mxu0 0.0
        %1093 = vmatprep.subr.mxu0 0.0
        %1094 = vmatpush1.msra.mxu0 0.0
        %1095 = vmatprep.subr.mxu0 0.0
        %1096 = vmatpush1.msra.mxu0 0.0
        %1097 = vmatprep.subr.mxu0 0.0
        %1098 = vmatpush1.msra.mxu0 0.0
        %1099 = vmatprep.subr.mxu0 0.0
        %1100 = vmatpush1.msra.mxu0 0.0
        %1101 = vmatprep.subr.mxu0 0.0
        %1102 = vmatpush1.msra.mxu0 0.0
        %1103 = vmatprep.subr.mxu0 0.0
        %1104 = vmatpush1.msra.mxu0 0.0
        %1105 = vmatprep.subr.mxu0 0.0
        %1106 = vmatpush1.msra.mxu0 0.0
        %1107 = vmatprep.subr.mxu0 0.0
        %1108 = vmatpush1.msra.mxu0 0.0
        %1109 = vmatprep.subr.mxu0 0.0
        %1110 = vmatpush1.msra.mxu0 0.0
        %1111 = vmatprep.subr.mxu0 0.0
        %1112 = vmatpush1.msra.mxu0 0.0
        %1113 = vmatprep.subr.mxu0 0.0
        %1114 = vmatpush1.msra.mxu0 0.0
        %1115 = vmatprep.subr.mxu0 0.0
        %1116 = vmatpush1.msra.mxu0 0.0
        %1117 = vmatprep.subr.mxu0 0.0
        %1118 = vmatpush1.msra.mxu0 0.0
        %1119 = vmatprep.subr.mxu0 0.0
        %1120 = vmatpush1.msra.mxu0 0.0
        %1121 = vmatprep.mubr.f32.mxu0 0.0
        %1122 = vmatmul.mubr.f32.gmra.mrb[0].mxu0 %v1055
        %v1123 = vpop.f32.mrb[0].mxu0
        %v1124 = vadd.f32 0.0, %v1123
        %v1125 = vpop.f32.mrb[0].mxu0
        %v1126 = vadd.f32 0.0, %v1125
        %1127 = vdwg.mxu0
        %1128 = vmatprep.subr.mxu0 %v1048
        %1129 = vmatpush1.msra.mxu0 %v1047
        %1130 = vmatprep.subr.mxu0 0.0
        %1131 = vmatpush1.msra.mxu0 0.0
        %1132 = vmatprep.subr.mxu0 0.0
        %1133 = vmatpush1.msra.mxu0 0.0
        %1134 = vmatprep.subr.mxu0 0.0
        %1135 = vmatpush1.msra.mxu0 0.0
        %1136 = vmatprep.subr.mxu0 0.0
        %1137 = vmatpush1.msra.mxu0 0.0
        %1138 = vmatprep.subr.mxu0 0.0
        %1139 = vmatpush1.msra.mxu0 0.0
        %1140 = vmatprep.subr.mxu0 0.0
        %1141 = vmatpush1.msra.mxu0 0.0
        %1142 = vmatprep.subr.mxu0 0.0
        %1143 = vmatpush1.msra.mxu0 0.0
        %1144 = vmatprep.subr.mxu0 0.0
        %1145 = vmatpush1.msra.mxu0 0.0
        %1146 = vmatprep.subr.mxu0 0.0
        %1147 = vmatpush1.msra.mxu0 0.0
        %1148 = vmatprep.subr.mxu0 0.0
        %1149 = vmatpush1.msra.mxu0 0.0
        %1150 = vmatprep.subr.mxu0 0.0
        %1151 = vmatpush1.msra.mxu0 0.0
        %1152 = vmatprep.subr.mxu0 0.0
        %1153 = vmatpush1.msra.mxu0 0.0
        %1154 = vmatprep.subr.mxu0 0.0
        %1155 = vmatpush1.msra.mxu0 0.0
        %1156 = vmatprep.subr.mxu0 0.0
        %1157 = vmatpush1.msra.mxu0 0.0
        %1158 = vmatprep.subr.mxu0 0.0
        %1159 = vmatpush1.msra.mxu0 0.0
        %1160 = vmatprep.subr.mxu0 0.0
        %1161 = vmatpush1.msra.mxu0 0.0
        %1162 = vmatprep.subr.mxu0 0.0
        %1163 = vmatpush1.msra.mxu0 0.0
        %1164 = vmatprep.subr.mxu0 0.0
        %1165 = vmatpush1.msra.mxu0 0.0
        %1166 = vmatprep.subr.mxu0 0.0
        %1167 = vmatpush1.msra.mxu0 0.0
        %1168 = vmatprep.subr.mxu0 0.0
        %1169 = vmatpush1.msra.mxu0 0.0
        %1170 = vmatprep.subr.mxu0 0.0
        %1171 = vmatpush1.msra.mxu0 0.0
        %1172 = vmatprep.subr.mxu0 0.0
        %1173 = vmatpush1.msra.mxu0 0.0
        %1174 = vmatprep.subr.mxu0 0.0
        %1175 = vmatpush1.msra.mxu0 0.0
        %1176 = vmatprep.subr.mxu0 0.0
        %1177 = vmatpush1.msra.mxu0 0.0
        %1178 = vmatprep.subr.mxu0 0.0
        %1179 = vmatpush1.msra.mxu0 0.0
        %1180 = vmatprep.subr.mxu0 0.0
        %1181 = vmatpush1.msra.mxu0 0.0
        %1182 = vmatprep.subr.mxu0 0.0
        %1183 = vmatpush1.msra.mxu0 0.0
        %1184 = vmatprep.subr.mxu0 0.0
        %1185 = vmatpush1.msra.mxu0 0.0
        %1186 = vmatprep.subr.mxu0 0.0
        %1187 = vmatpush1.msra.mxu0 0.0
        %1188 = vmatprep.subr.mxu0 0.0
        %1189 = vmatpush1.msra.mxu0 0.0
        %1190 = vmatprep.subr.mxu0 0.0
        %1191 = vmatpush1.msra.mxu0 0.0
        %1192 = vmatprep.mubr.f32.mxu0 0.0
        %1193 = vmatmul.mubr.f32.gmra.mrb[0].mxu0 %v1055
        %v1194 = vpop.f32.mrb[0].mxu0
        %v1195 = vadd.f32 0.0, %v1194
        %v1196 = vpop.f32.mrb[0].mxu0
        %v1197 = vadd.f32 0.0, %v1196
        %1198 = vdwg.mxu0
        %v1200 = vsel %vm1053, %v616, 0
        %1202 = vmatprep.subr.mxu0 %v1050
        %1203 = vmatpush1.msra.mxu0 %v1049
        %1204 = vmatprep.subr.mxu0 0.0
        %1205 = vmatpush1.msra.mxu0 0.0
        %1206 = vmatprep.subr.mxu0 0.0
        %1207 = vmatpush1.msra.mxu0 0.0
        %1208 = vmatprep.subr.mxu0 0.0
        %1209 = vmatpush1.msra.mxu0 0.0
        %1210 = vmatprep.subr.mxu0 0.0
        %1211 = vmatpush1.msra.mxu0 0.0
        %1212 = vmatprep.subr.mxu0 0.0
        %1213 = vmatpush1.msra.mxu0 0.0
        %1214 = vmatprep.subr.mxu0 0.0
        %1215 = vmatpush1.msra.mxu0 0.0
        %1216 = vmatprep.subr.mxu0 0.0
        %1217 = vmatpush1.msra.mxu0 0.0
        %1218 = vmatprep.subr.mxu0 0.0
        %1219 = vmatpush1.msra.mxu0 0.0
        %1220 = vmatprep.subr.mxu0 0.0
        %1221 = vmatpush1.msra.mxu0 0.0
        %1222 = vmatprep.subr.mxu0 0.0
        %1223 = vmatpush1.msra.mxu0 0.0
        %1224 = vmatprep.subr.mxu0 0.0
        %1225 = vmatpush1.msra.mxu0 0.0
        %1226 = vmatprep.subr.mxu0 0.0
        %1227 = vmatpush1.msra.mxu0 0.0
        %1228 = vmatprep.subr.mxu0 0.0
        %1229 = vmatpush1.msra.mxu0 0.0
        %1230 = vmatprep.subr.mxu0 0.0
        %1231 = vmatpush1.msra.mxu0 0.0
        %1232 = vmatprep.subr.mxu0 0.0
        %1233 = vmatpush1.msra.mxu0 0.0
        %1234 = vmatprep.subr.mxu0 0.0
        %1235 = vmatpush1.msra.mxu0 0.0
        %1236 = vmatprep.subr.mxu0 0.0
        %1237 = vmatpush1.msra.mxu0 0.0
        %1238 = vmatprep.subr.mxu0 0.0
        %1239 = vmatpush1.msra.mxu0 0.0
        %1240 = vmatprep.subr.mxu0 0.0
        %1241 = vmatpush1.msra.mxu0 0.0
        %1242 = vmatprep.subr.mxu0 0.0
        %1243 = vmatpush1.msra.mxu0 0.0
        %1244 = vmatprep.subr.mxu0 0.0
        %1245 = vmatpush1.msra.mxu0 0.0
        %1246 = vmatprep.subr.mxu0 0.0
        %1247 = vmatpush1.msra.mxu0 0.0
        %1248 = vmatprep.subr.mxu0 0.0
        %1249 = vmatpush1.msra.mxu0 0.0
        %1250 = vmatprep.subr.mxu0 0.0
        %1251 = vmatpush1.msra.mxu0 0.0
        %1252 = vmatprep.subr.mxu0 0.0
        %1253 = vmatpush1.msra.mxu0 0.0
        %1254 = vmatprep.subr.mxu0 0.0
        %1255 = vmatpush1.msra.mxu0 0.0
        %1256 = vmatprep.subr.mxu0 0.0
        %1257 = vmatpush1.msra.mxu0 0.0
        %1258 = vmatprep.subr.mxu0 0.0
        %1259 = vmatpush1.msra.mxu0 0.0
        %1260 = vmatprep.subr.mxu0 0.0
        %1261 = vmatpush1.msra.mxu0 0.0
        %1262 = vmatprep.subr.mxu0 0.0
        %1263 = vmatpush1.msra.mxu0 0.0
        %1264 = vmatprep.subr.mxu0 0.0
        %1265 = vmatpush1.msra.mxu0 0.0
        %1266 = vmatprep.mubr.f32.mxu0 0.0
        %1267 = vmatmul.mubr.f32.gmra.mrb[0].mxu0 %v1200
        %v1268 = vpop.f32.mrb[0].mxu0
        %v1269 = vadd.f32 0.0, %v1268
        %v1270 = vpop.f32.mrb[0].mxu0
        %v1271 = vadd.f32 0.0, %v1270
        %1272 = vdwg.mxu0
        %1273 = vmatprep.subr.mxu0 %v1052
        %1274 = vmatpush1.msra.mxu0 %v1051
        %1275 = vmatprep.subr.mxu0 0.0
        %1276 = vmatpush1.msra.mxu0 0.0
        %1277 = vmatprep.subr.mxu0 0.0
        %1278 = vmatpush1.msra.mxu0 0.0
        %1279 = vmatprep.subr.mxu0 0.0
        %1280 = vmatpush1.msra.mxu0 0.0
        %1281 = vmatprep.subr.mxu0 0.0
        %1282 = vmatpush1.msra.mxu0 0.0
        %1283 = vmatprep.subr.mxu0 0.0
        %1284 = vmatpush1.msra.mxu0 0.0
        %1285 = vmatprep.subr.mxu0 0.0
        %1286 = vmatpush1.msra.mxu0 0.0
        %1287 = vmatprep.subr.mxu0 0.0
        %1288 = vmatpush1.msra.mxu0 0.0
        %1289 = vmatprep.subr.mxu0 0.0
        %1290 = vmatpush1.msra.mxu0 0.0
        %1291 = vmatprep.subr.mxu0 0.0
        %1292 = vmatpush1.msra.mxu0 0.0
        %1293 = vmatprep.subr.mxu0 0.0
        %1294 = vmatpush1.msra.mxu0 0.0
        %1295 = vmatprep.subr.mxu0 0.0
        %1296 = vmatpush1.msra.mxu0 0.0
        %1297 = vmatprep.subr.mxu0 0.0
        %1298 = vmatpush1.msra.mxu0 0.0
        %1299 = vmatprep.subr.mxu0 0.0
        %1300 = vmatpush1.msra.mxu0 0.0
        %1301 = vmatprep.subr.mxu0 0.0
        %1302 = vmatpush1.msra.mxu0 0.0
        %1303 = vmatprep.subr.mxu0 0.0
        %1304 = vmatpush1.msra.mxu0 0.0
        %1305 = vmatprep.subr.mxu0 0.0
        %1306 = vmatpush1.msra.mxu0 0.0
        %1307 = vmatprep.subr.mxu0 0.0
        %1308 = vmatpush1.msra.mxu0 0.0
        %1309 = vmatprep.subr.mxu0 0.0
        %1310 = vmatpush1.msra.mxu0 0.0
        %1311 = vmatprep.subr.mxu0 0.0
        %1312 = vmatpush1.msra.mxu0 0.0
        %1313 = vmatprep.subr.mxu0 0.0
        %1314 = vmatpush1.msra.mxu0 0.0
        %1315 = vmatprep.subr.mxu0 0.0
        %1316 = vmatpush1.msra.mxu0 0.0
        %1317 = vmatprep.subr.mxu0 0.0
        %1318 = vmatpush1.msra.mxu0 0.0
        %1319 = vmatprep.subr.mxu0 0.0
        %1320 = vmatpush1.msra.mxu0 0.0
        %1321 = vmatprep.subr.mxu0 0.0
        %1322 = vmatpush1.msra.mxu0 0.0
        %1323 = vmatprep.subr.mxu0 0.0
        %1324 = vmatpush1.msra.mxu0 0.0
        %1325 = vmatprep.subr.mxu0 0.0
        %1326 = vmatpush1.msra.mxu0 0.0
        %1327 = vmatprep.subr.mxu0 0.0
        %1328 = vmatpush1.msra.mxu0 0.0
        %1329 = vmatprep.subr.mxu0 0.0
        %1330 = vmatpush1.msra.mxu0 0.0
        %1331 = vmatprep.subr.mxu0 0.0
        %1332 = vmatpush1.msra.mxu0 0.0
        %1333 = vmatprep.subr.mxu0 0.0
        %1334 = vmatpush1.msra.mxu0 0.0
        %1335 = vmatprep.subr.mxu0 0.0
        %1336 = vmatpush1.msra.mxu0 0.0
        %1337 = vmatprep.mubr.f32.mxu0 0.0
        %1338 = vmatmul.mubr.f32.gmra.mrb[0].mxu0 %v1200
        %v1339 = vpop.f32.mrb[0].mxu0
        %v1340 = vadd.f32 0.0, %v1339
        %v1341 = vpop.f32.mrb[0].mxu0
        %v1342 = vadd.f32 0.0, %v1341
        %1343 = vdwg.mxu0
        %v1344 = vmul.f32 %v849, 0.6
        %v1345 = vmul.f32 %v850, 0.6
        %v1346 = vmul.f32 %v851, 0.6
        %v1347 = vmul.f32 %v852, 0.6
        %v1348 = vmul.f32 %v853, 0.6
        %v1349 = vmul.f32 %v854, 0.6
        %v1350 = vmul.f32 %v855, 0.6
        %v1351 = vmul.f32 %v856, 0.6
        %vm1352 = vcmp.ge.f32.partialorder %v801, %v1344
        %vm1353 = vcmp.ge.f32.partialorder %v802, %v1345
        %vm1354 = vcmp.ge.f32.partialorder %v803, %v1346
        %vm1355 = vcmp.ge.f32.partialorder %v804, %v1347
        %vm1356 = vcmp.ge.f32.partialorder %v805, %v1348
        %vm1357 = vcmp.ge.f32.partialorder %v806, %v1349
        %vm1358 = vcmp.ge.f32.partialorder %v807, %v1350
        %vm1359 = vcmp.ge.f32.partialorder %v808, %v1351
        %vm1360 = vmand %vm1352, %vm881
        %vm1361 = vmand %vm1353, %vm881
        %vm1362 = vmand %vm1354, %vm881
        %vm1363 = vmand %vm1355, %vm881
        %vm1364 = vmand %vm1356, %vm882
        %vm1365 = vmand %vm1357, %vm882
        %vm1366 = vmand %vm1358, %vm882
        %vm1367 = vmand %vm1359, %vm882
        %v1368 = vsel %vm1360, 1, 0
        %v1369 = vsel %vm1361, 1, 0
        %v1370 = vsel %vm1362, 1, 0
        %v1371 = vsel %vm1363, 1, 0
        %v1372 = vsel %vm1364, 1, 0
        %v1373 = vsel %vm1365, 1, 0
        %v1374 = vsel %vm1366, 1, 0
        %v1375 = vsel %vm1367, 1, 0
        %v1376 = vcvt.s32.f32 %v1368
        %v1377 = vcvt.s32.f32 %v1369
        %v1378 = vcvt.s32.f32 %v1370
        %v1379 = vcvt.s32.f32 %v1371
        %v1380 = vcvt.s32.f32 %v1372
        %v1381 = vcvt.s32.f32 %v1373
        %v1382 = vcvt.s32.f32 %v1374
        %v1383 = vcvt.s32.f32 %v1375
        %v1384 = vmul.f32 %v849, 0.45
        %v1385 = vmul.f32 %v850, 0.45
        %v1386 = vmul.f32 %v851, 0.45
        %v1387 = vmul.f32 %v852, 0.45
        %v1388 = vmul.f32 %v853, 0.45
        %v1389 = vmul.f32 %v854, 0.45
        %v1390 = vmul.f32 %v855, 0.45
        %v1391 = vmul.f32 %v856, 0.45
        %vm1392 = vcmp.ge.f32.partialorder %v801, %v1384
        %vm1393 = vcmp.ge.f32.partialorder %v802, %v1385
        %vm1394 = vcmp.ge.f32.partialorder %v803, %v1386
        %vm1395 = vcmp.ge.f32.partialorder %v804, %v1387
        %vm1396 = vcmp.ge.f32.partialorder %v805, %v1388
        %vm1397 = vcmp.ge.f32.partialorder %v806, %v1389
        %vm1398 = vcmp.ge.f32.partialorder %v807, %v1390
        %vm1399 = vcmp.ge.f32.partialorder %v808, %v1391
        %vm1400 = vmand %vm1392, %vm881
        %vm1401 = vmand %vm1393, %vm881
        %vm1402 = vmand %vm1394, %vm881
        %vm1403 = vmand %vm1395, %vm881
        %vm1404 = vmand %vm1396, %vm882
        %vm1405 = vmand %vm1397, %vm882
        %vm1406 = vmand %vm1398, %vm882
        %vm1407 = vmand %vm1399, %vm882
        %v1408 = vsel %vm1400, 1, 0
        %v1409 = vsel %vm1401, 1, 0
        %v1410 = vsel %vm1402, 1, 0
        %v1411 = vsel %vm1403, 1, 0
        %v1412 = vsel %vm1404, 1, 0
        %v1413 = vsel %vm1405, 1, 0
        %v1414 = vsel %vm1406, 1, 0
        %v1415 = vsel %vm1407, 1, 0
        %v1416 = vcvt.s32.f32 %v1408
        %v1417 = vcvt.s32.f32 %v1409
        %v1418 = vcvt.s32.f32 %v1410
        %v1419 = vcvt.s32.f32 %v1411
        %v1420 = vcvt.s32.f32 %v1412
        %v1421 = vcvt.s32.f32 %v1413
        %v1422 = vcvt.s32.f32 %v1414
        %v1423 = vcvt.s32.f32 %v1415
        %v1424 = vrot.slane %v1376, 4
        %v1425 = vmax.f32 %v1376, %v1424
        %v1426 = vrot.slane %v1425, 2
        %v1427 = vmax.f32 %v1425, %v1426
        %v1428 = vrot.slane %v1427, 1
        %v1429 = vmax.f32 %v1427, %v1428
        %v1430 = vrot.slane %v1377, 4
        %v1431 = vmax.f32 %v1377, %v1430
        %v1432 = vrot.slane %v1431, 2
        %v1433 = vmax.f32 %v1431, %v1432
        %v1434 = vrot.slane %v1433, 1
        %v1435 = vmax.f32 %v1433, %v1434
        %v1436 = vrot.slane %v1378, 4
        %v1437 = vmax.f32 %v1378, %v1436
        %v1438 = vrot.slane %v1437, 2
        %v1439 = vmax.f32 %v1437, %v1438
        %v1440 = vrot.slane %v1439, 1
        %v1441 = vmax.f32 %v1439, %v1440
        %v1442 = vrot.slane %v1379, 4
        %v1443 = vmax.f32 %v1379, %v1442
        %v1444 = vrot.slane %v1443, 2
        %v1445 = vmax.f32 %v1443, %v1444
        %v1446 = vrot.slane %v1445, 1
        %v1447 = vmax.f32 %v1445, %v1446
        %v1448 = vrot.slane %v1380, 4
        %v1449 = vmax.f32 %v1380, %v1448
        %v1450 = vrot.slane %v1449, 2
        %v1451 = vmax.f32 %v1449, %v1450
        %v1452 = vrot.slane %v1451, 1
        %v1453 = vmax.f32 %v1451, %v1452
        %v1454 = vrot.slane %v1381, 4
        %v1455 = vmax.f32 %v1381, %v1454
        %v1456 = vrot.slane %v1455, 2
        %v1457 = vmax.f32 %v1455, %v1456
        %v1458 = vrot.slane %v1457, 1
        %v1459 = vmax.f32 %v1457, %v1458
        %v1460 = vrot.slane %v1382, 4
        %v1461 = vmax.f32 %v1382, %v1460
        %v1462 = vrot.slane %v1461, 2
        %v1463 = vmax.f32 %v1461, %v1462
        %v1464 = vrot.slane %v1463, 1
        %v1465 = vmax.f32 %v1463, %v1464
        %v1466 = vrot.slane %v1383, 4
        %v1467 = vmax.f32 %v1383, %v1466
        %v1468 = vrot.slane %v1467, 2
        %v1469 = vmax.f32 %v1467, %v1468
        %v1470 = vrot.slane %v1469, 1
        %v1471 = vmax.f32 %v1469, %v1470
        %vm1472 = vcmp.gt.f32.partialorder %v1429, 0.5
        %vm1473 = vcmp.gt.f32.partialorder %v1435, 0.5
        %vm1474 = vcmp.gt.f32.partialorder %v1441, 0.5
        %vm1475 = vcmp.gt.f32.partialorder %v1447, 0.5
        %vm1476 = vcmp.gt.f32.partialorder %v1453, 0.5
        %vm1477 = vcmp.gt.f32.partialorder %v1459, 0.5
        %vm1478 = vcmp.gt.f32.partialorder %v1465, 0.5
        %vm1479 = vcmp.gt.f32.partialorder %v1471, 0.5
        %v1480 = vrot.slane %v1416, 4
        %v1481 = vmax.f32 %v1416, %v1480
        %v1482 = vrot.slane %v1481, 2
        %v1483 = vmax.f32 %v1481, %v1482
        %v1484 = vrot.slane %v1483, 1
        %v1485 = vmax.f32 %v1483, %v1484
        %v1486 = vrot.slane %v1417, 4
        %v1487 = vmax.f32 %v1417, %v1486
        %v1488 = vrot.slane %v1487, 2
        %v1489 = vmax.f32 %v1487, %v1488
        %v1490 = vrot.slane %v1489, 1
        %v1491 = vmax.f32 %v1489, %v1490
        %v1492 = vrot.slane %v1418, 4
        %v1493 = vmax.f32 %v1418, %v1492
        %v1494 = vrot.slane %v1493, 2
        %v1495 = vmax.f32 %v1493, %v1494
        %v1496 = vrot.slane %v1495, 1
        %v1497 = vmax.f32 %v1495, %v1496
        %v1498 = vrot.slane %v1419, 4
        %v1499 = vmax.f32 %v1419, %v1498
        %v1500 = vrot.slane %v1499, 2
        %v1501 = vmax.f32 %v1499, %v1500
        %v1502 = vrot.slane %v1501, 1
        %v1503 = vmax.f32 %v1501, %v1502
        %v1504 = vrot.slane %v1420, 4
        %v1505 = vmax.f32 %v1420, %v1504
        %v1506 = vrot.slane %v1505, 2
        %v1507 = vmax.f32 %v1505, %v1506
        %v1508 = vrot.slane %v1507, 1
        %v1509 = vmax.f32 %v1507, %v1508
        %v1510 = vrot.slane %v1421, 4
        %v1511 = vmax.f32 %v1421, %v1510
        %v1512 = vrot.slane %v1511, 2
        %v1513 = vmax.f32 %v1511, %v1512
        %v1514 = vrot.slane %v1513, 1
        %v1515 = vmax.f32 %v1513, %v1514
        %v1516 = vrot.slane %v1422, 4
        %v1517 = vmax.f32 %v1422, %v1516
        %v1518 = vrot.slane %v1517, 2
        %v1519 = vmax.f32 %v1517, %v1518
        %v1520 = vrot.slane %v1519, 1
        %v1521 = vmax.f32 %v1519, %v1520
        %v1522 = vrot.slane %v1423, 4
        %v1523 = vmax.f32 %v1423, %v1522
        %v1524 = vrot.slane %v1523, 2
        %v1525 = vmax.f32 %v1523, %v1524
        %v1526 = vrot.slane %v1525, 1
        %v1527 = vmax.f32 %v1525, %v1526
        %vm1528 = vcmp.gt.f32.partialorder %v1485, 0.5
        %vm1529 = vcmp.gt.f32.partialorder %v1491, 0.5
        %vm1530 = vcmp.gt.f32.partialorder %v1497, 0.5
        %vm1531 = vcmp.gt.f32.partialorder %v1503, 0.5
        %vm1532 = vcmp.gt.f32.partialorder %v1509, 0.5
        %vm1533 = vcmp.gt.f32.partialorder %v1515, 0.5
        %vm1534 = vcmp.gt.f32.partialorder %v1521, 0.5
        %vm1535 = vcmp.gt.f32.partialorder %v1527, 0.5
        %vm1536 = vcmp.gt.f32.partialorder %v635, 0.5
        %vm1537 = vcmp.gt.f32.partialorder %v636, 0.5
        %v1538 = vsel %vm1536, 1, 0
        %v1539 = vsel %vm1537, 1, 0
        %v1540 = vlaneseq
        %v1541 = vshrl.u32 %v1540, 7
        %v1542 = vsub.s32 1, %v1541
        %v1543 = vrot.slane %v1538, %v1542
        %v1544 = vlaneseq
        %v1545 = vshrl.u32 %v1544, 7
        %v1546 = vsub.s32 3, %v1545
        %v1547 = vrot.slane %v1538, %v1546
        %v1548 = vlaneseq
        %v1549 = vshrl.u32 %v1548, 7
        %v1550 = vsub.s32 5, %v1549
        %v1551 = vrot.slane %v1538, %v1550
        %v1552 = vlaneseq
        %v1553 = vshrl.u32 %v1552, 7
        %v1554 = vsub.s32 7, %v1553
        %v1555 = vrot.slane %v1538, %v1554
        %v1556 = vlaneseq
        %v1557 = vshrl.u32 %v1556, 7
        %v1558 = vsub.s32 1, %v1557
        %v1559 = vrot.slane %v1539, %v1558
        %v1560 = vlaneseq
        %v1561 = vshrl.u32 %v1560, 7
        %v1562 = vsub.s32 3, %v1561
        %v1563 = vrot.slane %v1539, %v1562
        %v1564 = vlaneseq
        %v1565 = vshrl.u32 %v1564, 7
        %v1566 = vsub.s32 5, %v1565
        %v1567 = vrot.slane %v1539, %v1566
        %v1568 = vlaneseq
        %v1569 = vshrl.u32 %v1568, 7
        %v1570 = vsub.s32 7, %v1569
        %v1571 = vrot.slane %v1539, %v1570
        %vm1572 = vcmp.ne.s32.totalorder %v1543, 0
        %vm1573 = vcmp.ne.s32.totalorder %v1547, 0
        %vm1574 = vcmp.ne.s32.totalorder %v1551, 0
        %vm1575 = vcmp.ne.s32.totalorder %v1555, 0
        %vm1576 = vcmp.ne.s32.totalorder %v1559, 0
        %vm1577 = vcmp.ne.s32.totalorder %v1563, 0
        %vm1578 = vcmp.ne.s32.totalorder %v1567, 0
        %vm1579 = vcmp.ne.s32.totalorder %v1571, 0
        %vm1580 = vmor %vm1472, %vm1572
        %vm1581 = vmor %vm1473, %vm1573
        %vm1582 = vmor %vm1474, %vm1574
        %vm1583 = vmor %vm1475, %vm1575
        %vm1584 = vmor %vm1476, %vm1576
        %vm1585 = vmor %vm1477, %vm1577
        %vm1586 = vmor %vm1478, %vm1578
        %vm1587 = vmor %vm1479, %vm1579
        %vm1588 = vmxor %vm1528, 1
        %vm1589 = vmxor %vm1529, 1
        %vm1590 = vmxor %vm1530, 1
        %vm1591 = vmxor %vm1531, 1
        %vm1592 = vmxor %vm1532, 1
        %vm1593 = vmxor %vm1533, 1
        %vm1594 = vmxor %vm1534, 1
        %vm1595 = vmxor %vm1535, 1
        %v1596 = vsel %vm1580, 1, 0
        %v1597 = vsel %vm1581, 1, 0
        %v1598 = vsel %vm1582, 1, 0
        %v1599 = vsel %vm1583, 1, 0
        %v1600 = vsel %vm1584, 1, 0
        %v1601 = vsel %vm1585, 1, 0
        %v1602 = vsel %vm1586, 1, 0
        %v1603 = vsel %vm1587, 1, 0
        %v1604 = vcvt.s32.f32 %v1596
        %v1605 = vcvt.s32.f32 %v1597
        %v1606 = vcvt.s32.f32 %v1598
        %v1607 = vcvt.s32.f32 %v1599
        %v1608 = vcvt.s32.f32 %v1600
        %v1609 = vcvt.s32.f32 %v1601
        %v1610 = vcvt.s32.f32 %v1602
        %v1611 = vcvt.s32.f32 %v1603
        %vm1612 = vmor %vm1580, %vm1588
        %vm1613 = vmor %vm1581, %vm1589
        %vm1614 = vmor %vm1582, %vm1590
        %vm1615 = vmor %vm1583, %vm1591
        %vm1616 = vmor %vm1584, %vm1592
        %vm1617 = vmor %vm1585, %vm1593
        %vm1618 = vmor %vm1586, %vm1594
        %vm1619 = vmor %vm1587, %vm1595
        %v1620 = vsel %vm1612, 1, 0
        %v1621 = vsel %vm1613, 1, 0
        %v1622 = vsel %vm1614, 1, 0
        %v1623 = vsel %vm1615, 1, 0
        %v1624 = vsel %vm1616, 1, 0
        %v1625 = vsel %vm1617, 1, 0
        %v1626 = vsel %vm1618, 1, 0
        %v1627 = vsel %vm1619, 1, 0
        %v1628 = vcvt.s32.f32 %v1620
        %v1629 = vcvt.s32.f32 %v1621
        %v1630 = vcvt.s32.f32 %v1622
        %v1631 = vcvt.s32.f32 %v1623
        %v1632 = vcvt.s32.f32 %v1624
        %v1633 = vcvt.s32.f32 %v1625
        %v1634 = vcvt.s32.f32 %v1626
        %v1635 = vcvt.s32.f32 %v1627
        %v1636 = vsub.f32 %v1124, %v605
        %v1637 = vsub.f32 %v1126, %v606
        %v1638 = vsub.f32 %v1195, %v607
        %v1639 = vsub.f32 %v1197, %v608
        %v1640 = vsub.f32 %v1269, %v605
        %v1641 = vsub.f32 %v1271, %v606
        %v1642 = vsub.f32 %v1340, %v607
        %v1643 = vsub.f32 %v1342, %v608
        %vm1652 = vcmask 1040384
        %v1653 = vrot.slane %v605, 7
        %v1654 = vrot.slane %v609, 7
        %v1655 = vsel %vm1652, %v1653, %v1654
        %v1656 = vrot.slane %v606, 7
        %v1657 = vrot.slane %v610, 7
        %v1658 = vsel %vm1652, %v1656, %v1657
        %v1659 = vrot.slane %v607, 7
        %v1660 = vrot.slane %v611, 7
        %v1661 = vsel %vm1652, %v1659, %v1660
        %v1662 = vrot.slane %v608, 7
        %v1663 = vrot.slane %v612, 7
        %v1664 = vsel %vm1652, %v1662, %v1663
        %v1669 = vmul.f32 %v1636, %v1655
        %v1670 = vmul.f32 %v1637, %v1658
        %v1671 = vmul.f32 %v1638, %v1661
        %v1672 = vmul.f32 %v1639, %v1664
        %v1673 = vmul.f32 %v1640, %v1655
        %v1674 = vmul.f32 %v1641, %v1658
        %v1675 = vmul.f32 %v1642, %v1661
        %v1676 = vmul.f32 %v1643, %v1664
        %vm1677 = vcmask 1042432
        %v1678 = vrot.slane %v605, 5
        %v1679 = vrot.slane %v609, 5
        %v1680 = vsel %vm1677, %v1678, %v1679
        %v1681 = vrot.slane %v606, 5
        %v1682 = vrot.slane %v610, 5
        %v1683 = vsel %vm1677, %v1681, %v1682
        %v1684 = vrot.slane %v607, 5
        %v1685 = vrot.slane %v611, 5
        %v1686 = vsel %vm1677, %v1684, %v1685
        %v1687 = vrot.slane %v608, 5
        %v1688 = vrot.slane %v612, 5
        %v1689 = vsel %vm1677, %v1687, %v1688
        %v1694 = vmul.f32 %v1124, %v1680
        %v1695 = vmul.f32 %v1126, %v1683
        %v1696 = vmul.f32 %v1195, %v1686
        %v1697 = vmul.f32 %v1197, %v1689
        %v1698 = vmul.f32 %v1269, %v1680
        %v1699 = vmul.f32 %v1271, %v1683
        %v1700 = vmul.f32 %v1340, %v1686
        %v1701 = vmul.f32 %v1342, %v1689
        %v1702 = vadd.f32 %v1694, 1e-06
        %v1703 = vadd.f32 %v1695, 1e-06
        %v1704 = vadd.f32 %v1696, 1e-06
        %v1705 = vadd.f32 %v1697, 1e-06
        %v1706 = vadd.f32 %v1698, 1e-06
        %v1707 = vadd.f32 %v1699, 1e-06
        %v1708 = vadd.f32 %v1700, 1e-06
        %v1709 = vadd.f32 %v1701, 1e-06
        %v1710 = vlog2.pop %v1702
        %v1711 = vmul.f32 %v1710, 0.6931472
        %v1712 = vlog2.pop %v1703
        %v1713 = vmul.f32 %v1712, 0.6931472
        %v1714 = vlog2.pop %v1704
        %v1715 = vmul.f32 %v1714, 0.6931472
        %v1716 = vlog2.pop %v1705
        %v1717 = vmul.f32 %v1716, 0.6931472
        %v1718 = vlog2.pop %v1706
        %v1719 = vmul.f32 %v1718, 0.6931472
        %v1720 = vlog2.pop %v1707
        %v1721 = vmul.f32 %v1720, 0.6931472
        %v1722 = vlog2.pop %v1708
        %v1723 = vmul.f32 %v1722, 0.6931472
        %v1724 = vlog2.pop %v1709
        %v1725 = vmul.f32 %v1724, 0.6931472
        %v1726 = vrot.slane %v609, 6
        %v1727 = vrot.slane %v610, 6
        %v1728 = vrot.slane %v611, 6
        %v1729 = vrot.slane %v612, 6
        %v1734 = vmul.f32 %v1124, %v1726
        %v1735 = vmul.f32 %v1126, %v1727
        %v1736 = vmul.f32 %v1195, %v1728
        %v1737 = vmul.f32 %v1197, %v1729
        %v1738 = vmul.f32 %v1269, %v1726
        %v1739 = vmul.f32 %v1271, %v1727
        %v1740 = vmul.f32 %v1340, %v1728
        %v1741 = vmul.f32 %v1342, %v1729
        %v1742 = vrot.slane %v609, 4
        %v1743 = vrot.slane %v610, 4
        %v1744 = vrot.slane %v611, 4
        %v1745 = vrot.slane %v612, 4
        %v1750 = vmul.f32 %v1124, %v1742
        %v1751 = vmul.f32 %v1126, %v1743
        %v1752 = vmul.f32 %v1195, %v1744
        %v1753 = vmul.f32 %v1197, %v1745
        %v1754 = vmul.f32 %v1269, %v1742
        %v1755 = vmul.f32 %v1271, %v1743
        %v1756 = vmul.f32 %v1340, %v1744
        %v1757 = vmul.f32 %v1342, %v1745
        %v1766 = vrot.slane %v1750, 1
        %v1767 = vrot.slane %v1751, 1
        %v1768 = vrot.slane %v1752, 1
        %v1769 = vrot.slane %v1753, 1
        %v1770 = vrot.slane %v1754, 1
        %v1771 = vrot.slane %v1755, 1
        %v1772 = vrot.slane %v1756, 1
        %v1773 = vrot.slane %v1757, 1
        %v1782 = vsub.f32 %v1734, %v1766
        %v1783 = vsub.f32 %v1735, %v1767
        %v1784 = vsub.f32 %v1736, %v1768
        %v1785 = vsub.f32 %v1737, %v1769
        %v1786 = vsub.f32 %v1738, %v1770
        %v1787 = vsub.f32 %v1739, %v1771
        %v1788 = vsub.f32 %v1740, %v1772
        %v1789 = vsub.f32 %v1741, %v1773
        %v1794 = vmul.f32 %v1124, %v1679
        %v1795 = vmul.f32 %v1126, %v1682
        %v1796 = vmul.f32 %v1195, %v1685
        %v1797 = vmul.f32 %v1197, %v1688
        %v1798 = vmul.f32 %v1269, %v1679
        %v1799 = vmul.f32 %v1271, %v1682
        %v1800 = vmul.f32 %v1340, %v1685
        %v1801 = vmul.f32 %v1342, %v1688
        %v1810 = vrot.slane %v1794, 7
        %v1811 = vrot.slane %v1795, 7
        %v1812 = vrot.slane %v1796, 7
        %v1813 = vrot.slane %v1797, 7
        %v1814 = vrot.slane %v1798, 7
        %v1815 = vrot.slane %v1799, 7
        %v1816 = vrot.slane %v1800, 7
        %v1817 = vrot.slane %v1801, 7
        %v1826 = vadd.f32 %v1794, %v1810
        %v1827 = vadd.f32 %v1795, %v1811
        %v1828 = vadd.f32 %v1796, %v1812
        %v1829 = vadd.f32 %v1797, %v1813
        %v1830 = vadd.f32 %v1798, %v1814
        %v1831 = vadd.f32 %v1799, %v1815
        %v1832 = vadd.f32 %v1800, %v1816
        %v1833 = vadd.f32 %v1801, %v1817
        %v1834 = vsub.f32 %v619, %v1669
        %v1835 = vsub.f32 %v620, %v1670
        %v1836 = vsub.f32 %v621, %v1671
        %v1837 = vsub.f32 %v622, %v1672
        %v1838 = vsub.f32 %v623, %v1673
        %v1839 = vsub.f32 %v624, %v1674
        %v1840 = vsub.f32 %v625, %v1675
        %v1841 = vsub.f32 %v626, %v1676
        %v1842 = vand.u32 2147483647, %v1834
        %v1843 = vand.u32 2147483647, %v1835
        %v1844 = vand.u32 2147483647, %v1836
        %v1845 = vand.u32 2147483647, %v1837
        %v1846 = vand.u32 2147483647, %v1838
        %v1847 = vand.u32 2147483647, %v1839
        %v1848 = vand.u32 2147483647, %v1840
        %v1849 = vand.u32 2147483647, %v1841
        %vm1850 = vcmp.lt.f32.partialorder %v1842, 0.11111111
        %vm1851 = vcmp.lt.f32.partialorder %v1843, 0.11111111
        %vm1852 = vcmp.lt.f32.partialorder %v1844, 0.11111111
        %vm1853 = vcmp.lt.f32.partialorder %v1845, 0.11111111
        %vm1854 = vcmp.lt.f32.partialorder %v1846, 0.11111111
        %vm1855 = vcmp.lt.f32.partialorder %v1847, 0.11111111
        %vm1856 = vcmp.lt.f32.partialorder %v1848, 0.11111111
        %vm1857 = vcmp.lt.f32.partialorder %v1849, 0.11111111
        %v1858 = vmul.f32 %v1842, 4.5
        %v1859 = vmul.f32 %v1843, 4.5
        %v1860 = vmul.f32 %v1844, 4.5
        %v1861 = vmul.f32 %v1845, 4.5
        %v1862 = vmul.f32 %v1846, 4.5
        %v1863 = vmul.f32 %v1847, 4.5
        %v1864 = vmul.f32 %v1848, 4.5
        %v1865 = vmul.f32 %v1849, 4.5
        %v1866 = vmul.f32 %v1858, %v1842
        %v1867 = vmul.f32 %v1859, %v1843
        %v1868 = vmul.f32 %v1860, %v1844
        %v1869 = vmul.f32 %v1861, %v1845
        %v1870 = vmul.f32 %v1862, %v1846
        %v1871 = vmul.f32 %v1863, %v1847
        %v1872 = vmul.f32 %v1864, %v1848
        %v1873 = vmul.f32 %v1865, %v1849
        %v1874 = vsub.f32 %v1842, 0.055555556
        %v1875 = vsub.f32 %v1843, 0.055555556
        %v1876 = vsub.f32 %v1844, 0.055555556
        %v1877 = vsub.f32 %v1845, 0.055555556
        %v1878 = vsub.f32 %v1846, 0.055555556
        %v1879 = vsub.f32 %v1847, 0.055555556
        %v1880 = vsub.f32 %v1848, 0.055555556
        %v1881 = vsub.f32 %v1849, 0.055555556
        %v1882 = vsel %vm1850, %v1866, %v1874
        %v1883 = vsel %vm1851, %v1867, %v1875
        %v1884 = vsel %vm1852, %v1868, %v1876
        %v1885 = vsel %vm1853, %v1869, %v1877
        %v1886 = vsel %vm1854, %v1870, %v1878
        %v1887 = vsel %vm1855, %v1871, %v1879
        %v1888 = vsel %vm1856, %v1872, %v1880
        %v1889 = vsel %vm1857, %v1873, %v1881
        %vm1890 = vcmask 1041408
        %v1891 = vsel %vm1890, %v1882, 0.0
        %v1892 = vrot.slane %v1891, 4
        %v1893 = vadd.f32 %v1891, %v1892
        %v1894 = vrot.slane %v1893, 2
        %v1895 = vadd.f32 %v1893, %v1894
        %v1896 = vrot.slane %v1895, 1
        %v1897 = vadd.f32 %v1895, %v1896
        %v1898 = vsel %vm1890, %v1883, 0.0
        %v1899 = vrot.slane %v1898, 4
        %v1900 = vadd.f32 %v1898, %v1899
        %v1901 = vrot.slane %v1900, 2
        %v1902 = vadd.f32 %v1900, %v1901
        %v1903 = vrot.slane %v1902, 1
        %v1904 = vadd.f32 %v1902, %v1903
        %v1905 = vsel %vm1890, %v1884, 0.0
        %v1906 = vrot.slane %v1905, 4
        %v1907 = vadd.f32 %v1905, %v1906
        %v1908 = vrot.slane %v1907, 2
        %v1909 = vadd.f32 %v1907, %v1908
        %v1910 = vrot.slane %v1909, 1
        %v1911 = vadd.f32 %v1909, %v1910
        %v1912 = vsel %vm1890, %v1885, 0.0
        %v1913 = vrot.slane %v1912, 4
        %v1914 = vadd.f32 %v1912, %v1913
        %v1915 = vrot.slane %v1914, 2
        %v1916 = vadd.f32 %v1914, %v1915
        %v1917 = vrot.slane %v1916, 1
        %v1918 = vadd.f32 %v1916, %v1917
        %v1919 = vsel %vm1890, %v1886, 0.0
        %v1920 = vrot.slane %v1919, 4
        %v1921 = vadd.f32 %v1919, %v1920
        %v1922 = vrot.slane %v1921, 2
        %v1923 = vadd.f32 %v1921, %v1922
        %v1924 = vrot.slane %v1923, 1
        %v1925 = vadd.f32 %v1923, %v1924
        %v1926 = vsel %vm1890, %v1887, 0.0
        %v1927 = vrot.slane %v1926, 4
        %v1928 = vadd.f32 %v1926, %v1927
        %v1929 = vrot.slane %v1928, 2
        %v1930 = vadd.f32 %v1928, %v1929
        %v1931 = vrot.slane %v1930, 1
        %v1932 = vadd.f32 %v1930, %v1931
        %v1933 = vsel %vm1890, %v1888, 0.0
        %v1934 = vrot.slane %v1933, 4
        %v1935 = vadd.f32 %v1933, %v1934
        %v1936 = vrot.slane %v1935, 2
        %v1937 = vadd.f32 %v1935, %v1936
        %v1938 = vrot.slane %v1937, 1
        %v1939 = vadd.f32 %v1937, %v1938
        %v1940 = vsel %vm1890, %v1889, 0.0
        %v1941 = vrot.slane %v1940, 4
        %v1942 = vadd.f32 %v1940, %v1941
        %v1943 = vrot.slane %v1942, 2
        %v1944 = vadd.f32 %v1942, %v1943
        %v1945 = vrot.slane %v1944, 1
        %v1946 = vadd.f32 %v1944, %v1945
        %v1947 = vsub.f32 %v619, %v1711
        %v1948 = vsub.f32 %v620, %v1713
        %v1949 = vsub.f32 %v621, %v1715
        %v1950 = vsub.f32 %v622, %v1717
        %v1951 = vsub.f32 %v623, %v1719
        %v1952 = vsub.f32 %v624, %v1721
        %v1953 = vsub.f32 %v625, %v1723
        %v1954 = vsub.f32 %v626, %v1725
        %v1955 = vand.u32 2147483647, %v1947
        %v1956 = vand.u32 2147483647, %v1948
        %v1957 = vand.u32 2147483647, %v1949
        %v1958 = vand.u32 2147483647, %v1950
        %v1959 = vand.u32 2147483647, %v1951
        %v1960 = vand.u32 2147483647, %v1952
        %v1961 = vand.u32 2147483647, %v1953
        %v1962 = vand.u32 2147483647, %v1954
        %vm1963 = vcmp.lt.f32.partialorder %v1955, 0.11111111
        %vm1964 = vcmp.lt.f32.partialorder %v1956, 0.11111111
        %vm1965 = vcmp.lt.f32.partialorder %v1957, 0.11111111
        %vm1966 = vcmp.lt.f32.partialorder %v1958, 0.11111111
        %vm1967 = vcmp.lt.f32.partialorder %v1959, 0.11111111
        %vm1968 = vcmp.lt.f32.partialorder %v1960, 0.11111111
        %vm1969 = vcmp.lt.f32.partialorder %v1961, 0.11111111
        %vm1970 = vcmp.lt.f32.partialorder %v1962, 0.11111111
        %v1971 = vmul.f32 %v1955, 4.5
        %v1972 = vmul.f32 %v1956, 4.5
        %v1973 = vmul.f32 %v1957, 4.5
        %v1974 = vmul.f32 %v1958, 4.5
        %v1975 = vmul.f32 %v1959, 4.5
        %v1976 = vmul.f32 %v1960, 4.5
        %v1977 = vmul.f32 %v1961, 4.5
        %v1978 = vmul.f32 %v1962, 4.5
        %v1979 = vmul.f32 %v1971, %v1955
        %v1980 = vmul.f32 %v1972, %v1956
        %v1981 = vmul.f32 %v1973, %v1957
        %v1982 = vmul.f32 %v1974, %v1958
        %v1983 = vmul.f32 %v1975, %v1959
        %v1984 = vmul.f32 %v1976, %v1960
        %v1985 = vmul.f32 %v1977, %v1961
        %v1986 = vmul.f32 %v1978, %v1962
        %v1987 = vsub.f32 %v1955, 0.055555556
        %v1988 = vsub.f32 %v1956, 0.055555556
        %v1989 = vsub.f32 %v1957, 0.055555556
        %v1990 = vsub.f32 %v1958, 0.055555556
        %v1991 = vsub.f32 %v1959, 0.055555556
        %v1992 = vsub.f32 %v1960, 0.055555556
        %v1993 = vsub.f32 %v1961, 0.055555556
        %v1994 = vsub.f32 %v1962, 0.055555556
        %v1995 = vsel %vm1963, %v1979, %v1987
        %v1996 = vsel %vm1964, %v1980, %v1988
        %v1997 = vsel %vm1965, %v1981, %v1989
        %v1998 = vsel %vm1966, %v1982, %v1990
        %v1999 = vsel %vm1967, %v1983, %v1991
        %v2000 = vsel %vm1968, %v1984, %v1992
        %v2001 = vsel %vm1969, %v1985, %v1993
        %v2002 = vsel %vm1970, %v1986, %v1994
        %v2011 = vrot.slane %v1995, 2
        %v2012 = vrot.slane %v1996, 2
        %v2013 = vrot.slane %v1997, 2
        %v2014 = vrot.slane %v1998, 2
        %v2015 = vrot.slane %v1999, 2
        %v2016 = vrot.slane %v2000, 2
        %v2017 = vrot.slane %v2001, 2
        %v2018 = vrot.slane %v2002, 2
        %v2027 = vsel %vm1890, %v2011, 0.0
        %v2028 = vrot.slane %v2027, 4
        %v2029 = vadd.f32 %v2027, %v2028
        %v2030 = vrot.slane %v2029, 2
        %v2031 = vadd.f32 %v2029, %v2030
        %v2032 = vrot.slane %v2031, 1
        %v2033 = vadd.f32 %v2031, %v2032
        %v2034 = vsel %vm1890, %v2012, 0.0
        %v2035 = vrot.slane %v2034, 4
        %v2036 = vadd.f32 %v2034, %v2035
        %v2037 = vrot.slane %v2036, 2
        %v2038 = vadd.f32 %v2036, %v2037
        %v2039 = vrot.slane %v2038, 1
        %v2040 = vadd.f32 %v2038, %v2039
        %v2041 = vsel %vm1890, %v2013, 0.0
        %v2042 = vrot.slane %v2041, 4
        %v2043 = vadd.f32 %v2041, %v2042
        %v2044 = vrot.slane %v2043, 2
        %v2045 = vadd.f32 %v2043, %v2044
        %v2046 = vrot.slane %v2045, 1
        %v2047 = vadd.f32 %v2045, %v2046
        %v2048 = vsel %vm1890, %v2014, 0.0
        %v2049 = vrot.slane %v2048, 4
        %v2050 = vadd.f32 %v2048, %v2049
        %v2051 = vrot.slane %v2050, 2
        %v2052 = vadd.f32 %v2050, %v2051
        %v2053 = vrot.slane %v2052, 1
        %v2054 = vadd.f32 %v2052, %v2053
        %v2055 = vsel %vm1890, %v2015, 0.0
        %v2056 = vrot.slane %v2055, 4
        %v2057 = vadd.f32 %v2055, %v2056
        %v2058 = vrot.slane %v2057, 2
        %v2059 = vadd.f32 %v2057, %v2058
        %v2060 = vrot.slane %v2059, 1
        %v2061 = vadd.f32 %v2059, %v2060
        %v2062 = vsel %vm1890, %v2016, 0.0
        %v2063 = vrot.slane %v2062, 4
        %v2064 = vadd.f32 %v2062, %v2063
        %v2065 = vrot.slane %v2064, 2
        %v2066 = vadd.f32 %v2064, %v2065
        %v2067 = vrot.slane %v2066, 1
        %v2068 = vadd.f32 %v2066, %v2067
        %v2069 = vsel %vm1890, %v2017, 0.0
        %v2070 = vrot.slane %v2069, 4
        %v2071 = vadd.f32 %v2069, %v2070
        %v2072 = vrot.slane %v2071, 2
        %v2073 = vadd.f32 %v2071, %v2072
        %v2074 = vrot.slane %v2073, 1
        %v2075 = vadd.f32 %v2073, %v2074
        %v2076 = vsel %vm1890, %v2018, 0.0
        %v2077 = vrot.slane %v2076, 4
        %v2078 = vadd.f32 %v2076, %v2077
        %v2079 = vrot.slane %v2078, 2
        %v2080 = vadd.f32 %v2078, %v2079
        %v2081 = vrot.slane %v2080, 1
        %v2082 = vadd.f32 %v2080, %v2081
        %v2083 = vadd.f32 %v1897, %v2033
        %v2084 = vadd.f32 %v1904, %v2040
        %v2085 = vadd.f32 %v1911, %v2047
        %v2086 = vadd.f32 %v1918, %v2054
        %v2087 = vadd.f32 %v1925, %v2061
        %v2088 = vadd.f32 %v1932, %v2068
        %v2089 = vadd.f32 %v1939, %v2075
        %v2090 = vadd.f32 %v1946, %v2082
        %v2091 = vsub.f32 %v619, %v1782
        %v2092 = vsub.f32 %v620, %v1783
        %v2093 = vsub.f32 %v621, %v1784
        %v2094 = vsub.f32 %v622, %v1785
        %v2095 = vsub.f32 %v623, %v1786
        %v2096 = vsub.f32 %v624, %v1787
        %v2097 = vsub.f32 %v625, %v1788
        %v2098 = vsub.f32 %v626, %v1789
        %v2099 = vand.u32 2147483647, %v2091
        %v2100 = vand.u32 2147483647, %v2092
        %v2101 = vand.u32 2147483647, %v2093
        %v2102 = vand.u32 2147483647, %v2094
        %v2103 = vand.u32 2147483647, %v2095
        %v2104 = vand.u32 2147483647, %v2096
        %v2105 = vand.u32 2147483647, %v2097
        %v2106 = vand.u32 2147483647, %v2098
        %vm2107 = vcmp.lt.f32.partialorder %v2099, 0.11111111
        %vm2108 = vcmp.lt.f32.partialorder %v2100, 0.11111111
        %vm2109 = vcmp.lt.f32.partialorder %v2101, 0.11111111
        %vm2110 = vcmp.lt.f32.partialorder %v2102, 0.11111111
        %vm2111 = vcmp.lt.f32.partialorder %v2103, 0.11111111
        %vm2112 = vcmp.lt.f32.partialorder %v2104, 0.11111111
        %vm2113 = vcmp.lt.f32.partialorder %v2105, 0.11111111
        %vm2114 = vcmp.lt.f32.partialorder %v2106, 0.11111111
        %v2115 = vmul.f32 %v2099, 4.5
        %v2116 = vmul.f32 %v2100, 4.5
        %v2117 = vmul.f32 %v2101, 4.5
        %v2118 = vmul.f32 %v2102, 4.5
        %v2119 = vmul.f32 %v2103, 4.5
        %v2120 = vmul.f32 %v2104, 4.5
        %v2121 = vmul.f32 %v2105, 4.5
        %v2122 = vmul.f32 %v2106, 4.5
        %v2123 = vmul.f32 %v2115, %v2099
        %v2124 = vmul.f32 %v2116, %v2100
        %v2125 = vmul.f32 %v2117, %v2101
        %v2126 = vmul.f32 %v2118, %v2102
        %v2127 = vmul.f32 %v2119, %v2103
        %v2128 = vmul.f32 %v2120, %v2104
        %v2129 = vmul.f32 %v2121, %v2105
        %v2130 = vmul.f32 %v2122, %v2106
        %v2131 = vsub.f32 %v2099, 0.055555556
        %v2132 = vsub.f32 %v2100, 0.055555556
        %v2133 = vsub.f32 %v2101, 0.055555556
        %v2134 = vsub.f32 %v2102, 0.055555556
        %v2135 = vsub.f32 %v2103, 0.055555556
        %v2136 = vsub.f32 %v2104, 0.055555556
        %v2137 = vsub.f32 %v2105, 0.055555556
        %v2138 = vsub.f32 %v2106, 0.055555556
        %v2139 = vsel %vm2107, %v2123, %v2131
        %v2140 = vsel %vm2108, %v2124, %v2132
        %v2141 = vsel %vm2109, %v2125, %v2133
        %v2142 = vsel %vm2110, %v2126, %v2134
        %v2143 = vsel %vm2111, %v2127, %v2135
        %v2144 = vsel %vm2112, %v2128, %v2136
        %v2145 = vsel %vm2113, %v2129, %v2137
        %v2146 = vsel %vm2114, %v2130, %v2138
        %v2147 = vadd.f32 %v2083, %v2139
        %v2148 = vadd.f32 %v2084, %v2140
        %v2149 = vadd.f32 %v2085, %v2141
        %v2150 = vadd.f32 %v2086, %v2142
        %v2151 = vadd.f32 %v2087, %v2143
        %v2152 = vadd.f32 %v2088, %v2144
        %v2153 = vadd.f32 %v2089, %v2145
        %v2154 = vadd.f32 %v2090, %v2146
        %v2155 = vsub.f32 %v619, %v1826
        %v2156 = vsub.f32 %v620, %v1827
        %v2157 = vsub.f32 %v621, %v1828
        %v2158 = vsub.f32 %v622, %v1829
        %v2159 = vsub.f32 %v623, %v1830
        %v2160 = vsub.f32 %v624, %v1831
        %v2161 = vsub.f32 %v625, %v1832
        %v2162 = vsub.f32 %v626, %v1833
        %v2163 = vand.u32 2147483647, %v2155
        %v2164 = vand.u32 2147483647, %v2156
        %v2165 = vand.u32 2147483647, %v2157
        %v2166 = vand.u32 2147483647, %v2158
        %v2167 = vand.u32 2147483647, %v2159
        %v2168 = vand.u32 2147483647, %v2160
        %v2169 = vand.u32 2147483647, %v2161
        %v2170 = vand.u32 2147483647, %v2162
        %vm2171 = vcmp.lt.f32.partialorder %v2163, 0.11111111
        %vm2172 = vcmp.lt.f32.partialorder %v2164, 0.11111111
        %vm2173 = vcmp.lt.f32.partialorder %v2165, 0.11111111
        %vm2174 = vcmp.lt.f32.partialorder %v2166, 0.11111111
        %vm2175 = vcmp.lt.f32.partialorder %v2167, 0.11111111
        %vm2176 = vcmp.lt.f32.partialorder %v2168, 0.11111111
        %vm2177 = vcmp.lt.f32.partialorder %v2169, 0.11111111
        %vm2178 = vcmp.lt.f32.partialorder %v2170, 0.11111111
        %v2179 = vmul.f32 %v2163, 4.5
        %v2180 = vmul.f32 %v2164, 4.5
        %v2181 = vmul.f32 %v2165, 4.5
        %v2182 = vmul.f32 %v2166, 4.5
        %v2183 = vmul.f32 %v2167, 4.5
        %v2184 = vmul.f32 %v2168, 4.5
        %v2185 = vmul.f32 %v2169, 4.5
        %v2186 = vmul.f32 %v2170, 4.5
        %v2187 = vmul.f32 %v2179, %v2163
        %v2188 = vmul.f32 %v2180, %v2164
        %v2189 = vmul.f32 %v2181, %v2165
        %v2190 = vmul.f32 %v2182, %v2166
        %v2191 = vmul.f32 %v2183, %v2167
        %v2192 = vmul.f32 %v2184, %v2168
        %v2193 = vmul.f32 %v2185, %v2169
        %v2194 = vmul.f32 %v2186, %v2170
        %v2195 = vsub.f32 %v2163, 0.055555556
        %v2196 = vsub.f32 %v2164, 0.055555556
        %v2197 = vsub.f32 %v2165, 0.055555556
        %v2198 = vsub.f32 %v2166, 0.055555556
        %v2199 = vsub.f32 %v2167, 0.055555556
        %v2200 = vsub.f32 %v2168, 0.055555556
        %v2201 = vsub.f32 %v2169, 0.055555556
        %v2202 = vsub.f32 %v2170, 0.055555556
        %v2203 = vsel %vm2171, %v2187, %v2195
        %v2204 = vsel %vm2172, %v2188, %v2196
        %v2205 = vsel %vm2173, %v2189, %v2197
        %v2206 = vsel %vm2174, %v2190, %v2198
        %v2207 = vsel %vm2175, %v2191, %v2199
        %v2208 = vsel %vm2176, %v2192, %v2200
        %v2209 = vsel %vm2177, %v2193, %v2201
        %v2210 = vsel %vm2178, %v2194, %v2202
        %v2219 = vrot.slane %v2203, 1
        %v2220 = vrot.slane %v2204, 1
        %v2221 = vrot.slane %v2205, 1
        %v2222 = vrot.slane %v2206, 1
        %v2223 = vrot.slane %v2207, 1
        %v2224 = vrot.slane %v2208, 1
        %v2225 = vrot.slane %v2209, 1
        %v2226 = vrot.slane %v2210, 1
        %v2235 = vadd.f32 %v2147, %v2219
        %v2236 = vadd.f32 %v2148, %v2220
        %v2237 = vadd.f32 %v2149, %v2221
        %v2238 = vadd.f32 %v2150, %v2222
        %v2239 = vadd.f32 %v2151, %v2223
        %v2240 = vadd.f32 %v2152, %v2224
        %v2241 = vadd.f32 %v2153, %v2225
        %v2242 = vadd.f32 %v2154, %v2226
        %v2243 = vand.u32 2147483647, %v617
        %v2244 = vand.u32 2147483647, %v618
        %v2245 = vsub.f32 0.0, %v2243
        %v2246 = vsub.f32 0.0, %v2244
        %v2247 = vmul.f32 %v2245, 1.442695
        %v2248 = vpow.pop %v2247
        %v2249 = vmul.f32 %v2246, 1.442695
        %v2250 = vpow.pop %v2249
        %v2251 = vadd.f32 %v2248, 1.0
        %v2252 = vadd.f32 %v2250, 1.0
        %v2253 = vrcp.pop %v2251
        %v2254 = vrcp.pop %v2252
        %vm2255 = vcmp.ge.f32.partialorder %v617, 0.0
        %vm2256 = vcmp.ge.f32.partialorder %v618, 0.0
        %v2257 = vmul.f32 %v2248, %v2253
        %v2258 = vmul.f32 %v2250, %v2254
        %v2259 = vsel %vm2255, %v2253, %v2257
        %v2260 = vsel %vm2256, %v2254, %v2258
        %v2261 = vmax.f32 %v617, 0.0
        %v2262 = vmax.f32 %v618, 0.0
        %v2271 = vcombine.low %v1604, %v1605
        %v2272 = vcombine.low %v1606, %v1607
        %v2274 = vunpack.c.l.s4 1966171168
        %v2275 = vunpack.c.0.s8 %v2274
        %v2276 = vlaneseq
        %v2277 = vshrl.u32 %v2276, 7
        %v2278 = vsub.s32 %v2275, %v2277
        %v2279 = vrot.slane %v2271, %v2278
        %v2281 = vunpack.c.l.s4 1966171168
        %v2282 = vunpack.c.0.s8 %v2281
        %v2283 = vlaneseq
        %v2284 = vshrl.u32 %v2283, 7
        %v2285 = vsub.s32 %v2282, %v2284
        %v2286 = vrot.slane %v2272, %v2285
        %v2287 = vcombine.low %v2279, %v2286
        %v2289 = vunpack.c.l.s4 1966171168
        %v2290 = vunpack.c.0.s8 %v2289
        %v2291 = vlaneseq
        %v2292 = vshrl.u32 %v2291, 7
        %v2293 = vsub.s32 %v2290, %v2292
        %v2294 = vrot.slane %v2287, %v2293
        %v2295 = vcombine.low %v1608, %v1609
        %v2296 = vcombine.low %v1610, %v1611
        %v2298 = vunpack.c.l.s4 1966171168
        %v2299 = vunpack.c.0.s8 %v2298
        %v2300 = vlaneseq
        %v2301 = vshrl.u32 %v2300, 7
        %v2302 = vsub.s32 %v2299, %v2301
        %v2303 = vrot.slane %v2295, %v2302
        %v2305 = vunpack.c.l.s4 1966171168
        %v2306 = vunpack.c.0.s8 %v2305
        %v2307 = vlaneseq
        %v2308 = vshrl.u32 %v2307, 7
        %v2309 = vsub.s32 %v2306, %v2308
        %v2310 = vrot.slane %v2296, %v2309
        %v2311 = vcombine.low %v2303, %v2310
        %v2313 = vunpack.c.l.s4 1966171168
        %v2314 = vunpack.c.0.s8 %v2313
        %v2315 = vlaneseq
        %v2316 = vshrl.u32 %v2315, 7
        %v2317 = vsub.s32 %v2314, %v2316
        %v2318 = vrot.slane %v2311, %v2317
        %v2321 = vmul.f32 %v617, %v2294
        %v2322 = vmul.f32 %v618, %v2318
        %v2323 = vsub.f32 %v2261, %v2321
        %v2324 = vsub.f32 %v2262, %v2322
        %v2325 = vadd.f32 %v2248, 1.0
        %v2326 = vlog2.pop %v2325
        %v2327 = vmul.f32 %v2326, 0.6931472
        %v2328 = vmul.f32 -0.5, %v2248
        %v2329 = vadd.f32 %v2328, 1.0
        %v2330 = vmul.f32 %v2329, %v2248
        %v2331 = vand.u32 2147483647, %v2248
        %vm2332 = vcmp.lt.f32.partialorder %v2331, 0.0004427343
        %v2333 = vsel %vm2332, %v2330, %v2327
        %v2334 = vadd.f32 %v2250, 1.0
        %v2335 = vlog2.pop %v2334
        %v2336 = vmul.f32 %v2335, 0.6931472
        %v2337 = vmul.f32 -0.5, %v2250
        %v2338 = vadd.f32 %v2337, 1.0
        %v2339 = vmul.f32 %v2338, %v2250
        %v2340 = vand.u32 2147483647, %v2250
        %vm2341 = vcmp.lt.f32.partialorder %v2340, 0.0004427343
        %v2342 = vsel %vm2341, %v2339, %v2336
        %v2343 = vadd.f32 %v2323, %v2333
        %v2344 = vadd.f32 %v2324, %v2342
        %v2345 = vmul.f32 %v2259, %v2294
        %v2346 = vmul.f32 %v2260, %v2318
        %v2347 = vsub.f32 1.0, %v2259
        %v2348 = vsub.f32 1.0, %v2260
        %v2349 = vsub.f32 1.0, %v1604
        %v2350 = vsub.f32 1.0, %v1605
        %v2351 = vsub.f32 1.0, %v1606
        %v2352 = vsub.f32 1.0, %v1607
        %v2353 = vsub.f32 1.0, %v1608
        %v2354 = vsub.f32 1.0, %v1609
        %v2355 = vsub.f32 1.0, %v1610
        %v2356 = vsub.f32 1.0, %v1611
        %v2365 = vcombine.low %v2349, %v2350
        %v2366 = vcombine.low %v2351, %v2352
        %v2368 = vunpack.c.l.s4 1966171168
        %v2369 = vunpack.c.0.s8 %v2368
        %v2370 = vlaneseq
        %v2371 = vshrl.u32 %v2370, 7
        %v2372 = vsub.s32 %v2369, %v2371
        %v2373 = vrot.slane %v2365, %v2372
        %v2375 = vunpack.c.l.s4 1966171168
        %v2376 = vunpack.c.0.s8 %v2375
        %v2377 = vlaneseq
        %v2378 = vshrl.u32 %v2377, 7
        %v2379 = vsub.s32 %v2376, %v2378
        %v2380 = vrot.slane %v2366, %v2379
        %v2381 = vcombine.low %v2373, %v2380
        %v2383 = vunpack.c.l.s4 1966171168
        %v2384 = vunpack.c.0.s8 %v2383
        %v2385 = vlaneseq
        %v2386 = vshrl.u32 %v2385, 7
        %v2387 = vsub.s32 %v2384, %v2386
        %v2388 = vrot.slane %v2381, %v2387
        %v2389 = vcombine.low %v2353, %v2354
        %v2390 = vcombine.low %v2355, %v2356
        %v2392 = vunpack.c.l.s4 1966171168
        %v2393 = vunpack.c.0.s8 %v2392
        %v2394 = vlaneseq
        %v2395 = vshrl.u32 %v2394, 7
        %v2396 = vsub.s32 %v2393, %v2395
        %v2397 = vrot.slane %v2389, %v2396
        %v2399 = vunpack.c.l.s4 1966171168
        %v2400 = vunpack.c.0.s8 %v2399
        %v2401 = vlaneseq
        %v2402 = vshrl.u32 %v2401, 7
        %v2403 = vsub.s32 %v2400, %v2402
        %v2404 = vrot.slane %v2390, %v2403
        %v2405 = vcombine.low %v2397, %v2404
        %v2407 = vunpack.c.l.s4 1966171168
        %v2408 = vunpack.c.0.s8 %v2407
        %v2409 = vlaneseq
        %v2410 = vshrl.u32 %v2409, 7
        %v2411 = vsub.s32 %v2408, %v2410
        %v2412 = vrot.slane %v2405, %v2411
        %v2415 = vmul.f32 %v2347, %v2388
        %v2416 = vmul.f32 %v2348, %v2412
        %v2417 = vadd.f32 %v2345, %v2415
        %v2418 = vadd.f32 %v2346, %v2416
        %v2419 = vsub.f32 1.0, %v2417
        %v2420 = vsub.f32 1.0, %v2418
        %v2421 = vmul.f32 %v2419, %v2419
        %v2422 = vmul.f32 %v2420, %v2420
        %v2423 = vmul.f32 %v1604, 0.25
        %v2424 = vmul.f32 %v1605, 0.25
        %v2425 = vmul.f32 %v1606, 0.25
        %v2426 = vmul.f32 %v1607, 0.25
        %v2427 = vmul.f32 %v1608, 0.25
        %v2428 = vmul.f32 %v1609, 0.25
        %v2429 = vmul.f32 %v1610, 0.25
        %v2430 = vmul.f32 %v1611, 0.25
        %v2431 = vmul.f32 %v2349, 0.75
        %v2432 = vmul.f32 %v2350, 0.75
        %v2433 = vmul.f32 %v2351, 0.75
        %v2434 = vmul.f32 %v2352, 0.75
        %v2435 = vmul.f32 %v2353, 0.75
        %v2436 = vmul.f32 %v2354, 0.75
        %v2437 = vmul.f32 %v2355, 0.75
        %v2438 = vmul.f32 %v2356, 0.75
        %v2439 = vadd.f32 %v2423, %v2431
        %v2440 = vadd.f32 %v2424, %v2432
        %v2441 = vadd.f32 %v2425, %v2433
        %v2442 = vadd.f32 %v2426, %v2434
        %v2443 = vadd.f32 %v2427, %v2435
        %v2444 = vadd.f32 %v2428, %v2436
        %v2445 = vadd.f32 %v2429, %v2437
        %v2446 = vadd.f32 %v2430, %v2438
        %v2447 = vmul.f32 %v1628, %v2439
        %v2448 = vmul.f32 %v1629, %v2440
        %v2449 = vmul.f32 %v1630, %v2441
        %v2450 = vmul.f32 %v1631, %v2442
        %v2451 = vmul.f32 %v1632, %v2443
        %v2452 = vmul.f32 %v1633, %v2444
        %v2453 = vmul.f32 %v1634, %v2445
        %v2454 = vmul.f32 %v1635, %v2446
        %v2457 = vlaneseq
        %v2458 = vshrl.u32 %v2457, 7
        %v2459 = vsub.s32 0, %v2458
        %v2460 = vrot.slane %v2343, %v2459
        %v2461 = vlaneseq
        %v2462 = vshrl.u32 %v2461, 7
        %v2463 = vsub.s32 1, %v2462
        %v2464 = vrot.slane %v2343, %v2463
        %v2465 = vlaneseq
        %v2466 = vshrl.u32 %v2465, 7
        %v2467 = vsub.s32 2, %v2466
        %v2468 = vrot.slane %v2343, %v2467
        %v2469 = vlaneseq
        %v2470 = vshrl.u32 %v2469, 7
        %v2471 = vsub.s32 3, %v2470
        %v2472 = vrot.slane %v2343, %v2471
        %v2473 = vlaneseq
        %v2474 = vshrl.u32 %v2473, 7
        %v2475 = vsub.s32 0, %v2474
        %v2476 = vrot.slane %v2344, %v2475
        %v2477 = vlaneseq
        %v2478 = vshrl.u32 %v2477, 7
        %v2479 = vsub.s32 1, %v2478
        %v2480 = vrot.slane %v2344, %v2479
        %v2481 = vlaneseq
        %v2482 = vshrl.u32 %v2481, 7
        %v2483 = vsub.s32 2, %v2482
        %v2484 = vrot.slane %v2344, %v2483
        %v2485 = vlaneseq
        %v2486 = vshrl.u32 %v2485, 7
        %v2487 = vsub.s32 3, %v2486
        %v2488 = vrot.slane %v2344, %v2487
        %v2497 = vmul.f32 %v2447, %v2460
        %v2498 = vmul.f32 %v2448, %v2464
        %v2499 = vmul.f32 %v2449, %v2468
        %v2500 = vmul.f32 %v2450, %v2472
        %v2501 = vmul.f32 %v2451, %v2476
        %v2502 = vmul.f32 %v2452, %v2480
        %v2503 = vmul.f32 %v2453, %v2484
        %v2504 = vmul.f32 %v2454, %v2488
        %v2507 = vlaneseq
        %v2508 = vshrl.u32 %v2507, 7
        %v2509 = vsub.s32 0, %v2508
        %v2510 = vrot.slane %v2421, %v2509
        %v2511 = vlaneseq
        %v2512 = vshrl.u32 %v2511, 7
        %v2513 = vsub.s32 1, %v2512
        %v2514 = vrot.slane %v2421, %v2513
        %v2515 = vlaneseq
        %v2516 = vshrl.u32 %v2515, 7
        %v2517 = vsub.s32 2, %v2516
        %v2518 = vrot.slane %v2421, %v2517
        %v2519 = vlaneseq
        %v2520 = vshrl.u32 %v2519, 7
        %v2521 = vsub.s32 3, %v2520
        %v2522 = vrot.slane %v2421, %v2521
        %v2523 = vlaneseq
        %v2524 = vshrl.u32 %v2523, 7
        %v2525 = vsub.s32 0, %v2524
        %v2526 = vrot.slane %v2422, %v2525
        %v2527 = vlaneseq
        %v2528 = vshrl.u32 %v2527, 7
        %v2529 = vsub.s32 1, %v2528
        %v2530 = vrot.slane %v2422, %v2529
        %v2531 = vlaneseq
        %v2532 = vshrl.u32 %v2531, 7
        %v2533 = vsub.s32 2, %v2532
        %v2534 = vrot.slane %v2422, %v2533
        %v2535 = vlaneseq
        %v2536 = vshrl.u32 %v2535, 7
        %v2537 = vsub.s32 3, %v2536
        %v2538 = vrot.slane %v2422, %v2537
        %v2547 = vmul.f32 %v2497, %v2510
        %v2548 = vmul.f32 %v2498, %v2514
        %v2549 = vmul.f32 %v2499, %v2518
        %v2550 = vmul.f32 %v2500, %v2522
        %v2551 = vmul.f32 %v2501, %v2526
        %v2552 = vmul.f32 %v2502, %v2530
        %v2553 = vmul.f32 %v2503, %v2534
        %v2554 = vmul.f32 %v2504, %v2538
        %v2555 = vrot.slane %v627, 4
        %v2556 = vmax.f32 %v627, %v2555
        %v2557 = vrot.slane %v2556, 2
        %v2558 = vmax.f32 %v2556, %v2557
        %v2559 = vrot.slane %v2558, 1
        %v2560 = vmax.f32 %v2558, %v2559
        %v2561 = vrot.slane %v628, 4
        %v2562 = vmax.f32 %v628, %v2561
        %v2563 = vrot.slane %v2562, 2
        %v2564 = vmax.f32 %v2562, %v2563
        %v2565 = vrot.slane %v2564, 1
        %v2566 = vmax.f32 %v2564, %v2565
        %v2567 = vrot.slane %v629, 4
        %v2568 = vmax.f32 %v629, %v2567
        %v2569 = vrot.slane %v2568, 2
        %v2570 = vmax.f32 %v2568, %v2569
        %v2571 = vrot.slane %v2570, 1
        %v2572 = vmax.f32 %v2570, %v2571
        %v2573 = vrot.slane %v630, 4
        %v2574 = vmax.f32 %v630, %v2573
        %v2575 = vrot.slane %v2574, 2
        %v2576 = vmax.f32 %v2574, %v2575
        %v2577 = vrot.slane %v2576, 1
        %v2578 = vmax.f32 %v2576, %v2577
        %v2579 = vrot.slane %v631, 4
        %v2580 = vmax.f32 %v631, %v2579
        %v2581 = vrot.slane %v2580, 2
        %v2582 = vmax.f32 %v2580, %v2581
        %v2583 = vrot.slane %v2582, 1
        %v2584 = vmax.f32 %v2582, %v2583
        %v2585 = vrot.slane %v632, 4
        %v2586 = vmax.f32 %v632, %v2585
        %v2587 = vrot.slane %v2586, 2
        %v2588 = vmax.f32 %v2586, %v2587
        %v2589 = vrot.slane %v2588, 1
        %v2590 = vmax.f32 %v2588, %v2589
        %v2591 = vrot.slane %v633, 4
        %v2592 = vmax.f32 %v633, %v2591
        %v2593 = vrot.slane %v2592, 2
        %v2594 = vmax.f32 %v2592, %v2593
        %v2595 = vrot.slane %v2594, 1
        %v2596 = vmax.f32 %v2594, %v2595
        %v2597 = vrot.slane %v634, 4
        %v2598 = vmax.f32 %v634, %v2597
        %v2599 = vrot.slane %v2598, 2
        %v2600 = vmax.f32 %v2598, %v2599
        %v2601 = vrot.slane %v2600, 1
        %v2602 = vmax.f32 %v2600, %v2601
        %v2603 = vsub.f32 %v627, %v2560
        %v2604 = vsub.f32 %v628, %v2566
        %v2605 = vsub.f32 %v629, %v2572
        %v2606 = vsub.f32 %v630, %v2578
        %v2607 = vsub.f32 %v631, %v2584
        %v2608 = vsub.f32 %v632, %v2590
        %v2609 = vsub.f32 %v633, %v2596
        %v2610 = vsub.f32 %v634, %v2602
        %v2611 = vmul.f32 %v2603, 1.442695
        %v2612 = vpow.pop %v2611
        %v2613 = vmul.f32 %v2604, 1.442695
        %v2614 = vpow.pop %v2613
        %v2615 = vmul.f32 %v2605, 1.442695
        %v2616 = vpow.pop %v2615
        %v2617 = vmul.f32 %v2606, 1.442695
        %v2618 = vpow.pop %v2617
        %v2619 = vmul.f32 %v2607, 1.442695
        %v2620 = vpow.pop %v2619
        %v2621 = vmul.f32 %v2608, 1.442695
        %v2622 = vpow.pop %v2621
        %v2623 = vmul.f32 %v2609, 1.442695
        %v2624 = vpow.pop %v2623
        %v2625 = vmul.f32 %v2610, 1.442695
        %v2626 = vpow.pop %v2625
        %v2627 = vrot.slane %v2612, 4
        %v2628 = vadd.f32 %v2612, %v2627
        %v2629 = vrot.slane %v2628, 2
        %v2630 = vadd.f32 %v2628, %v2629
        %v2631 = vrot.slane %v2630, 1
        %v2632 = vadd.f32 %v2630, %v2631
        %v2633 = vrot.slane %v2614, 4
        %v2634 = vadd.f32 %v2614, %v2633
        %v2635 = vrot.slane %v2634, 2
        %v2636 = vadd.f32 %v2634, %v2635
        %v2637 = vrot.slane %v2636, 1
        %v2638 = vadd.f32 %v2636, %v2637
        %v2639 = vrot.slane %v2616, 4
        %v2640 = vadd.f32 %v2616, %v2639
        %v2641 = vrot.slane %v2640, 2
        %v2642 = vadd.f32 %v2640, %v2641
        %v2643 = vrot.slane %v2642, 1
        %v2644 = vadd.f32 %v2642, %v2643
        %v2645 = vrot.slane %v2618, 4
        %v2646 = vadd.f32 %v2618, %v2645
        %v2647 = vrot.slane %v2646, 2
        %v2648 = vadd.f32 %v2646, %v2647
        %v2649 = vrot.slane %v2648, 1
        %v2650 = vadd.f32 %v2648, %v2649
        %v2651 = vrot.slane %v2620, 4
        %v2652 = vadd.f32 %v2620, %v2651
        %v2653 = vrot.slane %v2652, 2
        %v2654 = vadd.f32 %v2652, %v2653
        %v2655 = vrot.slane %v2654, 1
        %v2656 = vadd.f32 %v2654, %v2655
        %v2657 = vrot.slane %v2622, 4
        %v2658 = vadd.f32 %v2622, %v2657
        %v2659 = vrot.slane %v2658, 2
        %v2660 = vadd.f32 %v2658, %v2659
        %v2661 = vrot.slane %v2660, 1
        %v2662 = vadd.f32 %v2660, %v2661
        %v2663 = vrot.slane %v2624, 4
        %v2664 = vadd.f32 %v2624, %v2663
        %v2665 = vrot.slane %v2664, 2
        %v2666 = vadd.f32 %v2664, %v2665
        %v2667 = vrot.slane %v2666, 1
        %v2668 = vadd.f32 %v2666, %v2667
        %v2669 = vrot.slane %v2626, 4
        %v2670 = vadd.f32 %v2626, %v2669
        %v2671 = vrot.slane %v2670, 2
        %v2672 = vadd.f32 %v2670, %v2671
        %v2673 = vrot.slane %v2672, 1
        %v2674 = vadd.f32 %v2672, %v2673
        %v2675 = vlog2.pop %v2632
        %v2676 = vmul.f32 %v2675, 0.6931472
        %v2677 = vlog2.pop %v2638
        %v2678 = vmul.f32 %v2677, 0.6931472
        %v2679 = vlog2.pop %v2644
        %v2680 = vmul.f32 %v2679, 0.6931472
        %v2681 = vlog2.pop %v2650
        %v2682 = vmul.f32 %v2681, 0.6931472
        %v2683 = vlog2.pop %v2656
        %v2684 = vmul.f32 %v2683, 0.6931472
        %v2685 = vlog2.pop %v2662
        %v2686 = vmul.f32 %v2685, 0.6931472
        %v2687 = vlog2.pop %v2668
        %v2688 = vmul.f32 %v2687, 0.6931472
        %v2689 = vlog2.pop %v2674
        %v2690 = vmul.f32 %v2689, 0.6931472
        %v2691 = vadd.f32 %v2560, %v2676
        %v2692 = vadd.f32 %v2566, %v2678
        %v2693 = vadd.f32 %v2572, %v2680
        %v2694 = vadd.f32 %v2578, %v2682
        %v2695 = vadd.f32 %v2584, %v2684
        %v2696 = vadd.f32 %v2590, %v2686
        %v2697 = vadd.f32 %v2596, %v2688
        %v2698 = vadd.f32 %v2602, %v2690
        %v2699 = vcvt.s32.f32 %v940
        %v2700 = vlaneseq
        %v2701 = vshrl.u32 %v2700, 7
        %v2702 = vsub.s32 6, %v2701
        %v2703 = vrot.slane %v1124, %v2702
        %v2704 = vlaneseq
        %v2705 = vshrl.u32 %v2704, 7
        %v2706 = vsub.s32 6, %v2705
        %v2707 = vrot.slane %v1126, %v2706
        %v2708 = vlaneseq
        %v2709 = vshrl.u32 %v2708, 7
        %v2710 = vsub.s32 6, %v2709
        %v2711 = vrot.slane %v1195, %v2710
        %v2712 = vlaneseq
        %v2713 = vshrl.u32 %v2712, 7
        %v2714 = vsub.s32 6, %v2713
        %v2715 = vrot.slane %v1197, %v2714
        %v2716 = vlaneseq
        %v2717 = vshrl.u32 %v2716, 7
        %v2718 = vsub.s32 6, %v2717
        %v2719 = vrot.slane %v1269, %v2718
        %v2720 = vlaneseq
        %v2721 = vshrl.u32 %v2720, 7
        %v2722 = vsub.s32 6, %v2721
        %v2723 = vrot.slane %v1271, %v2722
        %v2724 = vlaneseq
        %v2725 = vshrl.u32 %v2724, 7
        %v2726 = vsub.s32 6, %v2725
        %v2727 = vrot.slane %v1340, %v2726
        %v2728 = vlaneseq
        %v2729 = vshrl.u32 %v2728, 7
        %v2730 = vsub.s32 6, %v2729
        %v2731 = vrot.slane %v1342, %v2730
        %v2732 = vsub.f32 %v2699, %v2703
        %v2733 = vsub.f32 %v2699, %v2707
        %v2734 = vsub.f32 %v2699, %v2711
        %v2735 = vsub.f32 %v2699, %v2715
        %v2736 = vsub.f32 %v2699, %v2719
        %v2737 = vsub.f32 %v2699, %v2723
        %v2738 = vsub.f32 %v2699, %v2727
        %v2739 = vsub.f32 %v2699, %v2731
        %v2740 = vand.u32 2147483647, %v2732
        %v2741 = vand.u32 2147483647, %v2733
        %v2742 = vand.u32 2147483647, %v2734
        %v2743 = vand.u32 2147483647, %v2735
        %v2744 = vand.u32 2147483647, %v2736
        %v2745 = vand.u32 2147483647, %v2737
        %v2746 = vand.u32 2147483647, %v2738
        %v2747 = vand.u32 2147483647, %v2739
        %vm2748 = vcmp.lt.f32.partialorder %v2740, 0.5
        %vm2749 = vcmp.lt.f32.partialorder %v2741, 0.5
        %vm2750 = vcmp.lt.f32.partialorder %v2742, 0.5
        %vm2751 = vcmp.lt.f32.partialorder %v2743, 0.5
        %vm2752 = vcmp.lt.f32.partialorder %v2744, 0.5
        %vm2753 = vcmp.lt.f32.partialorder %v2745, 0.5
        %vm2754 = vcmp.lt.f32.partialorder %v2746, 0.5
        %vm2755 = vcmp.lt.f32.partialorder %v2747, 0.5
        %v2756 = vsel %vm2748, 1, 0
        %v2757 = vsel %vm2749, 1, 0
        %v2758 = vsel %vm2750, 1, 0
        %v2759 = vsel %vm2751, 1, 0
        %v2760 = vsel %vm2752, 1, 0
        %v2761 = vsel %vm2753, 1, 0
        %v2762 = vsel %vm2754, 1, 0
        %v2763 = vsel %vm2755, 1, 0
        %v2764 = vcvt.s32.f32 %v2756
        %v2765 = vcvt.s32.f32 %v2757
        %v2766 = vcvt.s32.f32 %v2758
        %v2767 = vcvt.s32.f32 %v2759
        %v2768 = vcvt.s32.f32 %v2760
        %v2769 = vcvt.s32.f32 %v2761
        %v2770 = vcvt.s32.f32 %v2762
        %v2771 = vcvt.s32.f32 %v2763
        %v2772 = vmul.f32 %v627, %v2764
        %v2773 = vmul.f32 %v628, %v2765
        %v2774 = vmul.f32 %v629, %v2766
        %v2775 = vmul.f32 %v630, %v2767
        %v2776 = vmul.f32 %v631, %v2768
        %v2777 = vmul.f32 %v632, %v2769
        %v2778 = vmul.f32 %v633, %v2770
        %v2779 = vmul.f32 %v634, %v2771
        %v2780 = vrot.slane %v2772, 4
        %v2781 = vadd.f32 %v2772, %v2780
        %v2782 = vrot.slane %v2781, 2
        %v2783 = vadd.f32 %v2781, %v2782
        %v2784 = vrot.slane %v2783, 1
        %v2785 = vadd.f32 %v2783, %v2784
        %v2786 = vrot.slane %v2773, 4
        %v2787 = vadd.f32 %v2773, %v2786
        %v2788 = vrot.slane %v2787, 2
        %v2789 = vadd.f32 %v2787, %v2788
        %v2790 = vrot.slane %v2789, 1
        %v2791 = vadd.f32 %v2789, %v2790
        %v2792 = vrot.slane %v2774, 4
        %v2793 = vadd.f32 %v2774, %v2792
        %v2794 = vrot.slane %v2793, 2
        %v2795 = vadd.f32 %v2793, %v2794
        %v2796 = vrot.slane %v2795, 1
        %v2797 = vadd.f32 %v2795, %v2796
        %v2798 = vrot.slane %v2775, 4
        %v2799 = vadd.f32 %v2775, %v2798
        %v2800 = vrot.slane %v2799, 2
        %v2801 = vadd.f32 %v2799, %v2800
        %v2802 = vrot.slane %v2801, 1
        %v2803 = vadd.f32 %v2801, %v2802
        %v2804 = vrot.slane %v2776, 4
        %v2805 = vadd.f32 %v2776, %v2804
        %v2806 = vrot.slane %v2805, 2
        %v2807 = vadd.f32 %v2805, %v2806
        %v2808 = vrot.slane %v2807, 1
        %v2809 = vadd.f32 %v2807, %v2808
        %v2810 = vrot.slane %v2777, 4
        %v2811 = vadd.f32 %v2777, %v2810
        %v2812 = vrot.slane %v2811, 2
        %v2813 = vadd.f32 %v2811, %v2812
        %v2814 = vrot.slane %v2813, 1
        %v2815 = vadd.f32 %v2813, %v2814
        %v2816 = vrot.slane %v2778, 4
        %v2817 = vadd.f32 %v2778, %v2816
        %v2818 = vrot.slane %v2817, 2
        %v2819 = vadd.f32 %v2817, %v2818
        %v2820 = vrot.slane %v2819, 1
        %v2821 = vadd.f32 %v2819, %v2820
        %v2822 = vrot.slane %v2779, 4
        %v2823 = vadd.f32 %v2779, %v2822
        %v2824 = vrot.slane %v2823, 2
        %v2825 = vadd.f32 %v2823, %v2824
        %v2826 = vrot.slane %v2825, 1
        %v2827 = vadd.f32 %v2825, %v2826
        %v2828 = vsub.f32 %v2691, %v2785
        %v2829 = vsub.f32 %v2692, %v2791
        %v2830 = vsub.f32 %v2693, %v2797
        %v2831 = vsub.f32 %v2694, %v2803
        %v2832 = vsub.f32 %v2695, %v2809
        %v2833 = vsub.f32 %v2696, %v2815
        %v2834 = vsub.f32 %v2697, %v2821
        %v2835 = vsub.f32 %v2698, %v2827
        %v2836 = vand.u32 2147483647, %v1124
        %v2837 = vand.u32 2147483647, %v1126
        %v2838 = vand.u32 2147483647, %v1195
        %v2839 = vand.u32 2147483647, %v1197
        %v2840 = vand.u32 2147483647, %v1269
        %v2841 = vand.u32 2147483647, %v1271
        %v2842 = vand.u32 2147483647, %v1340
        %v2843 = vand.u32 2147483647, %v1342
        %vm2844 = vcmp.lt.f32.partialorder %v2836, 0.5
        %vm2845 = vcmp.lt.f32.partialorder %v2837, 0.5
        %vm2846 = vcmp.lt.f32.partialorder %v2838, 0.5
        %vm2847 = vcmp.lt.f32.partialorder %v2839, 0.5
        %vm2848 = vcmp.lt.f32.partialorder %v2840, 0.5
        %vm2849 = vcmp.lt.f32.partialorder %v2841, 0.5
        %vm2850 = vcmp.lt.f32.partialorder %v2842, 0.5
        %vm2851 = vcmp.lt.f32.partialorder %v2843, 0.5
        %v2852 = vsub.f32 %v1124, 1.0
        %v2853 = vsub.f32 %v1126, 1.0
        %v2854 = vsub.f32 %v1195, 1.0
        %v2855 = vsub.f32 %v1197, 1.0
        %v2856 = vsub.f32 %v1269, 1.0
        %v2857 = vsub.f32 %v1271, 1.0
        %v2858 = vsub.f32 %v1340, 1.0
        %v2859 = vsub.f32 %v1342, 1.0
        %v2860 = vand.u32 2147483647, %v2852
        %v2861 = vand.u32 2147483647, %v2853
        %v2862 = vand.u32 2147483647, %v2854
        %v2863 = vand.u32 2147483647, %v2855
        %v2864 = vand.u32 2147483647, %v2856
        %v2865 = vand.u32 2147483647, %v2857
        %v2866 = vand.u32 2147483647, %v2858
        %v2867 = vand.u32 2147483647, %v2859
        %vm2868 = vcmp.lt.f32.partialorder %v2860, 0.5
        %vm2869 = vcmp.lt.f32.partialorder %v2861, 0.5
        %vm2870 = vcmp.lt.f32.partialorder %v2862, 0.5
        %vm2871 = vcmp.lt.f32.partialorder %v2863, 0.5
        %vm2872 = vcmp.lt.f32.partialorder %v2864, 0.5
        %vm2873 = vcmp.lt.f32.partialorder %v2865, 0.5
        %vm2874 = vcmp.lt.f32.partialorder %v2866, 0.5
        %vm2875 = vcmp.lt.f32.partialorder %v2867, 0.5
        %vm2876 = vmor %vm2844, %vm2868
        %vm2877 = vmor %vm2845, %vm2869
        %vm2878 = vmor %vm2846, %vm2870
        %vm2879 = vmor %vm2847, %vm2871
        %vm2880 = vmor %vm2848, %vm2872
        %vm2881 = vmor %vm2849, %vm2873
        %vm2882 = vmor %vm2850, %vm2874
        %vm2883 = vmor %vm2851, %vm2875
        %vm2884 = vcmp.lt.f32.partialorder %v635, 0.5
        %vm2885 = vcmp.lt.f32.partialorder %v636, 0.5
        %v2886 = vsel %vm2884, 1, 0
        %v2887 = vsel %vm2885, 1, 0
        %v2888 = vcvt.s32.f32 %v2886
        %v2889 = vcvt.s32.f32 %v2887
        %v2892 = vlaneseq
        %v2893 = vshrl.u32 %v2892, 7
        %v2894 = vsub.s32 0, %v2893
        %v2895 = vrot.slane %v2888, %v2894
        %v2896 = vlaneseq
        %v2897 = vshrl.u32 %v2896, 7
        %v2898 = vsub.s32 2, %v2897
        %v2899 = vrot.slane %v2888, %v2898
        %v2900 = vlaneseq
        %v2901 = vshrl.u32 %v2900, 7
        %v2902 = vsub.s32 4, %v2901
        %v2903 = vrot.slane %v2888, %v2902
        %v2904 = vlaneseq
        %v2905 = vshrl.u32 %v2904, 7
        %v2906 = vsub.s32 6, %v2905
        %v2907 = vrot.slane %v2888, %v2906
        %v2908 = vlaneseq
        %v2909 = vshrl.u32 %v2908, 7
        %v2910 = vsub.s32 0, %v2909
        %v2911 = vrot.slane %v2889, %v2910
        %v2912 = vlaneseq
        %v2913 = vshrl.u32 %v2912, 7
        %v2914 = vsub.s32 2, %v2913
        %v2915 = vrot.slane %v2889, %v2914
        %v2916 = vlaneseq
        %v2917 = vshrl.u32 %v2916, 7
        %v2918 = vsub.s32 4, %v2917
        %v2919 = vrot.slane %v2889, %v2918
        %v2920 = vlaneseq
        %v2921 = vshrl.u32 %v2920, 7
        %v2922 = vsub.s32 6, %v2921
        %v2923 = vrot.slane %v2889, %v2922
        %v2932 = vsel %vm2876, %v2895, 1.0
        %v2933 = vsel %vm2877, %v2899, 1.0
        %v2934 = vsel %vm2878, %v2903, 1.0
        %v2935 = vsel %vm2879, %v2907, 1.0
        %v2936 = vsel %vm2880, %v2911, 1.0
        %v2937 = vsel %vm2881, %v2915, 1.0
        %v2938 = vsel %vm2882, %v2919, 1.0
        %v2939 = vsel %vm2883, %v2923, 1.0
        %v2948 = vrot.slane %v2235, 4
        %v2949 = vrot.slane %v2236, 4
        %v2950 = vrot.slane %v2237, 4
        %v2951 = vrot.slane %v2238, 4
        %v2952 = vrot.slane %v2239, 4
        %v2953 = vrot.slane %v2240, 4
        %v2954 = vrot.slane %v2241, 4
        %v2955 = vrot.slane %v2242, 4
        %v2964 = vmul.f32 %v1604, %v2948
        %v2965 = vmul.f32 %v1605, %v2949
        %v2966 = vmul.f32 %v1606, %v2950
        %v2967 = vmul.f32 %v1607, %v2951
        %v2968 = vmul.f32 %v1608, %v2952
        %v2969 = vmul.f32 %v1609, %v2953
        %v2970 = vmul.f32 %v1610, %v2954
        %v2971 = vmul.f32 %v1611, %v2955
        %v2972 = vmul.f32 %v1604, %v2828
        %v2973 = vmul.f32 %v1605, %v2829
        %v2974 = vmul.f32 %v1606, %v2830
        %v2975 = vmul.f32 %v1607, %v2831
        %v2976 = vmul.f32 %v1608, %v2832
        %v2977 = vmul.f32 %v1609, %v2833
        %v2978 = vmul.f32 %v1610, %v2834
        %v2979 = vmul.f32 %v1611, %v2835
        %v2988 = vrot.slane %v2932, 6
        %v2989 = vrot.slane %v2933, 6
        %v2990 = vrot.slane %v2934, 6
        %v2991 = vrot.slane %v2935, 6
        %v2992 = vrot.slane %v2936, 6
        %v2993 = vrot.slane %v2937, 6
        %v2994 = vrot.slane %v2938, 6
        %v2995 = vrot.slane %v2939, 6
        %v3004 = vmul.f32 %v2972, %v2988
        %v3005 = vmul.f32 %v2973, %v2989
        %v3006 = vmul.f32 %v2974, %v2990
        %v3007 = vmul.f32 %v2975, %v2991
        %v3008 = vmul.f32 %v2976, %v2992
        %v3009 = vmul.f32 %v2977, %v2993
        %v3010 = vmul.f32 %v2978, %v2994
        %v3011 = vmul.f32 %v2979, %v2995
        %v3012 = vmul.f32 %v1604, %v2988
        %v3013 = vmul.f32 %v1605, %v2989
        %v3014 = vmul.f32 %v1606, %v2990
        %v3015 = vmul.f32 %v1607, %v2991
        %v3016 = vmul.f32 %v1608, %v2992
        %v3017 = vmul.f32 %v1609, %v2993
        %v3018 = vmul.f32 %v1610, %v2994
        %v3019 = vmul.f32 %v1611, %v2995
        %v3028 = vrot.slane %v2964, 7
        %v3029 = vrot.slane %v2965, 7
        %v3030 = vrot.slane %v2966, 7
        %v3031 = vrot.slane %v2967, 7
        %v3032 = vrot.slane %v2968, 7
        %v3033 = vrot.slane %v2969, 7
        %v3034 = vrot.slane %v2970, 7
        %v3035 = vrot.slane %v2971, 7
        %v3052 = vrot.slane %v3004, 6
        %v3053 = vrot.slane %v3005, 6
        %v3054 = vrot.slane %v3006, 6
        %v3055 = vrot.slane %v3007, 6
        %v3056 = vrot.slane %v3008, 6
        %v3057 = vrot.slane %v3009, 6
        %v3058 = vrot.slane %v3010, 6
        %v3059 = vrot.slane %v3011, 6
        %v3068 = vrot.slane %v1604, 5
        %v3069 = vrot.slane %v1605, 5
        %v3070 = vrot.slane %v1606, 5
        %v3071 = vrot.slane %v1607, 5
        %v3072 = vrot.slane %v1608, 5
        %v3073 = vrot.slane %v1609, 5
        %v3074 = vrot.slane %v1610, 5
        %v3075 = vrot.slane %v1611, 5
        %v3092 = vrot.slane %v3012, 4
        %v3093 = vrot.slane %v3013, 4
        %v3094 = vrot.slane %v3014, 4
        %v3095 = vrot.slane %v3015, 4
        %v3096 = vrot.slane %v3016, 4
        %v3097 = vrot.slane %v3017, 4
        %v3098 = vrot.slane %v3018, 4
        %v3099 = vrot.slane %v3019, 4
        %v3108 = vsel %vm1652, %v2547, %v3028
        %v3109 = vsel %vm1652, %v2548, %v3029
        %v3110 = vsel %vm1652, %v2549, %v3030
        %v3111 = vsel %vm1652, %v2550, %v3031
        %v3112 = vsel %vm1652, %v2551, %v3032
        %v3113 = vsel %vm1652, %v2552, %v3033
        %v3114 = vsel %vm1652, %v2553, %v3034
        %v3115 = vsel %vm1652, %v2554, %v3035
        %v3116 = vsel %vm1890, %v3108, %v3052
        %v3117 = vsel %vm1890, %v3109, %v3053
        %v3118 = vsel %vm1890, %v3110, %v3054
        %v3119 = vsel %vm1890, %v3111, %v3055
        %v3120 = vsel %vm1890, %v3112, %v3056
        %v3121 = vsel %vm1890, %v3113, %v3057
        %v3122 = vsel %vm1890, %v3114, %v3058
        %v3123 = vsel %vm1890, %v3115, %v3059
        %v3124 = vsel %vm1677, %v3116, %v3068
        %v3125 = vsel %vm1677, %v3117, %v3069
        %v3126 = vsel %vm1677, %v3118, %v3070
        %v3127 = vsel %vm1677, %v3119, %v3071
        %v3128 = vsel %vm1677, %v3120, %v3072
        %v3129 = vsel %vm1677, %v3121, %v3073
        %v3130 = vsel %vm1677, %v3122, %v3074
        %v3131 = vsel %vm1677, %v3123, %v3075
        %vm3132 = vcmask 1043456
        %v3133 = vsel %vm3132, %v3124, %v3092
        %v3134 = vsel %vm3132, %v3125, %v3093
        %v3135 = vsel %vm3132, %v3126, %v3094
        %v3136 = vsel %vm3132, %v3127, %v3095
        %v3137 = vsel %vm3132, %v3128, %v3096
        %v3138 = vsel %vm3132, %v3129, %v3097
        %v3139 = vsel %vm3132, %v3130, %v3098
        %v3140 = vsel %vm3132, %v3131, %v3099
        %vm3141 = vcmask 1044480
        %v3142 = vsel %vm3141, %v3133, 0.0
        %v3143 = vsel %vm3141, %v3134, 0.0
        %v3144 = vadd.f32 %v3142, %v3143
        %v3145 = vsel %vm3141, %v3135, 0.0
        %v3146 = vadd.f32 %v3144, %v3145
        %v3147 = vsel %vm3141, %v3136, 0.0
        %v3148 = vadd.f32 %v3146, %v3147
        %3149 = vadd.xlane.f32.xlu0 %v3148
        %v3150 = vpop.xlane.xlu0 %3149
        %v3151 = vsel %vm3141, %v3137, 0.0
        %v3152 = vsel %vm3141, %v3138, 0.0
        %v3153 = vadd.f32 %v3151, %v3152
        %v3154 = vsel %vm3141, %v3139, 0.0
        %v3155 = vadd.f32 %v3153, %v3154
        %v3156 = vsel %vm3141, %v3140, 0.0
        %v3157 = vadd.f32 %v3155, %v3156
        %3158 = vadd.xlane.f32.xlu0 %v3157
        %v3159 = vpop.xlane.xlu0 %3158
        %v3160 = vsel %vm3141, %v3150, 0.0
        %v3161 = vsel %vm3141, %v3159, 0.0
        %v3162 = vadd.f32 %v3160, %v3161
        %v3163 = vsel %vm3141, %v3162, 0.0
        %3165 = vset.pattern.permute.xlu0 0
        %3166 = vperm.xlu0 %3165, %v3163
        %v3167 = vpop.permute.xlu0 %3166
        %3169 = vst [vmem:[%s583] sm:$0xff] %v3167
        %s3170 = sand.u32 %s236, 1
        %s3171 = scalar_lea.sflag [#allocation5], %s3170
        %s3172 = sand.u32 %s236, 1
        %s3173 = smul.addr %s3172, 8
        %s3174 = scalar_lea.vmem [#allocation9], %s3173
        // Predicated region
        $region160: #{tpu_custom_call.1} parent=138 // pred_check
          %p3175 = pneg %p246
        $region161: #{tpu_custom_call.1} parent=138 // pred_check_branch
          %3177 = sbr.rel (%p3175) target = $region163
        $region162: #{tpu_custom_call.1} parent=138 // pred_region
          %s3179 = ssub.s32 128, 128
          %3180 = vsyncadd %s3171, %s3179
          %s3181 = smul.addr %s28, 2
          %s3182 = sadd.s32 %s29, %s3181
          %s3183 = smul.addr %s3182, 128
          %s3184 = scalar_lea.hbm %s7, %s3183
          %s3186 = sshll.u32 %s3174, 4
          %s3187 = int_to_ptr.vmem [resolvable:$true] %s3186
          %3189 = dma.vmem_to_hbm [thread:$0]  %s3187, 128, %s3184, %s3171
        $region163: #{tpu_custom_call.1} parent=138 // pred_fallthru
          _
      $region139: #{tpu_custom_call.1} parent=5 // pred_fallthru
        _
      %p3190 = scmp.le.s32.totalorder 2, %s19
      // Predicated region
      $region164: #{tpu_custom_call.1} parent=5 // pred_check
        %p3191 = pneg %p3190
      $region165: #{tpu_custom_call.1} parent=5 // pred_check_branch
        %3193 = sbr.rel (%p3191) target = $region167
      $region166: #{tpu_custom_call.1} parent=5 // pred_region
        %s3194 = ssub.s32 %s19, 2
        // Predicated region
        $region168: #{tpu_custom_call.1} parent=166 // pred_check
          %p3195 = pneg %p252
        $region169: #{tpu_custom_call.1} parent=166 // pred_check_branch
          %3197 = sbr.rel (%p3195) target = $region171
        $region170: #{tpu_custom_call.1} parent=166 // pred_region
          %s3198 = sand.u32 %s237, 1
          %s3199 = scalar_lea.sflag [#allocation5], %s3198
          %s3200 = sand.u32 %s237, 1
          %s3201 = smul.addr %s3200, 8
          %s3202 = scalar_lea.vmem [#allocation9], %s3201
          %3203 = dma.done %s3199, 128
        $region171: #{tpu_custom_call.1} parent=166 // pred_fallthru
          _
      $region167: #{tpu_custom_call.1} parent=5 // pred_fallthru
        _
    $region6: #{tpu_custom_call.1} parent=1 // loop_footer
      %s23 = sadd.s32 1, %s19
    $region7: #{tpu_custom_call.1} parent=1 // loop_footer_branch
      %18 = sbr.rel target = $region3
    $region8: #{tpu_custom_call.1} parent=1 // loop_exit
      _
    %3204 = vsyncpa [#allocation4], 1
    %s3205 = scalar_lea.sflag [#allocation4], 1
    %3206 = vsyncpa %s3205, 1
    %3207 = vsyncpa [#allocation5], 1
    %s3208 = scalar_lea.sflag [#allocation5], 1
    %3209 = vsyncpa %s3208, 1

</llo_original>
